<compile_context>
chip_gen: v6e
topology: v6e:2x2x1
jax: 0.10.0
libtpu: 0.0.40
codegen_flags: <defaults>
</compile_context>

<pallas_src>
import jax
import jax.numpy as jnp
from jax import lax
from jax.experimental import pallas as pl
from jax.experimental.pallas import tpu as pltpu

BN_EPS = 1e-5


# ----------------------------------------------------------------------------
# Tiling / budget helpers
# ----------------------------------------------------------------------------
def _vmem_limit_bytes():
    """Generation-aware scoped-VMEM budget (~96 MiB on v5e/v6e, ~48 MiB on v7x)."""
    try:
        cap = getattr(pltpu.get_tpu_info(), "vmem_capacity_bytes", None)
    except Exception:
        cap = None
    if not cap:
        return 48 * 1024 * 1024
    return max(32 * 1024 * 1024, min((int(cap) * 3) // 4, 100 * 1024 * 1024))


def _pick_row_tile(ho, target=8):
    """Largest divisor of Ho that is <= target (output-row band height)."""
    t = min(target, ho)
    while t > 1 and ho % t:
        t -= 1
    return max(t, 1)


# ----------------------------------------------------------------------------
# Fused bottleneck kernel
# ----------------------------------------------------------------------------
def _bottleneck_kernel(xee_ref, xeo_ref, xoe_ref, xoo_ref, xoeh_ref, xooh_ref,
                       w1_ref, b1_ref, w2_ref, b2_ref, wcat_ref, bcat_ref,
                       o_ref):
    i = pl.program_id(1)                      # output-row band index
    _, th, wo, cin = xee_ref.shape
    width = w1_ref.shape[1]
    cout = wcat_ref.shape[1]
    m = th * wo

    w1 = w1_ref[...]
    b1 = b1_ref[...]

    def conv1(x2d):
        """conv1 (1x1) + folded BN1 + ReLU, f32 MXU accumulation, bf16 result."""
        y = jnp.dot(x2d, w1, preferred_element_type=jnp.float32)
        return jnp.maximum(y + b1, 0.0).astype(jnp.bfloat16)

    # --- conv1 on the four stride-2 spatial phases of this row band (y1 stays in VMEM).
    xee = xee_ref[0].reshape(m, cin)          # x[2p, 2q]  (also the downsample taps)
    y_ee = conv1(xee).reshape(th, wo, width)
    y_eo = conv1(xeo_ref[0].reshape(m, cin)).reshape(th, wo, width)

    # Odd-row phases carry a 1-row top halo; its y1 is conv2's zero padding on band 0.
    keep = jnp.where(i > 0, 1.0, 0.0).astype(jnp.bfloat16)
    y_oe_h = conv1(xoeh_ref[0].reshape(wo, cin)) * keep
    y_oo_h = conv1(xooh_ref[0].reshape(wo, cin)) * keep
    y_oe = jnp.concatenate(
        [y_oe_h.reshape(1, wo, width),
         conv1(xoe_ref[0].reshape(m, cin)).reshape(th, wo, width)], axis=0)
    y_oo = jnp.concatenate(
        [y_oo_h.reshape(1, wo, width),
         conv1(xoo_ref[0].reshape(m, cin)).reshape(th, wo, width)], axis=0)

    # One-column right shift with zero fill: the kx == 0 taps read odd-column q-1.
    def shift_cols(y):
        zero_col = jnp.zeros((y.shape[0], 1, width), y.dtype)
        return jnp.concatenate([zero_col, y[:, :wo - 1, :]], axis=1)

    y_eo_s = shift_cols(y_eo)
    y_oo_s = shift_cols(y_oo)

    # --- conv2 (3x3, stride 2, pad 1) + folded BN2 + ReLU.
    # Tap t = ky*3 + kx.  Stride-2 row selection is a +-1 leading-dim offset into the
    # row-phase slabs, stride-2 column selection is the even/odd column phase, so every
    # tap lhs below is a contiguous, stride-free slice (no per-tap gathers/relayouts).
    taps = (
        (y_oo_s[0:th],     0), (y_oe[0:th],     1), (y_oo[0:th],     2),   # ky = 0
        (y_eo_s,           3), (y_ee,           4), (y_eo,           5),   # ky = 1
        (y_oo_s[1:th + 1], 6), (y_oe[1:th + 1], 7), (y_oo[1:th + 1], 8),   # ky = 2
    )
    acc = jnp.zeros((m, width), jnp.float32)
    for lhs, t in taps:
        acc = acc + jnp.dot(lhs.reshape(m, width), w2_ref[t],
                            preferred_element_type=jnp.float32)
    y2 = jnp.maximum(acc + b2_ref[...], 0.0).astype(jnp.bfloat16)

    # --- conv3 + BN3, downsample (1x1, stride 2) + BNd, residual add, final ReLU:
    # a single K = width + cin matmul against the pre-concatenated [w3*s3; wd*sd] weights.
    lhs = jnp.concatenate([y2, xee], axis=1)                  # (m, width + cin)
    out = jnp.dot(lhs, wcat_ref[...], preferred_element_type=jnp.float32)
    out = jnp.maximum(out + bcat_ref[...], 0.0)
    o_ref[0] = out.reshape(th, wo, cout).astype(o_ref.dtype)


def bottleneck_fused(x_ee, x_eo, x_oe, x_oo, fp):
    """x_**: (B, Ho, Wo, Cin) bf16 stride-2 phases of the input; returns (B, Ho, Wo, Cout) bf16."""
    b, ho, wo, cin = x_ee.shape
    cout = fp["wcat"].shape[1]
    th = _pick_row_tile(ho)
    grid = (b, ho // th)

    main_map = lambda bi, ri: (bi, ri, 0, 0)
    halo_map = lambda bi, ri: (bi, jnp.maximum(ri * th - 1, 0), 0, 0)
    x_main = pl.BlockSpec((1, th, wo, cin), main_map)
    x_halo = pl.BlockSpec((1, 1, wo, cin), halo_map)

    def full(arr):
        n = arr.ndim
        return pl.BlockSpec(arr.shape, lambda bi, ri: (0,) * n)

    b1 = fp["b1"].reshape(1, -1)
    b2 = fp["b2"].reshape(1, -1)
    bcat = fp["bcat"].reshape(1, -1)

    return pl.pallas_call(
        _bottleneck_kernel,
        out_shape=jax.ShapeDtypeStruct((b, ho, wo, cout), jnp.bfloat16),
        grid_spec=pltpu.PrefetchScalarGridSpec(
            num_scalar_prefetch=0,
            grid=grid,
            in_specs=[
                x_main, x_main, x_main, x_main,          # ee, eo, oe, oo row bands
                x_halo, x_halo,                          # oe, oo 1-row top halos
                full(fp["w1"]), full(b1),
                full(fp["w2"]), full(b2),
                full(fp["wcat"]), full(bcat),
            ],
            out_specs=pl.BlockSpec((1, th, wo, cout), main_map),
        ),
        compiler_params=pltpu.CompilerParams(
            dimension_semantics=("parallel", "parallel"),
            vmem_limit_bytes=_vmem_limit_bytes()),
    )(x_ee, x_eo, x_oe, x_oo, x_oe, x_oo,
      fp["w1"], b1, fp["w2"], b2, fp["wcat"], bcat)


# ----------------------------------------------------------------------------
# Forward pass (NCHW boundary, like the PyTorch module)
# ----------------------------------------------------------------------------
@jax.jit
def encoder_bottleneck_nchw(x_nchw, fp):
    # NCHW->NHWC, f32->bf16 cast and the stride-2 phase split fuse into one XLA copy pass.
    x = jnp.transpose(x_nchw, (0, 2, 3, 1)).astype(jnp.bfloat16)
    x_ee = x[:, 0::2, 0::2, :]
    x_eo = x[:, 0::2, 1::2, :]
    x_oe = x[:, 1::2, 0::2, :]
    x_oo = x[:, 1::2, 1::2, :]
    y = bottleneck_fused(x_ee, x_eo, x_oe, x_oo, fp)          # (B, Ho, Wo, Cout) bf16
    return jnp.transpose(y, (0, 3, 1, 2)).astype(jnp.float32)


# ----------------------------------------------------------------------------
# Deterministic synthetic parameters (PyTorch-like: conv weights + BN stats)
# ----------------------------------------------------------------------------
def init_params(key, cin, cout, base_width=64):
    width = int(cout * (base_width / 64))
    ks = jax.random.split(key, 8)

    def conv(k, kin, kout):
        return ((2.0 / kin) ** 0.5) * jax.random.normal(k, (kin, kout), jnp.float32)

    def bn(k, c):
        k1, k2 = jax.random.split(k)
        return dict(gamma=1.0 + 0.1 * jax.random.normal(k1, (c,), jnp.float32),
                    beta=0.1 * jax.random.normal(k2, (c,), jnp.float32),
                    mean=jnp.zeros((c,), jnp.float32),
                    var=jnp.ones((c,), jnp.float32))

    w2 = ((2.0 / (9 * width)) ** 0.5) * jax.random.normal(
        ks[1], (9, width, width), jnp.float32)                # tap-major: t = ky*3 + kx
    return dict(
        w1=conv(ks[0], cin, width), bn1=bn(ks[4], width),     # conv1 1x1
        w2=w2, bn2=bn(ks[5], width),                          # conv2 3x3 stride 2
        w3=conv(ks[2], width, cout), bn3=bn(ks[6], cout),     # conv3 1x1
        wd=conv(ks[3], cin, cout), bnd=bn(ks[7], cout),       # downsample 1x1 stride 2
    )


def fold_params(p):
    """Eval-mode BN fold; scales folded into the conv weights (f32 fold, one bf16 cast)."""
    def sb(bn):
        s = bn["gamma"] * lax.rsqrt(bn["var"] + BN_EPS)
        return s, bn["beta"] - bn["mean"] * s

    s1, b1 = sb(p["bn1"])
    s2, b2 = sb(p["bn2"])
    s3, b3 = sb(p["bn3"])
    sd, bd = sb(p["bnd"])
    wcat = jnp.concatenate([p["w3"] * s3[None, :], p["wd"] * sd[None, :]], axis=0)
    return dict(
        w1=(p["w1"] * s1[None, :]).astype(jnp.bfloat16), b1=b1,
        w2=(p["w2"] * s2[None, None, :]).astype(jnp.bfloat16), b2=b2,
        wcat=wcat.astype(jnp.bfloat16), bcat=b3 + bd,
    )


# ----------------------------------------------------------------------------
# Pure-JAX reference (same folded bf16 weights / intermediate casts)
# ----------------------------------------------------------------------------
def _reference(x_nchw, fp):
    dn = ("NHWC", "HWIO", "NHWC")
    width = fp["w1"].shape[1]
    x = jnp.transpose(x_nchw, (0, 2, 3, 1)).astype(jnp.bfloat16)
    y1 = lax.conv_general_dilated(x, fp["w1"][None, None], (1, 1), ((0, 0), (0, 0)),
                                  dimension_numbers=dn, preferred_element_type=jnp.float32)
    y1 = jnp.maximum(y1 + fp["b1"], 0.0).astype(jnp.bfloat16)
    w2 = fp["w2"].reshape(3, 3, width, width)
    y2 = lax.conv_general_dilated(y1, w2, (2, 2), ((1, 1), (1, 1)),
                                  dimension_numbers=dn, preferred_element_type=jnp.float32)
    y2 = jnp.maximum(y2 + fp["b2"], 0.0).astype(jnp.bfloat16)
    y3 = lax.conv_general_dilated(y2, fp["wcat"][:width][None, None], (1, 1), ((0, 0), (0, 0)),
                                  dimension_numbers=dn, preferred_element_type=jnp.float32)
    xd = lax.conv_general_dilated(x, fp["wcat"][width:][None, None], (2, 2), ((0, 0), (0, 0)),
                                  dimension_numbers=dn, preferred_element_type=jnp.float32)
    out = jnp.maximum(y3 + xd + fp["bcat"], 0.0)
    return jnp.transpose(out, (0, 3, 1, 2)).astype(jnp.float32)


if __name__ == "__main__":
    key = jax.random.PRNGKey(0)
    pkey, xkey = jax.random.split(key)

    # stride=2 is the only stride for which the module's residual add type-checks
    # (conv2 is hard-wired to stride 2); base_width=64 -> width == out_channels.
    B, CIN, COUT, H, W = 2, 64, 256, 16, 16
    params = init_params(pkey, CIN, COUT)
    fp = fold_params(params)
    x = jax.random.normal(xkey, (B, CIN, H, W), jnp.float32)

    out = jax.block_until_ready(encoder_bottleneck_nchw(x, fp))

    assert out.shape == (B, COUT, H // 2, W // 2), out.shape
    assert bool(jnp.all(jnp.isfinite(out)))
    assert bool(jnp.all(out >= 0.0))                  # final ReLU

    ref = jax.block_until_ready(_reference(x, fp))
    max_err = float(jnp.max(jnp.abs(out - ref)))
    assert bool(jnp.allclose(out, ref, rtol=3e-2, atol=3e-2)), f"max abs err {max_err}"
    print("KERNEL_OK")
</pallas_src>

<mosaic_0001>
module attributes {stable_mosaic.version = 11 : i64} {
  func.func @_bottleneck_kernel(%arg0: i32, %arg1: i32, %arg2: memref<1x8x8x64xbf16, #tpu.memory_space<vmem>>, %arg3: memref<1x8x8x64xbf16, #tpu.memory_space<vmem>>, %arg4: memref<1x8x8x64xbf16, #tpu.memory_space<vmem>>, %arg5: memref<1x8x8x64xbf16, #tpu.memory_space<vmem>>, %arg6: memref<1x1x8x64xbf16, #tpu.memory_space<vmem>>, %arg7: memref<1x1x8x64xbf16, #tpu.memory_space<vmem>>, %arg8: memref<64x256xbf16, #tpu.memory_space<vmem>>, %arg9: memref<1x256xf32, #tpu.memory_space<vmem>>, %arg10: memref<9x256x256xbf16, #tpu.memory_space<vmem>>, %arg11: memref<1x256xf32, #tpu.memory_space<vmem>>, %arg12: memref<320x256xbf16, #tpu.memory_space<vmem>>, %arg13: memref<1x256xf32, #tpu.memory_space<vmem>>, %arg14: memref<1x8x8x256xbf16, #tpu.memory_space<vmem>>) attributes {dimension_semantics = [#tpu.dimension_semantics<parallel>, #tpu.dimension_semantics<parallel>], iteration_bounds = array<i64: 2, 1>, scalar_prefetch = 0 : i64, scratch_operands = 0 : i64, tpu.core_type = #tpu.core_type<tc>, window_params = [{transform_indices = @transform_0, window_bounds = array<i64: 1, 8, 8, 64>}, {transform_indices = @transform_1, window_bounds = array<i64: 1, 8, 8, 64>}, {transform_indices = @transform_2, window_bounds = array<i64: 1, 8, 8, 64>}, {transform_indices = @transform_3, window_bounds = array<i64: 1, 8, 8, 64>}, {transform_indices = @transform_4, window_bounds = array<i64: 1, 1, 8, 64>}, {transform_indices = @transform_5, window_bounds = array<i64: 1, 1, 8, 64>}, {pipeline_mode = #tpu.pipeline_mode<synchronous>, transform_indices = @transform_6, window_bounds = array<i64: 64, 256>}, {pipeline_mode = #tpu.pipeline_mode<synchronous>, transform_indices = @transform_7, window_bounds = array<i64: 1, 256>}, {pipeline_mode = #tpu.pipeline_mode<synchronous>, transform_indices = @transform_8, window_bounds = array<i64: 9, 256, 256>}, {pipeline_mode = #tpu.pipeline_mode<synchronous>, transform_indices = @transform_9, window_bounds = array<i64: 1, 256>}, {pipeline_mode = #tpu.pipeline_mode<synchronous>, transform_indices = @transform_10, window_bounds = array<i64: 320, 256>}, {pipeline_mode = #tpu.pipeline_mode<synchronous>, transform_indices = @transform_11, window_bounds = array<i64: 1, 256>}, {transform_indices = @transform_12, window_bounds = array<i64: 1, 8, 8, 256>}]} {
    %c0 = arith.constant 0 : index
    %c0_0 = arith.constant 0 : index
    %0 = vector.load %arg8[%c0, %c0_0] : memref<64x256xbf16, #tpu.memory_space<vmem>>, vector<64x256xbf16>
    %c0_1 = arith.constant 0 : index
    %c0_2 = arith.constant 0 : index
    %1 = vector.load %arg9[%c0_1, %c0_2] : memref<1x256xf32, #tpu.memory_space<vmem>>, vector<1x256xf32>
    %c0_3 = arith.constant 0 : index
    %c0_4 = arith.constant 0 : index
    %c0_5 = arith.constant 0 : index
    %c0_6 = arith.constant 0 : index
    %2 = vector.load %arg2[%c0_3, %c0_4, %c0_5, %c0_6] : memref<1x8x8x64xbf16, #tpu.memory_space<vmem>>, vector<1x8x8x64xbf16>
    %3 = vector.shape_cast %2 : vector<1x8x8x64xbf16> to vector<8x8x64xbf16>
    %4 = vector.shape_cast %3 : vector<8x8x64xbf16> to vector<64x64xbf16>
    %cst = arith.constant dense<0.000000e+00> : vector<64x256xf32>
    %5 = tpu.matmul %4, %0, %cst {dimension_numbers = #tpu.dot_dimension_numbers<[1], [0], [0], [1], [0, 0, 1, 1], [], []>} : vector<64x64xbf16>, vector<64x256xbf16>, vector<64x256xf32> -> vector<64x256xf32>
    %6 = vector.broadcast %1 : vector<1x256xf32> to vector<64x256xf32>
    %7 = arith.addf %5, %6 : vector<64x256xf32>
    %cst_7 = arith.constant 0.000000e+00 : f32
    %8 = vector.broadcast %cst_7 : f32 to vector<64x256xf32>
    %9 = arith.maximumf %7, %8 : vector<64x256xf32>
    %10 = arith.truncf %9 : vector<64x256xf32> to vector<64x256xbf16>
    %11 = vector.shape_cast %10 : vector<64x256xbf16> to vector<8x8x256xbf16>
    %c0_8 = arith.constant 0 : index
    %c0_9 = arith.constant 0 : index
    %c0_10 = arith.constant 0 : index
    %c0_11 = arith.constant 0 : index
    %12 = vector.load %arg3[%c0_8, %c0_9, %c0_10, %c0_11] : memref<1x8x8x64xbf16, #tpu.memory_space<vmem>>, vector<1x8x8x64xbf16>
    %13 = vector.shape_cast %12 : vector<1x8x8x64xbf16> to vector<8x8x64xbf16>
    %14 = vector.shape_cast %13 : vector<8x8x64xbf16> to vector<64x64xbf16>
    %cst_12 = arith.constant dense<0.000000e+00> : vector<64x256xf32>
    %15 = tpu.matmul %14, %0, %cst_12 {dimension_numbers = #tpu.dot_dimension_numbers<[1], [0], [0], [1], [0, 0, 1, 1], [], []>} : vector<64x64xbf16>, vector<64x256xbf16>, vector<64x256xf32> -> vector<64x256xf32>
    %16 = vector.broadcast %1 : vector<1x256xf32> to vector<64x256xf32>
    %17 = arith.addf %15, %16 : vector<64x256xf32>
    %cst_13 = arith.constant 0.000000e+00 : f32
    %18 = vector.broadcast %cst_13 : f32 to vector<64x256xf32>
    %19 = arith.maximumf %17, %18 : vector<64x256xf32>
    %20 = arith.truncf %19 : vector<64x256xf32> to vector<64x256xbf16>
    %21 = vector.shape_cast %20 : vector<64x256xbf16> to vector<8x8x256xbf16>
    %c0_i32 = arith.constant 0 : i32
    %22 = arith.cmpi sgt, %arg1, %c0_i32 : i32
    %cst_14 = arith.constant 1.000000e+00 : f32
    %cst_15 = arith.constant 0.000000e+00 : f32
    %23 = arith.select %22, %cst_14, %cst_15 : f32
    %24 = arith.truncf %23 : f32 to bf16
    %c0_16 = arith.constant 0 : index
    %c0_17 = arith.constant 0 : index
    %c0_18 = arith.constant 0 : index
    %c0_19 = arith.constant 0 : index
    %25 = vector.load %arg6[%c0_16, %c0_17, %c0_18, %c0_19] : memref<1x1x8x64xbf16, #tpu.memory_space<vmem>>, vector<1x1x8x64xbf16>
    %26 = vector.shape_cast %25 : vector<1x1x8x64xbf16> to vector<1x8x64xbf16>
    %27 = vector.shape_cast %26 : vector<1x8x64xbf16> to vector<8x64xbf16>
    %cst_20 = arith.constant dense<0.000000e+00> : vector<8x256xf32>
    %28 = tpu.matmul %27, %0, %cst_20 {dimension_numbers = #tpu.dot_dimension_numbers<[1], [0], [0], [1], [0, 0, 1, 1], [], []>} : vector<8x64xbf16>, vector<64x256xbf16>, vector<8x256xf32> -> vector<8x256xf32>
    %29 = vector.broadcast %1 : vector<1x256xf32> to vector<8x256xf32>
    %30 = arith.addf %28, %29 : vector<8x256xf32>
    %cst_21 = arith.constant 0.000000e+00 : f32
    %31 = vector.broadcast %cst_21 : f32 to vector<8x256xf32>
    %32 = arith.maximumf %30, %31 : vector<8x256xf32>
    %33 = arith.truncf %32 : vector<8x256xf32> to vector<8x256xbf16>
    %34 = vector.broadcast %24 : bf16 to vector<8x256xbf16>
    %35 = arith.mulf %33, %34 : vector<8x256xbf16>
    %c0_22 = arith.constant 0 : index
    %c0_23 = arith.constant 0 : index
    %c0_24 = arith.constant 0 : index
    %c0_25 = arith.constant 0 : index
    %36 = vector.load %arg7[%c0_22, %c0_23, %c0_24, %c0_25] : memref<1x1x8x64xbf16, #tpu.memory_space<vmem>>, vector<1x1x8x64xbf16>
    %37 = vector.shape_cast %36 : vector<1x1x8x64xbf16> to vector<1x8x64xbf16>
    %38 = vector.shape_cast %37 : vector<1x8x64xbf16> to vector<8x64xbf16>
    %cst_26 = arith.constant dense<0.000000e+00> : vector<8x256xf32>
    %39 = tpu.matmul %38, %0, %cst_26 {dimension_numbers = #tpu.dot_dimension_numbers<[1], [0], [0], [1], [0, 0, 1, 1], [], []>} : vector<8x64xbf16>, vector<64x256xbf16>, vector<8x256xf32> -> vector<8x256xf32>
    %40 = vector.broadcast %1 : vector<1x256xf32> to vector<8x256xf32>
    %41 = arith.addf %39, %40 : vector<8x256xf32>
    %cst_27 = arith.constant 0.000000e+00 : f32
    %42 = vector.broadcast %cst_27 : f32 to vector<8x256xf32>
    %43 = arith.maximumf %41, %42 : vector<8x256xf32>
    %44 = arith.truncf %43 : vector<8x256xf32> to vector<8x256xbf16>
    %45 = vector.broadcast %24 : bf16 to vector<8x256xbf16>
    %46 = arith.mulf %44, %45 : vector<8x256xbf16>
    %47 = vector.shape_cast %35 : vector<8x256xbf16> to vector<1x8x256xbf16>
    %c0_28 = arith.constant 0 : index
    %c0_29 = arith.constant 0 : index
    %c0_30 = arith.constant 0 : index
    %c0_31 = arith.constant 0 : index
    %48 = vector.load %arg4[%c0_28, %c0_29, %c0_30, %c0_31] : memref<1x8x8x64xbf16, #tpu.memory_space<vmem>>, vector<1x8x8x64xbf16>
    %49 = vector.shape_cast %48 : vector<1x8x8x64xbf16> to vector<8x8x64xbf16>
    %50 = vector.shape_cast %49 : vector<8x8x64xbf16> to vector<64x64xbf16>
    %cst_32 = arith.constant dense<0.000000e+00> : vector<64x256xf32>
    %51 = tpu.matmul %50, %0, %cst_32 {dimension_numbers = #tpu.dot_dimension_numbers<[1], [0], [0], [1], [0, 0, 1, 1], [], []>} : vector<64x64xbf16>, vector<64x256xbf16>, vector<64x256xf32> -> vector<64x256xf32>
    %52 = vector.broadcast %1 : vector<1x256xf32> to vector<64x256xf32>
    %53 = arith.addf %51, %52 : vector<64x256xf32>
    %cst_33 = arith.constant 0.000000e+00 : f32
    %54 = vector.broadcast %cst_33 : f32 to vector<64x256xf32>
    %55 = arith.maximumf %53, %54 : vector<64x256xf32>
    %56 = arith.truncf %55 : vector<64x256xf32> to vector<64x256xbf16>
    %57 = vector.shape_cast %56 : vector<64x256xbf16> to vector<8x8x256xbf16>
    %58 = tpu.concatenate %47, %57 in 0 : vector<1x8x256xbf16>, vector<8x8x256xbf16> -> vector<9x8x256xbf16>
    %59 = vector.shape_cast %46 : vector<8x256xbf16> to vector<1x8x256xbf16>
    %c0_34 = arith.constant 0 : index
    %c0_35 = arith.constant 0 : index
    %c0_36 = arith.constant 0 : index
    %c0_37 = arith.constant 0 : index
    %60 = vector.load %arg5[%c0_34, %c0_35, %c0_36, %c0_37] : memref<1x8x8x64xbf16, #tpu.memory_space<vmem>>, vector<1x8x8x64xbf16>
    %61 = vector.shape_cast %60 : vector<1x8x8x64xbf16> to vector<8x8x64xbf16>
    %62 = vector.shape_cast %61 : vector<8x8x64xbf16> to vector<64x64xbf16>
    %cst_38 = arith.constant dense<0.000000e+00> : vector<64x256xf32>
    %63 = tpu.matmul %62, %0, %cst_38 {dimension_numbers = #tpu.dot_dimension_numbers<[1], [0], [0], [1], [0, 0, 1, 1], [], []>} : vector<64x64xbf16>, vector<64x256xbf16>, vector<64x256xf32> -> vector<64x256xf32>
    %64 = vector.broadcast %1 : vector<1x256xf32> to vector<64x256xf32>
    %65 = arith.addf %63, %64 : vector<64x256xf32>
    %cst_39 = arith.constant 0.000000e+00 : f32
    %66 = vector.broadcast %cst_39 : f32 to vector<64x256xf32>
    %67 = arith.maximumf %65, %66 : vector<64x256xf32>
    %68 = arith.truncf %67 : vector<64x256xf32> to vector<64x256xbf16>
    %69 = vector.shape_cast %68 : vector<64x256xbf16> to vector<8x8x256xbf16>
    %70 = tpu.concatenate %59, %69 in 0 : vector<1x8x256xbf16>, vector<8x8x256xbf16> -> vector<9x8x256xbf16>
    %cst_40 = arith.constant 0.000000e+00 : bf16
    %71 = vector.broadcast %cst_40 : bf16 to vector<8x1x256xbf16>
    %72 = vector.extract_strided_slice %21 {offsets = [0, 0, 0], sizes = [8, 7, 256], strides = [1, 1, 1]} : vector<8x8x256xbf16> to vector<8x7x256xbf16>
    %73 = tpu.concatenate %71, %72 in 1 : vector<8x1x256xbf16>, vector<8x7x256xbf16> -> vector<8x8x256xbf16>
    %cst_41 = arith.constant 0.000000e+00 : bf16
    %74 = vector.broadcast %cst_41 : bf16 to vector<9x1x256xbf16>
    %75 = vector.extract_strided_slice %70 {offsets = [0, 0, 0], sizes = [9, 7, 256], strides = [1, 1, 1]} : vector<9x8x256xbf16> to vector<9x7x256xbf16>
    %76 = tpu.concatenate %74, %75 in 1 : vector<9x1x256xbf16>, vector<9x7x256xbf16> -> vector<9x8x256xbf16>
    %77 = vector.extract_strided_slice %76 {offsets = [0, 0, 0], sizes = [8, 8, 256], strides = [1, 1, 1]} : vector<9x8x256xbf16> to vector<8x8x256xbf16>
    %78 = vector.extract_strided_slice %58 {offsets = [0, 0, 0], sizes = [8, 8, 256], strides = [1, 1, 1]} : vector<9x8x256xbf16> to vector<8x8x256xbf16>
    %79 = vector.extract_strided_slice %70 {offsets = [0, 0, 0], sizes = [8, 8, 256], strides = [1, 1, 1]} : vector<9x8x256xbf16> to vector<8x8x256xbf16>
    %80 = vector.extract_strided_slice %76 {offsets = [1, 0, 0], sizes = [8, 8, 256], strides = [1, 1, 1]} : vector<9x8x256xbf16> to vector<8x8x256xbf16>
    %81 = vector.extract_strided_slice %58 {offsets = [1, 0, 0], sizes = [8, 8, 256], strides = [1, 1, 1]} : vector<9x8x256xbf16> to vector<8x8x256xbf16>
    %82 = vector.extract_strided_slice %70 {offsets = [1, 0, 0], sizes = [8, 8, 256], strides = [1, 1, 1]} : vector<9x8x256xbf16> to vector<8x8x256xbf16>
    %cst_42 = arith.constant 0.000000e+00 : f32
    %83 = vector.broadcast %cst_42 : f32 to vector<64x256xf32>
    %84 = vector.shape_cast %77 : vector<8x8x256xbf16> to vector<64x256xbf16>
    %c0_43 = arith.constant 0 : index
    %c0_44 = arith.constant 0 : index
    %c0_45 = arith.constant 0 : index
    %85 = vector.load %arg10[%c0_43, %c0_44, %c0_45] : memref<9x256x256xbf16, #tpu.memory_space<vmem>>, vector<1x256x256xbf16>
    %86 = vector.shape_cast %85 : vector<1x256x256xbf16> to vector<256x256xbf16>
    %cst_46 = arith.constant dense<0.000000e+00> : vector<64x256xf32>
    %87 = tpu.matmul %84, %86, %cst_46 {dimension_numbers = #tpu.dot_dimension_numbers<[1], [0], [0], [1], [0, 0, 1, 1], [], []>} : vector<64x256xbf16>, vector<256x256xbf16>, vector<64x256xf32> -> vector<64x256xf32>
    %88 = arith.addf %83, %87 : vector<64x256xf32>
    %89 = vector.shape_cast %78 : vector<8x8x256xbf16> to vector<64x256xbf16>
    %c1 = arith.constant 1 : index
    %c0_47 = arith.constant 0 : index
    %c0_48 = arith.constant 0 : index
    %90 = vector.load %arg10[%c1, %c0_47, %c0_48] : memref<9x256x256xbf16, #tpu.memory_space<vmem>>, vector<1x256x256xbf16>
    %91 = vector.shape_cast %90 : vector<1x256x256xbf16> to vector<256x256xbf16>
    %cst_49 = arith.constant dense<0.000000e+00> : vector<64x256xf32>
    %92 = tpu.matmul %89, %91, %cst_49 {dimension_numbers = #tpu.dot_dimension_numbers<[1], [0], [0], [1], [0, 0, 1, 1], [], []>} : vector<64x256xbf16>, vector<256x256xbf16>, vector<64x256xf32> -> vector<64x256xf32>
    %93 = arith.addf %88, %92 : vector<64x256xf32>
    %94 = vector.shape_cast %79 : vector<8x8x256xbf16> to vector<64x256xbf16>
    %c2 = arith.constant 2 : index
    %c0_50 = arith.constant 0 : index
    %c0_51 = arith.constant 0 : index
    %95 = vector.load %arg10[%c2, %c0_50, %c0_51] : memref<9x256x256xbf16, #tpu.memory_space<vmem>>, vector<1x256x256xbf16>
    %96 = vector.shape_cast %95 : vector<1x256x256xbf16> to vector<256x256xbf16>
    %cst_52 = arith.constant dense<0.000000e+00> : vector<64x256xf32>
    %97 = tpu.matmul %94, %96, %cst_52 {dimension_numbers = #tpu.dot_dimension_numbers<[1], [0], [0], [1], [0, 0, 1, 1], [], []>} : vector<64x256xbf16>, vector<256x256xbf16>, vector<64x256xf32> -> vector<64x256xf32>
    %98 = arith.addf %93, %97 : vector<64x256xf32>
    %99 = vector.shape_cast %73 : vector<8x8x256xbf16> to vector<64x256xbf16>
    %c3 = arith.constant 3 : index
    %c0_53 = arith.constant 0 : index
    %c0_54 = arith.constant 0 : index
    %100 = vector.load %arg10[%c3, %c0_53, %c0_54] : memref<9x256x256xbf16, #tpu.memory_space<vmem>>, vector<1x256x256xbf16>
    %101 = vector.shape_cast %100 : vector<1x256x256xbf16> to vector<256x256xbf16>
    %cst_55 = arith.constant dense<0.000000e+00> : vector<64x256xf32>
    %102 = tpu.matmul %99, %101, %cst_55 {dimension_numbers = #tpu.dot_dimension_numbers<[1], [0], [0], [1], [0, 0, 1, 1], [], []>} : vector<64x256xbf16>, vector<256x256xbf16>, vector<64x256xf32> -> vector<64x256xf32>
    %103 = arith.addf %98, %102 : vector<64x256xf32>
    %104 = vector.shape_cast %11 : vector<8x8x256xbf16> to vector<64x256xbf16>
    %c4 = arith.constant 4 : index
    %c0_56 = arith.constant 0 : index
    %c0_57 = arith.constant 0 : index
    %105 = vector.load %arg10[%c4, %c0_56, %c0_57] : memref<9x256x256xbf16, #tpu.memory_space<vmem>>, vector<1x256x256xbf16>
    %106 = vector.shape_cast %105 : vector<1x256x256xbf16> to vector<256x256xbf16>
    %cst_58 = arith.constant dense<0.000000e+00> : vector<64x256xf32>
    %107 = tpu.matmul %104, %106, %cst_58 {dimension_numbers = #tpu.dot_dimension_numbers<[1], [0], [0], [1], [0, 0, 1, 1], [], []>} : vector<64x256xbf16>, vector<256x256xbf16>, vector<64x256xf32> -> vector<64x256xf32>
    %108 = arith.addf %103, %107 : vector<64x256xf32>
    %109 = vector.shape_cast %21 : vector<8x8x256xbf16> to vector<64x256xbf16>
    %c5 = arith.constant 5 : index
    %c0_59 = arith.constant 0 : index
    %c0_60 = arith.constant 0 : index
    %110 = vector.load %arg10[%c5, %c0_59, %c0_60] : memref<9x256x256xbf16, #tpu.memory_space<vmem>>, vector<1x256x256xbf16>
    %111 = vector.shape_cast %110 : vector<1x256x256xbf16> to vector<256x256xbf16>
    %cst_61 = arith.constant dense<0.000000e+00> : vector<64x256xf32>
    %112 = tpu.matmul %109, %111, %cst_61 {dimension_numbers = #tpu.dot_dimension_numbers<[1], [0], [0], [1], [0, 0, 1, 1], [], []>} : vector<64x256xbf16>, vector<256x256xbf16>, vector<64x256xf32> -> vector<64x256xf32>
    %113 = arith.addf %108, %112 : vector<64x256xf32>
    %114 = vector.shape_cast %80 : vector<8x8x256xbf16> to vector<64x256xbf16>
    %c6 = arith.constant 6 : index
    %c0_62 = arith.constant 0 : index
    %c0_63 = arith.constant 0 : index
    %115 = vector.load %arg10[%c6, %c0_62, %c0_63] : memref<9x256x256xbf16, #tpu.memory_space<vmem>>, vector<1x256x256xbf16>
    %116 = vector.shape_cast %115 : vector<1x256x256xbf16> to vector<256x256xbf16>
    %cst_64 = arith.constant dense<0.000000e+00> : vector<64x256xf32>
    %117 = tpu.matmul %114, %116, %cst_64 {dimension_numbers = #tpu.dot_dimension_numbers<[1], [0], [0], [1], [0, 0, 1, 1], [], []>} : vector<64x256xbf16>, vector<256x256xbf16>, vector<64x256xf32> -> vector<64x256xf32>
    %118 = arith.addf %113, %117 : vector<64x256xf32>
    %119 = vector.shape_cast %81 : vector<8x8x256xbf16> to vector<64x256xbf16>
    %c7 = arith.constant 7 : index
    %c0_65 = arith.constant 0 : index
    %c0_66 = arith.constant 0 : index
    %120 = vector.load %arg10[%c7, %c0_65, %c0_66] : memref<9x256x256xbf16, #tpu.memory_space<vmem>>, vector<1x256x256xbf16>
    %121 = vector.shape_cast %120 : vector<1x256x256xbf16> to vector<256x256xbf16>
    %cst_67 = arith.constant dense<0.000000e+00> : vector<64x256xf32>
    %122 = tpu.matmul %119, %121, %cst_67 {dimension_numbers = #tpu.dot_dimension_numbers<[1], [0], [0], [1], [0, 0, 1, 1], [], []>} : vector<64x256xbf16>, vector<256x256xbf16>, vector<64x256xf32> -> vector<64x256xf32>
    %123 = arith.addf %118, %122 : vector<64x256xf32>
    %124 = vector.shape_cast %82 : vector<8x8x256xbf16> to vector<64x256xbf16>
    %c8 = arith.constant 8 : index
    %c0_68 = arith.constant 0 : index
    %c0_69 = arith.constant 0 : index
    %125 = vector.load %arg10[%c8, %c0_68, %c0_69] : memref<9x256x256xbf16, #tpu.memory_space<vmem>>, vector<1x256x256xbf16>
    %126 = vector.shape_cast %125 : vector<1x256x256xbf16> to vector<256x256xbf16>
    %cst_70 = arith.constant dense<0.000000e+00> : vector<64x256xf32>
    %127 = tpu.matmul %124, %126, %cst_70 {dimension_numbers = #tpu.dot_dimension_numbers<[1], [0], [0], [1], [0, 0, 1, 1], [], []>} : vector<64x256xbf16>, vector<256x256xbf16>, vector<64x256xf32> -> vector<64x256xf32>
    %128 = arith.addf %123, %127 : vector<64x256xf32>
    %c0_71 = arith.constant 0 : index
    %c0_72 = arith.constant 0 : index
    %129 = vector.load %arg11[%c0_71, %c0_72] : memref<1x256xf32, #tpu.memory_space<vmem>>, vector<1x256xf32>
    %130 = vector.broadcast %129 : vector<1x256xf32> to vector<64x256xf32>
    %131 = arith.addf %128, %130 : vector<64x256xf32>
    %cst_73 = arith.constant 0.000000e+00 : f32
    %132 = vector.broadcast %cst_73 : f32 to vector<64x256xf32>
    %133 = arith.maximumf %131, %132 : vector<64x256xf32>
    %134 = arith.truncf %133 : vector<64x256xf32> to vector<64x256xbf16>
    %135 = tpu.concatenate %134, %4 in 1 : vector<64x256xbf16>, vector<64x64xbf16> -> vector<64x320xbf16>
    %c0_74 = arith.constant 0 : index
    %c0_75 = arith.constant 0 : index
    %136 = vector.load %arg12[%c0_74, %c0_75] : memref<320x256xbf16, #tpu.memory_space<vmem>>, vector<320x256xbf16>
    %cst_76 = arith.constant dense<0.000000e+00> : vector<64x256xf32>
    %137 = tpu.matmul %135, %136, %cst_76 {dimension_numbers = #tpu.dot_dimension_numbers<[1], [0], [0], [1], [0, 0, 1, 1], [], []>} : vector<64x320xbf16>, vector<320x256xbf16>, vector<64x256xf32> -> vector<64x256xf32>
    %c0_77 = arith.constant 0 : index
    %c0_78 = arith.constant 0 : index
    %138 = vector.load %arg13[%c0_77, %c0_78] : memref<1x256xf32, #tpu.memory_space<vmem>>, vector<1x256xf32>
    %139 = vector.broadcast %138 : vector<1x256xf32> to vector<64x256xf32>
    %140 = arith.addf %137, %139 : vector<64x256xf32>
    %cst_79 = arith.constant 0.000000e+00 : f32
    %141 = vector.broadcast %cst_79 : f32 to vector<64x256xf32>
    %142 = arith.maximumf %140, %141 : vector<64x256xf32>
    %143 = vector.shape_cast %142 : vector<64x256xf32> to vector<8x8x256xf32>
    %144 = arith.truncf %143 : vector<8x8x256xf32> to vector<8x8x256xbf16>
    %c0_80 = arith.constant 0 : index
    %c0_81 = arith.constant 0 : index
    %c0_82 = arith.constant 0 : index
    %c0_83 = arith.constant 0 : index
    %145 = vector.load %arg14[%c0_80, %c0_81, %c0_82, %c0_83] : memref<1x8x8x256xbf16, #tpu.memory_space<vmem>>, vector<1x8x8x256xbf16>
    %146 = vector.shape_cast %145 : vector<1x8x8x256xbf16> to vector<8x8x256xbf16>
    %147 = vector.shape_cast %144 : vector<8x8x256xbf16> to vector<1x8x8x256xbf16>
    tpu.vector_store %arg14[%c0_80, %c0_81, %c0_82, %c0_83], %147 {strides = array<i32>} : memref<1x8x8x256xbf16, #tpu.memory_space<vmem>>, vector<1x8x8x256xbf16>,
    return
  }
  func.func @transform_0(%arg0: i32, %arg1: i32) -> (i32, i32, i32, i32) {
    %c0_i32 = arith.constant 0 : i32
    %c0_i32_0 = arith.constant 0 : i32
    %c0_i32_1 = arith.constant 0 : i32
    return %arg0, %arg1, %c0_i32, %c0_i32_0 : i32, i32, i32, i32
  }
  func.func @transform_1(%arg0: i32, %arg1: i32) -> (i32, i32, i32, i32) {
    %c0_i32 = arith.constant 0 : i32
    %c0_i32_0 = arith.constant 0 : i32
    %c0_i32_1 = arith.constant 0 : i32
    return %arg0, %arg1, %c0_i32, %c0_i32_0 : i32, i32, i32, i32
  }
  func.func @transform_2(%arg0: i32, %arg1: i32) -> (i32, i32, i32, i32) {
    %c0_i32 = arith.constant 0 : i32
    %c0_i32_0 = arith.constant 0 : i32
    %c0_i32_1 = arith.constant 0 : i32
    return %arg0, %arg1, %c0_i32, %c0_i32_0 : i32, i32, i32, i32
  }
  func.func @transform_3(%arg0: i32, %arg1: i32) -> (i32, i32, i32, i32) {
    %c0_i32 = arith.constant 0 : i32
    %c0_i32_0 = arith.constant 0 : i32
    %c0_i32_1 = arith.constant 0 : i32
    return %arg0, %arg1, %c0_i32, %c0_i32_0 : i32, i32, i32, i32
  }
  func.func @transform_4(%arg0: i32, %arg1: i32) -> (i32, i32, i32, i32) {
    %c8_i32 = arith.constant 8 : i32
    %0 = arith.muli %arg1, %c8_i32 : i32
    %c1_i32 = arith.constant 1 : i32
    %1 = arith.subi %0, %c1_i32 : i32
    %c0_i32 = arith.constant 0 : i32
    %2 = arith.maxsi %1, %c0_i32 : i32
    %c0_i32_0 = arith.constant 0 : i32
    %c0_i32_1 = arith.constant 0 : i32
    %c0_i32_2 = arith.constant 0 : i32
    return %arg0, %2, %c0_i32_0, %c0_i32_1 : i32, i32, i32, i32
  }
  func.func @transform_5(%arg0: i32, %arg1: i32) -> (i32, i32, i32, i32) {
    %c8_i32 = arith.constant 8 : i32
    %0 = arith.muli %arg1, %c8_i32 : i32
    %c1_i32 = arith.constant 1 : i32
    %1 = arith.subi %0, %c1_i32 : i32
    %c0_i32 = arith.constant 0 : i32
    %2 = arith.maxsi %1, %c0_i32 : i32
    %c0_i32_0 = arith.constant 0 : i32
    %c0_i32_1 = arith.constant 0 : i32
    %c0_i32_2 = arith.constant 0 : i32
    return %arg0, %2, %c0_i32_0, %c0_i32_1 : i32, i32, i32, i32
  }
  func.func @transform_6(%arg0: i32, %arg1: i32) -> (i32, i32) {
    %c0_i32 = arith.constant 0 : i32
    %c0_i32_0 = arith.constant 0 : i32
    %c0_i32_1 = arith.constant 0 : i32
    return %c0_i32, %c0_i32_0 : i32, i32
  }
  func.func @transform_7(%arg0: i32, %arg1: i32) -> (i32, i32) {
    %c0_i32 = arith.constant 0 : i32
    %c0_i32_0 = arith.constant 0 : i32
    %c0_i32_1 = arith.constant 0 : i32
    return %c0_i32, %c0_i32_0 : i32, i32
  }
  func.func @transform_8(%arg0: i32, %arg1: i32) -> (i32, i32, i32) {
    %c0_i32 = arith.constant 0 : i32
    %c0_i32_0 = arith.constant 0 : i32
    %c0_i32_1 = arith.constant 0 : i32
    %c0_i32_2 = arith.constant 0 : i32
    return %c0_i32, %c0_i32_0, %c0_i32_1 : i32, i32, i32
  }
  func.func @transform_9(%arg0: i32, %arg1: i32) -> (i32, i32) {
    %c0_i32 = arith.constant 0 : i32
    %c0_i32_0 = arith.constant 0 : i32
    %c0_i32_1 = arith.constant 0 : i32
    return %c0_i32, %c0_i32_0 : i32, i32
  }
  func.func @transform_10(%arg0: i32, %arg1: i32) -> (i32, i32) {
    %c0_i32 = arith.constant 0 : i32
    %c0_i32_0 = arith.constant 0 : i32
    %c0_i32_1 = arith.constant 0 : i32
    return %c0_i32, %c0_i32_0 : i32, i32
  }
  func.func @transform_11(%arg0: i32, %arg1: i32) -> (i32, i32) {
    %c0_i32 = arith.constant 0 : i32
    %c0_i32_0 = arith.constant 0 : i32
    %c0_i32_1 = arith.constant 0 : i32
    return %c0_i32, %c0_i32_0 : i32, i32
  }
  func.func @transform_12(%arg0: i32, %arg1: i32) -> (i32, i32, i32, i32) {
    %c0_i32 = arith.constant 0 : i32
    %c0_i32_0 = arith.constant 0 : i32
    %c0_i32_1 = arith.constant 0 : i32
    return %arg0, %arg1, %c0_i32, %c0_i32_0 : i32, i32, i32, i32
  }
}

</mosaic_0001>

<llo_original>
// kernel: encoder_bottleneck_nchw.1
$region0: #{encoder_bottleneck_nchw.1}
  #allocation0 [shape = 'u32[]', space=smem, size = 0x4, offset = 0x4, fixed_abs, tag = 'smem constant byte address 0x4 - core index']
  #allocation1 [shape = 'u32[144,128]{1,0:T(1,128)}', space=vmem, size = 0x12000, scoped, tag = 'internal scratch']
  %s0 = inlined_call_operand.vmem [shape: bf16[2,8,8,64], index: 0, kind: input, shape index: {}]
  %s1 = inlined_call_operand.vmem [shape: bf16[2,8,8,64], index: 1, kind: input, shape index: {}]
  %s2 = inlined_call_operand.vmem [shape: bf16[2,8,8,64], index: 2, kind: input, shape index: {}, may-alias: {2,4}]
  %s3 = inlined_call_operand.vmem [shape: bf16[2,8,8,64], index: 3, kind: input, shape index: {}, may-alias: {3,5}]
  %s4 = inlined_call_operand.vmem [shape: bf16[2,8,8,64], index: 4, kind: input, shape index: {}, may-alias: {2,4}]
  %s5 = inlined_call_operand.vmem [shape: bf16[2,8,8,64], index: 5, kind: input, shape index: {}, may-alias: {3,5}]
  %s6 = inlined_call_operand.hbm [shape: bf16[64,256], index: 6, kind: input, shape index: {}]
  %s7 = inlined_call_operand.hbm [shape: f32[1,256], index: 7, kind: input, shape index: {}]
  %s8 = inlined_call_operand.hbm [shape: bf16[9,256,256], index: 8, kind: input, shape index: {}]
  %s9 = inlined_call_operand.hbm [shape: f32[1,256], index: 9, kind: input, shape index: {}]
  %s10 = inlined_call_operand.hbm [shape: bf16[320,256], index: 10, kind: input, shape index: {}]
  %s11 = inlined_call_operand.hbm [shape: f32[1,256], index: 11, kind: input, shape index: {}]
  %s12 = inlined_call_operand.vmem [shape: bf16[2,8,8,256], index: 12, kind: output, shape index: {}]
  %s13 = sld [smem:[#allocation0]]
  $region105: #{encoder_bottleneck_nchw.1} parent=0
    _
  %s15 = ssub.s32 1, %s13
  %s16 = scalar_select 0, %s15, %s13
  $region1: #{encoder_bottleneck_nchw.1} parent=0
    #allocation2 [shape = 'u8[32768]{0}', space=vmem, size = 0x8000, scoped, tag = 'input window, operand 6, single buffered']
    #allocation3 [shape = 's32[2]{0}', space=sflag, size = 0x8, scoped, tag = 'scoped memory for encoder_bottleneck_nchw.1']
    #allocation4 [shape = 'u8[1024]{0}', space=vmem, size = 0x400, scoped, tag = 'input window, operand 7, single buffered']
    #allocation5 [shape = 's32[1]{0}', space=sflag, size = 0x4, scoped, tag = 'scoped memory for encoder_bottleneck_nchw.1']
    #allocation6 [shape = 'u8[1179648]{0}', space=vmem, size = 0x120000, scoped, tag = 'input window, operand 8, single buffered']
    #allocation7 [shape = 'u8[1024]{0}', space=vmem, size = 0x400, scoped, tag = 'input window, operand 9, single buffered']
    #allocation8 [shape = 's32[1]{0}', space=sflag, size = 0x4, scoped, tag = 'scoped memory for encoder_bottleneck_nchw.1']
    #allocation9 [shape = 'u8[163840]{0}', space=vmem, size = 0x28000, scoped, tag = 'input window, operand 10, single buffered']
    #allocation10 [shape = 'u8[1024]{0}', space=vmem, size = 0x400, scoped, tag = 'input window, operand 11, single buffered']
    #allocation11 [shape = 's32[1]{0}', space=sflag, size = 0x4, scoped, tag = 'scoped memory for encoder_bottleneck_nchw.1']
    %17 = vsyncpa [#allocation3], 0
    %18 = vsyncpa [#allocation5], 0
    %19 = vsyncpa [#allocation8], 0
    %20 = vsyncpa [#allocation11], 0
    loop: start=0, step=1, limit=4
    $region2: #{encoder_bottleneck_nchw.1} parent=1 // loop_pre_header
      _
    $region3: #{encoder_bottleneck_nchw.1} parent=1 // loop_header
      %s22 = sphi 0, %s26
      %p23 = scmp.ge.s32.totalorder %s22, 4
      %s29 = sphi 0, %s41
      %s30 = sphi 0, %s37
      %s31 = sphi 0, %s29
      %s32 = sphi 0, %s30
      %s33 = sphi 0, %s31
      %s34 = sphi 0, %s32
      %s46 = sphi 0, %s48
      %s49 = sphi 0, %s46
      %s50 = sphi 0, %s49
      %s66 = sphi 0, %s50
      %s74 = sphi 0, %s76
      %s77 = sphi 0, %s74
      %s78 = sphi 0, %s77
      %s94 = sphi 0, %s78
      %s102 = sphi 0, %s104
      %s105 = sphi 0, %s102
      %s106 = sphi 0, %s105
      %s122 = sphi 0, %s106
      %s130 = sphi 0, %s132
      %s133 = sphi 0, %s130
      %s134 = sphi 0, %s133
      %s150 = sphi 0, %s134
      %s166 = sphi 0, %s168
      %s169 = sphi 0, %s166
      %s170 = sphi 0, %s169
      %s186 = sphi 0, %s170
      %s202 = sphi 0, %s204
      %s205 = sphi 0, %s202
      %s206 = sphi 0, %s205
      %s222 = sphi 0, %s206
      %s226 = sphi 0, %s226
      %s228 = sphi 0, %s226
      %s229 = sphi 0, %s228
      %s243 = sphi 0, %s229
      %s247 = sphi 0, %s247
      %s249 = sphi 0, %s247
      %s250 = sphi 0, %s249
      %s264 = sphi 0, %s250
      %s268 = sphi 0, %s268
      %s270 = sphi 0, %s268
      %s271 = sphi 0, %s270
      %s285 = sphi 0, %s271
      %s289 = sphi 0, %s289
      %s291 = sphi 0, %s289
      %s292 = sphi 0, %s291
      %s306 = sphi 0, %s292
      %s310 = sphi 0, %s310
      %s312 = sphi 0, %s310
      %s313 = sphi 0, %s312
      %s327 = sphi 0, %s313
      %s331 = sphi 0, %s331
      %s333 = sphi 0, %s331
      %s334 = sphi 0, %s333
      %s348 = sphi 0, %s334
      %s356 = sphi 0, %s358
      %s359 = sphi 0, %s356
      %s360 = sphi 0, %s359
      %s376 = sphi 0, %s360
    $region4: #{encoder_bottleneck_nchw.1} parent=1 // loop_header_branch
      %25 = sbr.rel (%p23) target = $region8
    $region5: #{encoder_bottleneck_nchw.1} parent=1 // loop_body
      %s27 = ssub.s32 %s22, 1
      %s28 = ssub.s32 %s22, 2
      %s35 = sadd.s32 1, %s30
      %p36 = scmp.ge.s32.totalorder %s35, 1
      %s37 = scalar_select %p36, 0, %s35
      %s38 = sadd.s32 1, %s29
      %s39 = scalar_select %p36, %s38, %s29
      %p40 = scmp.ge.s32.totalorder %s39, 2
      %s41 = scalar_select %p40, 0, %s39
      %s42 = ssub.s32 %s29, %s41
      %s43 = ssub.s32 %s30, %s37
      %s44 = sor.u32 %s42, %s43
      %p45 = scmp.eq.s32.totalorder %s44, 0
      %s47 = sadd.s32 %s46, 1
      %s48 = scalar_select %p45, %s46, %s47
      %p51 = pneg %p45
      %p52 = scmp.eq.s32.totalorder %s22, 1
      %p53 = por %p51, %p52
      %p54 = scmp.ne.s32.totalorder %s46, %s49
      %p55 = scmp.eq.s32.totalorder %s22, 0
      %p56 = por %p54, %p55
      %p57 = scmp.ne.s32.totalorder %s46, %s49
      %p58 = scmp.eq.s32.totalorder %s27, 1
      %p59 = por %p57, %p58
      %p60 = scmp.ne.s32.totalorder %s49, %s50
      %p61 = scmp.eq.s32.totalorder %s27, 0
      %p62 = por %p60, %p61
      %p63 = scmp.ne.s32.totalorder %s49, %s50
      %p64 = scmp.eq.s32.totalorder %s28, 1
      %p65 = por %p63, %p64
      %p67 = scmp.ne.s32.totalorder %s50, %s66
      %p68 = scmp.eq.s32.totalorder %s28, 0
      %p69 = por %p67, %p68
      %s70 = ssub.s32 %s29, %s41
      %s71 = ssub.s32 %s30, %s37
      %s72 = sor.u32 %s70, %s71
      %p73 = scmp.eq.s32.totalorder %s72, 0
      %s75 = sadd.s32 %s74, 1
      %s76 = scalar_select %p73, %s74, %s75
      %p79 = pneg %p73
      %p80 = scmp.eq.s32.totalorder %s22, 1
      %p81 = por %p79, %p80
      %p82 = scmp.ne.s32.totalorder %s74, %s77
      %p83 = scmp.eq.s32.totalorder %s22, 0
      %p84 = por %p82, %p83
      %p85 = scmp.ne.s32.totalorder %s74, %s77
      %p86 = scmp.eq.s32.totalorder %s27, 1
      %p87 = por %p85, %p86
      %p88 = scmp.ne.s32.totalorder %s77, %s78
      %p89 = scmp.eq.s32.totalorder %s27, 0
      %p90 = por %p88, %p89
      %p91 = scmp.ne.s32.totalorder %s77, %s78
      %p92 = scmp.eq.s32.totalorder %s28, 1
      %p93 = por %p91, %p92
      %p95 = scmp.ne.s32.totalorder %s78, %s94
      %p96 = scmp.eq.s32.totalorder %s28, 0
      %p97 = por %p95, %p96
      %s98 = ssub.s32 %s29, %s41
      %s99 = ssub.s32 %s30, %s37
      %s100 = sor.u32 %s98, %s99
      %p101 = scmp.eq.s32.totalorder %s100, 0
      %s103 = sadd.s32 %s102, 1
      %s104 = scalar_select %p101, %s102, %s103
      %p107 = pneg %p101
      %p108 = scmp.eq.s32.totalorder %s22, 1
      %p109 = por %p107, %p108
      %p110 = scmp.ne.s32.totalorder %s102, %s105
      %p111 = scmp.eq.s32.totalorder %s22, 0
      %p112 = por %p110, %p111
      %p113 = scmp.ne.s32.totalorder %s102, %s105
      %p114 = scmp.eq.s32.totalorder %s27, 1
      %p115 = por %p113, %p114
      %p116 = scmp.ne.s32.totalorder %s105, %s106
      %p117 = scmp.eq.s32.totalorder %s27, 0
      %p118 = por %p116, %p117
      %p119 = scmp.ne.s32.totalorder %s105, %s106
      %p120 = scmp.eq.s32.totalorder %s28, 1
      %p121 = por %p119, %p120
      %p123 = scmp.ne.s32.totalorder %s106, %s122
      %p124 = scmp.eq.s32.totalorder %s28, 0
      %p125 = por %p123, %p124
      %s126 = ssub.s32 %s29, %s41
      %s127 = ssub.s32 %s30, %s37
      %s128 = sor.u32 %s126, %s127
      %p129 = scmp.eq.s32.totalorder %s128, 0
      %s131 = sadd.s32 %s130, 1
      %s132 = scalar_select %p129, %s130, %s131
      %p135 = pneg %p129
      %p136 = scmp.eq.s32.totalorder %s22, 1
      %p137 = por %p135, %p136
      %p138 = scmp.ne.s32.totalorder %s130, %s133
      %p139 = scmp.eq.s32.totalorder %s22, 0
      %p140 = por %p138, %p139
      %p141 = scmp.ne.s32.totalorder %s130, %s133
      %p142 = scmp.eq.s32.totalorder %s27, 1
      %p143 = por %p141, %p142
      %p144 = scmp.ne.s32.totalorder %s133, %s134
      %p145 = scmp.eq.s32.totalorder %s27, 0
      %p146 = por %p144, %p145
      %p147 = scmp.ne.s32.totalorder %s133, %s134
      %p148 = scmp.eq.s32.totalorder %s28, 1
      %p149 = por %p147, %p148
      %p151 = scmp.ne.s32.totalorder %s134, %s150
      %p152 = scmp.eq.s32.totalorder %s28, 0
      %p153 = por %p151, %p152
      %s154 = smul.u32 %s30, 8
      %s155 = ssub.s32 %s154, 1
      %p156 = scmp.gt.s32.totalorder %s155, 0
      %s157 = scalar_select %p156, %s155, 0
      %s158 = smul.u32 %s37, 8
      %s159 = ssub.s32 %s158, 1
      %p160 = scmp.gt.s32.totalorder %s159, 0
      %s161 = scalar_select %p160, %s159, 0
      %s162 = ssub.s32 %s29, %s41
      %s163 = ssub.s32 %s157, %s161
      %s164 = sor.u32 %s162, %s163
      %p165 = scmp.eq.s32.totalorder %s164, 0
      %s167 = sadd.s32 %s166, 1
      %s168 = scalar_select %p165, %s166, %s167
      %p171 = pneg %p165
      %p172 = scmp.eq.s32.totalorder %s22, 1
      %p173 = por %p171, %p172
      %p174 = scmp.ne.s32.totalorder %s166, %s169
      %p175 = scmp.eq.s32.totalorder %s22, 0
      %p176 = por %p174, %p175
      %p177 = scmp.ne.s32.totalorder %s166, %s169
      %p178 = scmp.eq.s32.totalorder %s27, 1
      %p179 = por %p177, %p178
      %p180 = scmp.ne.s32.totalorder %s169, %s170
      %p181 = scmp.eq.s32.totalorder %s27, 0
      %p182 = por %p180, %p181
      %p183 = scmp.ne.s32.totalorder %s169, %s170
      %p184 = scmp.eq.s32.totalorder %s28, 1
      %p185 = por %p183, %p184
      %p187 = scmp.ne.s32.totalorder %s170, %s186
      %p188 = scmp.eq.s32.totalorder %s28, 0
      %p189 = por %p187, %p188
      %s190 = smul.u32 %s30, 8
      %s191 = ssub.s32 %s190, 1
      %p192 = scmp.gt.s32.totalorder %s191, 0
      %s193 = scalar_select %p192, %s191, 0
      %s194 = smul.u32 %s37, 8
      %s195 = ssub.s32 %s194, 1
      %p196 = scmp.gt.s32.totalorder %s195, 0
      %s197 = scalar_select %p196, %s195, 0
      %s198 = ssub.s32 %s29, %s41
      %s199 = ssub.s32 %s193, %s197
      %s200 = sor.u32 %s198, %s199
      %p201 = scmp.eq.s32.totalorder %s200, 0
      %s203 = sadd.s32 %s202, 1
      %s204 = scalar_select %p201, %s202, %s203
      %p207 = pneg %p201
      %p208 = scmp.eq.s32.totalorder %s22, 1
      %p209 = por %p207, %p208
      %p210 = scmp.ne.s32.totalorder %s202, %s205
      %p211 = scmp.eq.s32.totalorder %s22, 0
      %p212 = por %p210, %p211
      %p213 = scmp.ne.s32.totalorder %s202, %s205
      %p214 = scmp.eq.s32.totalorder %s27, 1
      %p215 = por %p213, %p214
      %p216 = scmp.ne.s32.totalorder %s205, %s206
      %p217 = scmp.eq.s32.totalorder %s27, 0
      %p218 = por %p216, %p217
      %p219 = scmp.ne.s32.totalorder %s205, %s206
      %p220 = scmp.eq.s32.totalorder %s28, 1
      %p221 = por %p219, %p220
      %p223 = scmp.ne.s32.totalorder %s206, %s222
      %p224 = scmp.eq.s32.totalorder %s28, 0
      %p225 = por %p223, %p224
      %s227 = sadd.s32 %s226, 1
      %p230 = scmp.eq.s32.totalorder %s22, 1
      %p231 = scmp.ne.s32.totalorder %s226, %s228
      %p232 = scmp.eq.s32.totalorder %s22, 0
      %p233 = por %p231, %p232
      %p234 = scmp.ne.s32.totalorder %s226, %s228
      %p235 = scmp.eq.s32.totalorder %s27, 1
      %p236 = por %p234, %p235
      %p237 = scmp.ne.s32.totalorder %s228, %s229
      %p238 = scmp.eq.s32.totalorder %s27, 0
      %p239 = por %p237, %p238
      %p240 = scmp.ne.s32.totalorder %s228, %s229
      %p241 = scmp.eq.s32.totalorder %s28, 1
      %p242 = por %p240, %p241
      %p244 = scmp.ne.s32.totalorder %s229, %s243
      %p245 = scmp.eq.s32.totalorder %s28, 0
      %p246 = por %p244, %p245
      %s248 = sadd.s32 %s247, 1
      %p251 = scmp.eq.s32.totalorder %s22, 1
      %p252 = scmp.ne.s32.totalorder %s247, %s249
      %p253 = scmp.eq.s32.totalorder %s22, 0
      %p254 = por %p252, %p253
      %p255 = scmp.ne.s32.totalorder %s247, %s249
      %p256 = scmp.eq.s32.totalorder %s27, 1
      %p257 = por %p255, %p256
      %p258 = scmp.ne.s32.totalorder %s249, %s250
      %p259 = scmp.eq.s32.totalorder %s27, 0
      %p260 = por %p258, %p259
      %p261 = scmp.ne.s32.totalorder %s249, %s250
      %p262 = scmp.eq.s32.totalorder %s28, 1
      %p263 = por %p261, %p262
      %p265 = scmp.ne.s32.totalorder %s250, %s264
      %p266 = scmp.eq.s32.totalorder %s28, 0
      %p267 = por %p265, %p266
      %s269 = sadd.s32 %s268, 1
      %p272 = scmp.eq.s32.totalorder %s22, 1
      %p273 = scmp.ne.s32.totalorder %s268, %s270
      %p274 = scmp.eq.s32.totalorder %s22, 0
      %p275 = por %p273, %p274
      %p276 = scmp.ne.s32.totalorder %s268, %s270
      %p277 = scmp.eq.s32.totalorder %s27, 1
      %p278 = por %p276, %p277
      %p279 = scmp.ne.s32.totalorder %s270, %s271
      %p280 = scmp.eq.s32.totalorder %s27, 0
      %p281 = por %p279, %p280
      %p282 = scmp.ne.s32.totalorder %s270, %s271
      %p283 = scmp.eq.s32.totalorder %s28, 1
      %p284 = por %p282, %p283
      %p286 = scmp.ne.s32.totalorder %s271, %s285
      %p287 = scmp.eq.s32.totalorder %s28, 0
      %p288 = por %p286, %p287
      %s290 = sadd.s32 %s289, 1
      %p293 = scmp.eq.s32.totalorder %s22, 1
      %p294 = scmp.ne.s32.totalorder %s289, %s291
      %p295 = scmp.eq.s32.totalorder %s22, 0
      %p296 = por %p294, %p295
      %p297 = scmp.ne.s32.totalorder %s289, %s291
      %p298 = scmp.eq.s32.totalorder %s27, 1
      %p299 = por %p297, %p298
      %p300 = scmp.ne.s32.totalorder %s291, %s292
      %p301 = scmp.eq.s32.totalorder %s27, 0
      %p302 = por %p300, %p301
      %p303 = scmp.ne.s32.totalorder %s291, %s292
      %p304 = scmp.eq.s32.totalorder %s28, 1
      %p305 = por %p303, %p304
      %p307 = scmp.ne.s32.totalorder %s292, %s306
      %p308 = scmp.eq.s32.totalorder %s28, 0
      %p309 = por %p307, %p308
      %s311 = sadd.s32 %s310, 1
      %p314 = scmp.eq.s32.totalorder %s22, 1
      %p315 = scmp.ne.s32.totalorder %s310, %s312
      %p316 = scmp.eq.s32.totalorder %s22, 0
      %p317 = por %p315, %p316
      %p318 = scmp.ne.s32.totalorder %s310, %s312
      %p319 = scmp.eq.s32.totalorder %s27, 1
      %p320 = por %p318, %p319
      %p321 = scmp.ne.s32.totalorder %s312, %s313
      %p322 = scmp.eq.s32.totalorder %s27, 0
      %p323 = por %p321, %p322
      %p324 = scmp.ne.s32.totalorder %s312, %s313
      %p325 = scmp.eq.s32.totalorder %s28, 1
      %p326 = por %p324, %p325
      %p328 = scmp.ne.s32.totalorder %s313, %s327
      %p329 = scmp.eq.s32.totalorder %s28, 0
      %p330 = por %p328, %p329
      %s332 = sadd.s32 %s331, 1
      %p335 = scmp.eq.s32.totalorder %s22, 1
      %p336 = scmp.ne.s32.totalorder %s331, %s333
      %p337 = scmp.eq.s32.totalorder %s22, 0
      %p338 = por %p336, %p337
      %p339 = scmp.ne.s32.totalorder %s331, %s333
      %p340 = scmp.eq.s32.totalorder %s27, 1
      %p341 = por %p339, %p340
      %p342 = scmp.ne.s32.totalorder %s333, %s334
      %p343 = scmp.eq.s32.totalorder %s27, 0
      %p344 = por %p342, %p343
      %p345 = scmp.ne.s32.totalorder %s333, %s334
      %p346 = scmp.eq.s32.totalorder %s28, 1
      %p347 = por %p345, %p346
      %p349 = scmp.ne.s32.totalorder %s334, %s348
      %p350 = scmp.eq.s32.totalorder %s28, 0
      %p351 = por %p349, %p350
      %s352 = ssub.s32 %s29, %s41
      %s353 = ssub.s32 %s30, %s37
      %s354 = sor.u32 %s352, %s353
      %p355 = scmp.eq.s32.totalorder %s354, 0
      %s357 = sadd.s32 %s356, 1
      %s358 = scalar_select %p355, %s356, %s357
      %p361 = pneg %p355
      %p362 = scmp.eq.s32.totalorder %s22, 1
      %p363 = por %p361, %p362
      %p364 = scmp.ne.s32.totalorder %s356, %s359
      %p365 = scmp.eq.s32.totalorder %s22, 0
      %p366 = por %p364, %p365
      %p367 = scmp.ne.s32.totalorder %s356, %s359
      %p368 = scmp.eq.s32.totalorder %s27, 1
      %p369 = por %p367, %p368
      %p370 = scmp.ne.s32.totalorder %s359, %s360
      %p371 = scmp.eq.s32.totalorder %s27, 0
      %p372 = por %p370, %p371
      %p373 = scmp.ne.s32.totalorder %s359, %s360
      %p374 = scmp.eq.s32.totalorder %s28, 1
      %p375 = por %p373, %p374
      %p377 = scmp.ne.s32.totalorder %s360, %s376
      %p378 = scmp.eq.s32.totalorder %s28, 0
      %p379 = por %p377, %p378
      %p380 = scmp.le.s32.totalorder 1, %s22
      %p381 = scmp.lt.s32.totalorder %s22, 3
      %p382 = pnand %p380, %p381
      %p383 = pneg %p382
      // Predicated region
      $region9: #{encoder_bottleneck_nchw.1} parent=5 // pred_check
        _
      $region10: #{encoder_bottleneck_nchw.1} parent=5 // pred_check_branch
        %385 = sbr.rel (%p382) target = $region12
      $region11: #{encoder_bottleneck_nchw.1} parent=5 // pred_region
        %s386 = ssub.s32 %s22, 1
        // Predicated region
        $region13: #{encoder_bottleneck_nchw.1} parent=11 // pred_check
          %p387 = pneg %p239
        $region14: #{encoder_bottleneck_nchw.1} parent=11 // pred_check_branch
          %389 = sbr.rel (%p387) target = $region16
        $region15: #{encoder_bottleneck_nchw.1} parent=11 // pred_region
          %s391 = ssub.s32 1024, 1024
          %392 = vsyncadd [#allocation3], %s391
          %s393 = sshll.u32 [#allocation2], 4
          %s394 = int_to_ptr.vmem [resolvable:$true] %s393
          %399 = dma.hbm_to_vmem [thread:$0]  %s6, 1024, %s394, [#allocation3], 128, 128, 8
        $region16: #{encoder_bottleneck_nchw.1} parent=11 // pred_fallthru
          _
        // Predicated region
        $region17: #{encoder_bottleneck_nchw.1} parent=11 // pred_check
          %p400 = pneg %p260
        $region18: #{encoder_bottleneck_nchw.1} parent=11 // pred_check_branch
          %402 = sbr.rel (%p400) target = $region20
        $region19: #{encoder_bottleneck_nchw.1} parent=11 // pred_region
          %s404 = ssub.s32 32, 32
          %405 = vsyncadd [#allocation5], %s404
          %s407 = sshll.u32 [#allocation4], 4
          %s408 = int_to_ptr.vmem [resolvable:$true] %s407
          %410 = dma.hbm_to_vmem [thread:$0]  %s7, 32, %s408, [#allocation5]
        $region20: #{encoder_bottleneck_nchw.1} parent=11 // pred_fallthru
          _
        // Predicated region
        $region21: #{encoder_bottleneck_nchw.1} parent=11 // pred_check
          %p411 = pneg %p281
        $region22: #{encoder_bottleneck_nchw.1} parent=11 // pred_check_branch
          %413 = sbr.rel (%p411) target = $region24
        $region23: #{encoder_bottleneck_nchw.1} parent=11 // pred_region
          %s415 = ssub.s32 36864, 36864
          %416 = vsyncadd [#allocation5], %s415
          %s417 = sshll.u32 [#allocation6], 4
          %s418 = int_to_ptr.vmem [resolvable:$true] %s417
          %423 = dma.hbm_to_vmem [thread:$0]  %s8, 36864, %s418, [#allocation5], 128, 128, 8
        $region24: #{encoder_bottleneck_nchw.1} parent=11 // pred_fallthru
          _
        // Predicated region
        $region25: #{encoder_bottleneck_nchw.1} parent=11 // pred_check
          %p424 = pneg %p302
        $region26: #{encoder_bottleneck_nchw.1} parent=11 // pred_check_branch
          %426 = sbr.rel (%p424) target = $region28
        $region27: #{encoder_bottleneck_nchw.1} parent=11 // pred_region
          %s428 = ssub.s32 32, 32
          %429 = vsyncadd [#allocation8], %s428
          %s431 = sshll.u32 [#allocation7], 4
          %s432 = int_to_ptr.vmem [resolvable:$true] %s431
          %434 = dma.hbm_to_vmem [thread:$0]  %s9, 32, %s432, [#allocation8]
        $region28: #{encoder_bottleneck_nchw.1} parent=11 // pred_fallthru
          _
        // Predicated region
        $region29: #{encoder_bottleneck_nchw.1} parent=11 // pred_check
          %p435 = pneg %p323
        $region30: #{encoder_bottleneck_nchw.1} parent=11 // pred_check_branch
          %437 = sbr.rel (%p435) target = $region32
        $region31: #{encoder_bottleneck_nchw.1} parent=11 // pred_region
          %s439 = ssub.s32 5120, 5120
          %440 = vsyncadd [#allocation8], %s439
          %s441 = sshll.u32 [#allocation9], 4
          %s442 = int_to_ptr.vmem [resolvable:$true] %s441
          %447 = dma.hbm_to_vmem [thread:$0]  %s10, 5120, %s442, [#allocation8], 128, 128, 8
        $region32: #{encoder_bottleneck_nchw.1} parent=11 // pred_fallthru
          _
        // Predicated region
        $region33: #{encoder_bottleneck_nchw.1} parent=11 // pred_check
          %p448 = pneg %p344
        $region34: #{encoder_bottleneck_nchw.1} parent=11 // pred_check_branch
          %450 = sbr.rel (%p448) target = $region36
        $region35: #{encoder_bottleneck_nchw.1} parent=11 // pred_region
          %s452 = ssub.s32 32, 32
          %453 = vsyncadd [#allocation11], %s452
          %s455 = sshll.u32 [#allocation10], 4
          %s456 = int_to_ptr.vmem [resolvable:$true] %s455
          %458 = dma.hbm_to_vmem [thread:$0]  %s11, 32, %s456, [#allocation11]
        $region36: #{encoder_bottleneck_nchw.1} parent=11 // pred_fallthru
          _
      $region12: #{encoder_bottleneck_nchw.1} parent=5 // pred_fallthru
        _
      %p459 = scmp.lt.s32.totalorder %s22, 2
      // Predicated region
      $region37: #{encoder_bottleneck_nchw.1} parent=5 // pred_check
        %p460 = pneg %p459
      $region38: #{encoder_bottleneck_nchw.1} parent=5 // pred_check_branch
        %462 = sbr.rel (%p460) target = $region40
      $region39: #{encoder_bottleneck_nchw.1} parent=5 // pred_region
        // Predicated region
        $region41: #{encoder_bottleneck_nchw.1} parent=39 // pred_check
          %p463 = pneg %p56
        $region42: #{encoder_bottleneck_nchw.1} parent=39 // pred_check_branch
          %465 = sbr.rel (%p463) target = $region44
        $region43: #{encoder_bottleneck_nchw.1} parent=39 // pred_region
          %s466 = smul.u32 8, %s30
          %p467 = scmp.lt.s32.totalorder %s29, 1
          %s468 = scalar_select %p467, %s29, 1
          %p469 = scmp.lt.s32.totalorder %s466, 7
          %s470 = scalar_select %p469, %s466, 7
          %s471 = smul.addr %s468, 8
          %s472 = sadd.s32 %s470, %s471
          %s473 = smul.addr %s472, 4
          %s474 = scalar_lea.vmem %s0, %s473
          %s475 = smul.u32 8, %s30
        $region44: #{encoder_bottleneck_nchw.1} parent=39 // pred_fallthru
          _
        // Predicated region
        $region45: #{encoder_bottleneck_nchw.1} parent=39 // pred_check
          %p476 = pneg %p84
        $region46: #{encoder_bottleneck_nchw.1} parent=39 // pred_check_branch
          %478 = sbr.rel (%p476) target = $region48
        $region47: #{encoder_bottleneck_nchw.1} parent=39 // pred_region
          %s479 = smul.u32 8, %s30
          %p480 = scmp.lt.s32.totalorder %s29, 1
          %s481 = scalar_select %p480, %s29, 1
          %p482 = scmp.lt.s32.totalorder %s479, 7
          %s483 = scalar_select %p482, %s479, 7
          %s484 = smul.addr %s481, 8
          %s485 = sadd.s32 %s483, %s484
          %s486 = smul.addr %s485, 4
          %s487 = scalar_lea.vmem %s1, %s486
          %s488 = smul.u32 8, %s30
        $region48: #{encoder_bottleneck_nchw.1} parent=39 // pred_fallthru
          _
        // Predicated region
        $region49: #{encoder_bottleneck_nchw.1} parent=39 // pred_check
          %p489 = pneg %p112
        $region50: #{encoder_bottleneck_nchw.1} parent=39 // pred_check_branch
          %491 = sbr.rel (%p489) target = $region52
        $region51: #{encoder_bottleneck_nchw.1} parent=39 // pred_region
          %s492 = smul.u32 8, %s30
          %p493 = scmp.lt.s32.totalorder %s29, 1
          %s494 = scalar_select %p493, %s29, 1
          %p495 = scmp.lt.s32.totalorder %s492, 7
          %s496 = scalar_select %p495, %s492, 7
          %s497 = smul.addr %s494, 8
          %s498 = sadd.s32 %s496, %s497
          %s499 = smul.addr %s498, 4
          %s500 = scalar_lea.vmem %s2, %s499
          %s501 = smul.u32 8, %s30
        $region52: #{encoder_bottleneck_nchw.1} parent=39 // pred_fallthru
          _
        // Predicated region
        $region53: #{encoder_bottleneck_nchw.1} parent=39 // pred_check
          %p502 = pneg %p140
        $region54: #{encoder_bottleneck_nchw.1} parent=39 // pred_check_branch
          %504 = sbr.rel (%p502) target = $region56
        $region55: #{encoder_bottleneck_nchw.1} parent=39 // pred_region
          %s505 = smul.u32 8, %s30
          %p506 = scmp.lt.s32.totalorder %s29, 1
          %s507 = scalar_select %p506, %s29, 1
          %p508 = scmp.lt.s32.totalorder %s505, 7
          %s509 = scalar_select %p508, %s505, 7
          %s510 = smul.addr %s507, 8
          %s511 = sadd.s32 %s509, %s510
          %s512 = smul.addr %s511, 4
          %s513 = scalar_lea.vmem %s3, %s512
          %s514 = smul.u32 8, %s30
        $region56: #{encoder_bottleneck_nchw.1} parent=39 // pred_fallthru
          _
        // Predicated region
        $region57: #{encoder_bottleneck_nchw.1} parent=39 // pred_check
          %p515 = pneg %p176
        $region58: #{encoder_bottleneck_nchw.1} parent=39 // pred_check_branch
          %517 = sbr.rel (%p515) target = $region60
        $region59: #{encoder_bottleneck_nchw.1} parent=39 // pred_region
          %s518 = smul.u32 %s30, 8
          %s519 = ssub.s32 %s518, 1
          %p520 = scmp.gt.s32.totalorder %s519, 0
          %s521 = scalar_select %p520, %s519, 0
          %p522 = scmp.lt.s32.totalorder %s29, 1
          %s523 = scalar_select %p522, %s29, 1
          %p524 = scmp.lt.s32.totalorder %s521, 7
          %s525 = scalar_select %p524, %s521, 7
          %s526 = smul.addr %s523, 8
          %s527 = sadd.s32 %s525, %s526
          %s528 = smul.addr %s527, 4
          %s529 = scalar_lea.vmem %s4, %s528
          %s530 = smul.u32 %s30, 8
          %s531 = ssub.s32 %s530, 1
          %p532 = scmp.gt.s32.totalorder %s531, 0
          %s533 = scalar_select %p532, %s531, 0
        $region60: #{encoder_bottleneck_nchw.1} parent=39 // pred_fallthru
          _
        // Predicated region
        $region61: #{encoder_bottleneck_nchw.1} parent=39 // pred_check
          %p534 = pneg %p212
        $region62: #{encoder_bottleneck_nchw.1} parent=39 // pred_check_branch
          %536 = sbr.rel (%p534) target = $region64
        $region63: #{encoder_bottleneck_nchw.1} parent=39 // pred_region
          %s537 = smul.u32 %s30, 8
          %s538 = ssub.s32 %s537, 1
          %p539 = scmp.gt.s32.totalorder %s538, 0
          %s540 = scalar_select %p539, %s538, 0
          %p541 = scmp.lt.s32.totalorder %s29, 1
          %s542 = scalar_select %p541, %s29, 1
          %p543 = scmp.lt.s32.totalorder %s540, 7
          %s544 = scalar_select %p543, %s540, 7
          %s545 = smul.addr %s542, 8
          %s546 = sadd.s32 %s544, %s545
          %s547 = smul.addr %s546, 4
          %s548 = scalar_lea.vmem %s5, %s547
          %s549 = smul.u32 %s30, 8
          %s550 = ssub.s32 %s549, 1
          %p551 = scmp.gt.s32.totalorder %s550, 0
          %s552 = scalar_select %p551, %s550, 0
        $region64: #{encoder_bottleneck_nchw.1} parent=39 // pred_fallthru
          _
      $region40: #{encoder_bottleneck_nchw.1} parent=5 // pred_fallthru
        _
      %p553 = scmp.le.s32.totalorder 1, %s22
      %p554 = scmp.lt.s32.totalorder %s22, 3
      %p555 = pnand %p553, %p554
      %p556 = pneg %p555
      // Predicated region
      $region65: #{encoder_bottleneck_nchw.1} parent=5 // pred_check
        _
      $region66: #{encoder_bottleneck_nchw.1} parent=5 // pred_check_branch
        %558 = sbr.rel (%p555) target = $region68
      $region67: #{encoder_bottleneck_nchw.1} parent=5 // pred_region
        %s559 = ssub.s32 %s22, 1
        // Predicated region
        $region69: #{encoder_bottleneck_nchw.1} parent=67 // pred_check
          %p560 = pneg %p239
        $region70: #{encoder_bottleneck_nchw.1} parent=67 // pred_check_branch
          %562 = sbr.rel (%p560) target = $region72
        $region71: #{encoder_bottleneck_nchw.1} parent=67 // pred_region
          %563 = dma.done [#allocation3], 1024
        $region72: #{encoder_bottleneck_nchw.1} parent=67 // pred_fallthru
          _
        // Predicated region
        $region73: #{encoder_bottleneck_nchw.1} parent=67 // pred_check
          %p564 = pneg %p260
        $region74: #{encoder_bottleneck_nchw.1} parent=67 // pred_check_branch
          %566 = sbr.rel (%p564) target = $region76
        $region75: #{encoder_bottleneck_nchw.1} parent=67 // pred_region
          %567 = dma.done [#allocation5], 32
        $region76: #{encoder_bottleneck_nchw.1} parent=67 // pred_fallthru
          _
        // Predicated region
        $region77: #{encoder_bottleneck_nchw.1} parent=67 // pred_check
          %p568 = pneg %p281
        $region78: #{encoder_bottleneck_nchw.1} parent=67 // pred_check_branch
          %570 = sbr.rel (%p568) target = $region80
        $region79: #{encoder_bottleneck_nchw.1} parent=67 // pred_region
          %571 = dma.done [#allocation5], 36864
        $region80: #{encoder_bottleneck_nchw.1} parent=67 // pred_fallthru
          _
        // Predicated region
        $region81: #{encoder_bottleneck_nchw.1} parent=67 // pred_check
          %p572 = pneg %p302
        $region82: #{encoder_bottleneck_nchw.1} parent=67 // pred_check_branch
          %574 = sbr.rel (%p572) target = $region84
        $region83: #{encoder_bottleneck_nchw.1} parent=67 // pred_region
          %575 = dma.done [#allocation8], 32
        $region84: #{encoder_bottleneck_nchw.1} parent=67 // pred_fallthru
          _
        // Predicated region
        $region85: #{encoder_bottleneck_nchw.1} parent=67 // pred_check
          %p576 = pneg %p323
        $region86: #{encoder_bottleneck_nchw.1} parent=67 // pred_check_branch
          %578 = sbr.rel (%p576) target = $region88
        $region87: #{encoder_bottleneck_nchw.1} parent=67 // pred_region
          %579 = dma.done [#allocation8], 5120
        $region88: #{encoder_bottleneck_nchw.1} parent=67 // pred_fallthru
          _
        // Predicated region
        $region89: #{encoder_bottleneck_nchw.1} parent=67 // pred_check
          %p580 = pneg %p344
        $region90: #{encoder_bottleneck_nchw.1} parent=67 // pred_check_branch
          %582 = sbr.rel (%p580) target = $region92
        $region91: #{encoder_bottleneck_nchw.1} parent=67 // pred_region
          %583 = dma.done [#allocation11], 32
        $region92: #{encoder_bottleneck_nchw.1} parent=67 // pred_fallthru
          _
        %s584 = smul.u32 8, %s32
        %p585 = scmp.lt.s32.totalorder %s31, 1
        %s586 = scalar_select %p585, %s31, 1
        %p587 = scmp.lt.s32.totalorder %s584, 7
        %s588 = scalar_select %p587, %s584, 7
        %s589 = smul.addr %s586, 8
        %s590 = sadd.s32 %s588, %s589
        %s591 = smul.addr %s590, 4
        %s592 = scalar_lea.vmem %s0, %s591
        %p593 = pneg %p62
        %p594 = pneg %p59
        %s595 = smul.u32 8, %s32
        %p596 = scmp.lt.s32.totalorder %s31, 1
        %s597 = scalar_select %p596, %s31, 1
        %p598 = scmp.lt.s32.totalorder %s595, 7
        %s599 = scalar_select %p598, %s595, 7
        %s600 = smul.addr %s597, 8
        %s601 = sadd.s32 %s599, %s600
        %s602 = smul.addr %s601, 4
        %s603 = scalar_lea.vmem %s1, %s602
        %p604 = pneg %p90
        %p605 = pneg %p87
        %s606 = smul.u32 8, %s32
        %p607 = scmp.lt.s32.totalorder %s31, 1
        %s608 = scalar_select %p607, %s31, 1
        %p609 = scmp.lt.s32.totalorder %s606, 7
        %s610 = scalar_select %p609, %s606, 7
        %s611 = smul.addr %s608, 8
        %s612 = sadd.s32 %s610, %s611
        %s613 = smul.addr %s612, 4
        %s614 = scalar_lea.vmem %s2, %s613
        %p615 = pneg %p118
        %p616 = pneg %p115
        %s617 = smul.u32 8, %s32
        %p618 = scmp.lt.s32.totalorder %s31, 1
        %s619 = scalar_select %p618, %s31, 1
        %p620 = scmp.lt.s32.totalorder %s617, 7
        %s621 = scalar_select %p620, %s617, 7
        %s622 = smul.addr %s619, 8
        %s623 = sadd.s32 %s621, %s622
        %s624 = smul.addr %s623, 4
        %s625 = scalar_lea.vmem %s3, %s624
        %p626 = pneg %p146
        %p627 = pneg %p143
        %s628 = smul.u32 %s32, 8
        %s629 = ssub.s32 %s628, 1
        %p630 = scmp.gt.s32.totalorder %s629, 0
        %s631 = scalar_select %p630, %s629, 0
        %p632 = scmp.lt.s32.totalorder %s31, 1
        %s633 = scalar_select %p632, %s31, 1
        %p634 = scmp.lt.s32.totalorder %s631, 7
        %s635 = scalar_select %p634, %s631, 7
        %s636 = smul.addr %s633, 8
        %s637 = sadd.s32 %s635, %s636
        %s638 = smul.addr %s637, 4
        %s639 = scalar_lea.vmem %s4, %s638
        %p640 = pneg %p182
        %p641 = pneg %p179
        %s642 = smul.u32 %s32, 8
        %s643 = ssub.s32 %s642, 1
        %p644 = scmp.gt.s32.totalorder %s643, 0
        %s645 = scalar_select %p644, %s643, 0
        %p646 = scmp.lt.s32.totalorder %s31, 1
        %s647 = scalar_select %p646, %s31, 1
        %p648 = scmp.lt.s32.totalorder %s645, 7
        %s649 = scalar_select %p648, %s645, 7
        %s650 = smul.addr %s647, 8
        %s651 = sadd.s32 %s649, %s650
        %s652 = smul.addr %s651, 4
        %s653 = scalar_lea.vmem %s5, %s652
        %p654 = pneg %p218
        %p655 = pneg %p215
        %p656 = pneg %p239
        %p657 = pneg %p236
        %p658 = pneg %p260
        %p659 = pneg %p257
        %p660 = pneg %p281
        %p661 = pneg %p278
        %p662 = pneg %p302
        %p663 = pneg %p299
        %p664 = pneg %p323
        %p665 = pneg %p320
        %p666 = pneg %p344
        %p667 = pneg %p341
        %p668 = pneg %p372
        %p669 = pneg %p369
        %s670 = smul.u32 8, %s32
        %p671 = scmp.lt.s32.totalorder %s31, 1
        %s672 = scalar_select %p671, %s31, 1
        %p673 = scmp.lt.s32.totalorder %s670, 7
        %s674 = scalar_select %p673, %s670, 7
        %s675 = smul.addr %s674, 2
        %s676 = smul.addr %s672, 16
        %s677 = sadd.s32 %s675, %s676
        %s678 = smul.addr %s677, 4
        %s679 = scalar_lea.vmem %s12, %s678
        %s680 = smul.u32 8, %s32
        %p681 = scmp.lt.s32.totalorder %s31, 1
        %s682 = scalar_select %p681, %s31, 1
        %p683 = scmp.lt.s32.totalorder %s680, 7
        %s684 = scalar_select %p683, %s680, 7
        %s685 = smul.addr %s682, 8
        %s686 = sadd.s32 %s684, %s685
        %s687 = smul.addr %s686, 4
        %s688 = scalar_lea.vmem %s0, %s687
        %s689 = smul.u32 8, %s32
        %s690 = smul.u32 8, %s32
        %p691 = scmp.lt.s32.totalorder %s31, 1
        %s692 = scalar_select %p691, %s31, 1
        %p693 = scmp.lt.s32.totalorder %s690, 7
        %s694 = scalar_select %p693, %s690, 7
        %s695 = smul.addr %s692, 8
        %s696 = sadd.s32 %s694, %s695
        %s697 = smul.addr %s696, 4
        %s698 = scalar_lea.vmem %s1, %s697
        %s699 = smul.u32 8, %s32
        %s700 = smul.u32 8, %s32
        %p701 = scmp.lt.s32.totalorder %s31, 1
        %s702 = scalar_select %p701, %s31, 1
        %p703 = scmp.lt.s32.totalorder %s700, 7
        %s704 = scalar_select %p703, %s700, 7
        %s705 = smul.addr %s702, 8
        %s706 = sadd.s32 %s704, %s705
        %s707 = smul.addr %s706, 4
        %s708 = scalar_lea.vmem %s2, %s707
        %s709 = smul.u32 8, %s32
        %s710 = smul.u32 8, %s32
        %p711 = scmp.lt.s32.totalorder %s31, 1
        %s712 = scalar_select %p711, %s31, 1
        %p713 = scmp.lt.s32.totalorder %s710, 7
        %s714 = scalar_select %p713, %s710, 7
        %s715 = smul.addr %s712, 8
        %s716 = sadd.s32 %s714, %s715
        %s717 = smul.addr %s716, 4
        %s718 = scalar_lea.vmem %s3, %s717
        %s719 = smul.u32 8, %s32
        %s720 = smul.u32 %s32, 8
        %s721 = ssub.s32 %s720, 1
        %p722 = scmp.gt.s32.totalorder %s721, 0
        %s723 = scalar_select %p722, %s721, 0
        %p724 = scmp.lt.s32.totalorder %s31, 1
        %s725 = scalar_select %p724, %s31, 1
        %p726 = scmp.lt.s32.totalorder %s723, 7
        %s727 = scalar_select %p726, %s723, 7
        %s728 = smul.addr %s725, 8
        %s729 = sadd.s32 %s727, %s728
        %s730 = smul.addr %s729, 4
        %s731 = scalar_lea.vmem %s4, %s730
        %s732 = smul.u32 %s32, 8
        %s733 = ssub.s32 %s732, 1
        %p734 = scmp.gt.s32.totalorder %s733, 0
        %s735 = scalar_select %p734, %s733, 0
        %s736 = smul.u32 %s32, 8
        %s737 = ssub.s32 %s736, 1
        %p738 = scmp.gt.s32.totalorder %s737, 0
        %s739 = scalar_select %p738, %s737, 0
        %p740 = scmp.lt.s32.totalorder %s31, 1
        %s741 = scalar_select %p740, %s31, 1
        %p742 = scmp.lt.s32.totalorder %s739, 7
        %s743 = scalar_select %p742, %s739, 7
        %s744 = smul.addr %s741, 8
        %s745 = sadd.s32 %s743, %s744
        %s746 = smul.addr %s745, 4
        %s747 = scalar_lea.vmem %s5, %s746
        %s748 = smul.u32 %s32, 8
        %s749 = ssub.s32 %s748, 1
        %p750 = scmp.gt.s32.totalorder %s749, 0
        %s751 = scalar_select %p750, %s749, 0
        %s752 = smul.u32 8, %s32
        %p753 = scmp.lt.s32.totalorder %s31, 1
        %s754 = scalar_select %p753, %s31, 1
        %p755 = scmp.lt.s32.totalorder %s752, 7
        %s756 = scalar_select %p755, %s752, 7
        %s757 = smul.addr %s756, 2
        %s758 = smul.addr %s754, 16
        %s759 = sadd.s32 %s757, %s758
        %s760 = smul.addr %s759, 4
        %s761 = scalar_lea.vmem %s12, %s760
        %s762 = smul.u32 8, %s32
        %v764 = vld [vmem:[#allocation2] sm:$0xff]
        %v765 = vld [vmem:[#allocation2 + $0x8] sm:$0xff]
        %v766 = vld [vmem:[#allocation2 + $0x10] sm:$0xff]
        %v767 = vld [vmem:[#allocation2 + $0x18] sm:$0xff]
        %v768 = vld [vmem:[#allocation2 + $0x20] sm:$0xff]
        %v769 = vld [vmem:[#allocation2 + $0x28] sm:$0xff]
        %v770 = vld [vmem:[#allocation2 + $0x30] sm:$0xff]
        %v771 = vld [vmem:[#allocation2 + $0x38] sm:$0xff]
        %v772 = vld [vmem:[#allocation4] sm:$0x3]
        %v773 = vld [vmem:[%s688] sm:$0xf]
        %v774 = vld [vmem:[%s688 + $0x4] sm:$0xf]
        %v775 = vld [vmem:[%s688 + $0x8] sm:$0xf]
        %v776 = vld [vmem:[%s688 + $0xc] sm:$0xf]
        %v777 = vld [vmem:[%s688 + $0x10] sm:$0xf]
        %v778 = vld [vmem:[%s688 + $0x14] sm:$0xf]
        %v779 = vld [vmem:[%s688 + $0x18] sm:$0xf]
        %v780 = vld [vmem:[%s688 + $0x1c] sm:$0xf]
        %v782 = vlaneseq
        %v783 = vshrl.u32 %v782, 7
        %v784 = vsub.s32 0, %v783
        %v785 = vrot.slane %v772, %v784
        %v786 = vlaneseq
        %v787 = vshrl.u32 %v786, 7
        %v788 = vsub.s32 1, %v787
        %v789 = vrot.slane %v772, %v788
        %v800 = vunpack.c.l.b16 %v773
        %v801 = vunpack.c.l.b16 %v774
        %v802 = vunpack.c.l.b16 %v775
        %v803 = vunpack.c.l.b16 %v776
        %v804 = vunpack.c.l.b16 %v777
        %v805 = vunpack.c.l.b16 %v778
        %v806 = vunpack.c.l.b16 %v779
        %v807 = vunpack.c.l.b16 %v780
        %v808 = vpack.c.b16 %v801, %v800
        %v809 = vpack.c.b16 %v803, %v802
        %v810 = vpack.c.b16 %v805, %v804
        %v811 = vpack.c.b16 %v807, %v806
        %v820 = vunpack.c.l.b16 %v764
        %v821 = vunpack.c.h.b16 %v764
        %v822 = vunpack.c.l.b16 %v765
        %v823 = vunpack.c.h.b16 %v765
        %v824 = vunpack.c.l.b16 %v766
        %v825 = vunpack.c.h.b16 %v766
        %v826 = vunpack.c.l.b16 %v767
        %v827 = vunpack.c.h.b16 %v767
        %v828 = vunpack.c.l.b16 %v768
        %v829 = vunpack.c.h.b16 %v768
        %v830 = vunpack.c.l.b16 %v769
        %v831 = vunpack.c.h.b16 %v769
        %v832 = vunpack.c.l.b16 %v770
        %v833 = vunpack.c.h.b16 %v770
        %v834 = vunpack.c.l.b16 %v771
        %v835 = vunpack.c.h.b16 %v771
        %v836 = vpack.c.b16 %v822, %v820
        %v837 = vpack.c.b16 %v823, %v821
        %v838 = vpack.c.b16 %v826, %v824
        %v839 = vpack.c.b16 %v827, %v825
        %v840 = vpack.c.b16 %v830, %v828
        %v841 = vpack.c.b16 %v831, %v829
        %v842 = vpack.c.b16 %v834, %v832
        %v843 = vpack.c.b16 %v835, %v833
        %vm852 = vcmask 523264
        %v854 = vsel %vm852, %v808, 0
        %v857 = vsel %vm852, %v809, 0
        %v860 = vsel %vm852, %v810, 0
        %v863 = vsel %vm852, %v811, 0
        %865 = vmatprep.subr.bf16.mxu0 0
        %866 = vmatpush1.bf16.msra.mxu0 0
        %867 = vmatprep.subr.bf16.mxu0 0
        %868 = vmatpush1.bf16.msra.mxu0 0
        %869 = vmatprep.subr.bf16.mxu0 0
        %870 = vmatpush1.bf16.msra.mxu0 0
        %871 = vmatprep.subr.bf16.mxu0 0
        %872 = vmatpush1.bf16.msra.mxu0 0
        %873 = vmatprep.subr.bf16.mxu0 %v843
        %874 = vmatpush1.bf16.msra.mxu0 %v842
        %875 = vmatprep.subr.bf16.mxu0 %v841
        %876 = vmatpush1.bf16.msra.mxu0 %v840
        %877 = vmatprep.subr.bf16.mxu0 %v839
        %878 = vmatpush1.bf16.msra.mxu0 %v838
        %879 = vmatprep.subr.bf16.mxu0 %v837
        %880 = vmatpush1.bf16.msra.mxu0 %v836
        %881 = vmatprep.subr.bf16.mxu0 0
        %882 = vmatpush2.bf16.msra.mxu0 0
        %883 = vmatprep.subr.bf16.mxu0 0
        %884 = vmatpush2.bf16.msra.mxu0 0
        %885 = vmatprep.subr.bf16.mxu0 0
        %886 = vmatpush2.bf16.msra.mxu0 0
        %887 = vmatprep.subr.bf16.mxu0 0
        %888 = vmatpush2.bf16.msra.mxu0 0
        %889 = vmatprep.subr.bf16.mxu0 0
        %890 = vmatpush2.bf16.msra.mxu0 0
        %891 = vmatprep.subr.bf16.mxu0 0
        %892 = vmatpush2.bf16.msra.mxu0 0
        %893 = vmatprep.subr.bf16.mxu0 0
        %894 = vmatpush2.bf16.msra.mxu0 0
        %895 = vmatprep.subr.bf16.mxu0 0
        %896 = vmatpush2.bf16.msra.mxu0 0
        %897 = vmatprep.mubr.bf16.mxu0 0
        %898 = vmatmul.mubr.bf16.gmra.mxu0 %v854
        %v899 = vpop.f32.mrf.mxu0
        %v900 = vadd.f32 %v785, %v899
        %v901 = vpop.f32.mrf.mxu0
        %v902 = vadd.f32 %v789, %v901
        %v903 = vpop.f32.mrf.mxu0
        %v904 = vadd.f32 %v785, %v903
        %v905 = vpop.f32.mrf.mxu0
        %v906 = vadd.f32 %v789, %v905
        %907 = vmatprep.mubr.bf16.mxu0 0
        %908 = vmatmul.mubr.bf16.gmra.mxu0 %v857
        %v909 = vpop.f32.mrf.mxu0
        %v910 = vadd.f32 %v785, %v909
        %v911 = vpop.f32.mrf.mxu0
        %v912 = vadd.f32 %v789, %v911
        %v913 = vpop.f32.mrf.mxu0
        %v914 = vadd.f32 %v785, %v913
        %v915 = vpop.f32.mrf.mxu0
        %v916 = vadd.f32 %v789, %v915
        %917 = vmatprep.mubr.bf16.mxu0 0
        %918 = vmatmul.mubr.bf16.gmra.mxu0 %v860
        %v919 = vpop.f32.mrf.mxu0
        %v920 = vadd.f32 %v785, %v919
        %v921 = vpop.f32.mrf.mxu0
        %v922 = vadd.f32 %v789, %v921
        %v923 = vpop.f32.mrf.mxu0
        %v924 = vadd.f32 %v785, %v923
        %v925 = vpop.f32.mrf.mxu0
        %v926 = vadd.f32 %v789, %v925
        %927 = vmatprep.mubr.bf16.mxu0 0
        %928 = vmatmul.mubr.bf16.gmra.mxu0 %v863
        %v929 = vpop.f32.mrf.mxu0
        %v930 = vadd.f32 %v785, %v929
        %v931 = vpop.f32.mrf.mxu0
        %v932 = vadd.f32 %v789, %v931
        %v933 = vpop.f32.mrf.mxu0
        %v934 = vadd.f32 %v785, %v933
        %v935 = vpop.f32.mrf.mxu0
        %v936 = vadd.f32 %v789, %v935
        %937 = vdwg.mxu0
        %v938 = vmax.f32 %v900, 0.0
        %v939 = vmax.f32 %v902, 0.0
        %v940 = vmax.f32 %v904, 0.0
        %v941 = vmax.f32 %v906, 0.0
        %v942 = vmax.f32 %v910, 0.0
        %v943 = vmax.f32 %v912, 0.0
        %v944 = vmax.f32 %v914, 0.0
        %v945 = vmax.f32 %v916, 0.0
        %v946 = vmax.f32 %v920, 0.0
        %v947 = vmax.f32 %v922, 0.0
        %v948 = vmax.f32 %v924, 0.0
        %v949 = vmax.f32 %v926, 0.0
        %v950 = vmax.f32 %v930, 0.0
        %v951 = vmax.f32 %v932, 0.0
        %v952 = vmax.f32 %v934, 0.0
        %v953 = vmax.f32 %v936, 0.0
        %v954 = vpack.c.bf16 %v940, %v938
        %v955 = vpack.c.bf16 %v941, %v939
        %v956 = vpack.c.bf16 %v944, %v942
        %v957 = vpack.c.bf16 %v945, %v943
        %v958 = vpack.c.bf16 %v948, %v946
        %v959 = vpack.c.bf16 %v949, %v947
        %v960 = vpack.c.bf16 %v952, %v950
        %v961 = vpack.c.bf16 %v953, %v951
        %v962 = vld [vmem:[%s698] sm:$0xf]
        %v963 = vld [vmem:[%s698 + $0x4] sm:$0xf]
        %v964 = vld [vmem:[%s698 + $0x8] sm:$0xf]
        %v965 = vld [vmem:[%s698 + $0xc] sm:$0xf]
        %v966 = vld [vmem:[%s698 + $0x10] sm:$0xf]
        %v967 = vld [vmem:[%s698 + $0x14] sm:$0xf]
        %v968 = vld [vmem:[%s698 + $0x18] sm:$0xf]
        %v969 = vld [vmem:[%s698 + $0x1c] sm:$0xf]
        %v978 = vunpack.c.l.b16 %v962
        %v979 = vunpack.c.l.b16 %v963
        %v980 = vunpack.c.l.b16 %v964
        %v981 = vunpack.c.l.b16 %v965
        %v982 = vunpack.c.l.b16 %v966
        %v983 = vunpack.c.l.b16 %v967
        %v984 = vunpack.c.l.b16 %v968
        %v985 = vunpack.c.l.b16 %v969
        %v986 = vpack.c.b16 %v979, %v978
        %v987 = vpack.c.b16 %v981, %v980
        %v988 = vpack.c.b16 %v983, %v982
        %v989 = vpack.c.b16 %v985, %v984
        %v991 = vsel %vm852, %v986, 0
        %v994 = vsel %vm852, %v987, 0
        %v997 = vsel %vm852, %v988, 0
        %v1000 = vsel %vm852, %v989, 0
        %1002 = vmatprep.subr.bf16.mxu0 0
        %1003 = vmatpush1.bf16.msra.mxu0 0
        %1004 = vmatprep.subr.bf16.mxu0 0
        %1005 = vmatpush1.bf16.msra.mxu0 0
        %1006 = vmatprep.subr.bf16.mxu0 0
        %1007 = vmatpush1.bf16.msra.mxu0 0
        %1008 = vmatprep.subr.bf16.mxu0 0
        %1009 = vmatpush1.bf16.msra.mxu0 0
        %1010 = vmatprep.subr.bf16.mxu0 %v843
        %1011 = vmatpush1.bf16.msra.mxu0 %v842
        %1012 = vmatprep.subr.bf16.mxu0 %v841
        %1013 = vmatpush1.bf16.msra.mxu0 %v840
        %1014 = vmatprep.subr.bf16.mxu0 %v839
        %1015 = vmatpush1.bf16.msra.mxu0 %v838
        %1016 = vmatprep.subr.bf16.mxu0 %v837
        %1017 = vmatpush1.bf16.msra.mxu0 %v836
        %1018 = vmatprep.subr.bf16.mxu0 0
        %1019 = vmatpush2.bf16.msra.mxu0 0
        %1020 = vmatprep.subr.bf16.mxu0 0
        %1021 = vmatpush2.bf16.msra.mxu0 0
        %1022 = vmatprep.subr.bf16.mxu0 0
        %1023 = vmatpush2.bf16.msra.mxu0 0
        %1024 = vmatprep.subr.bf16.mxu0 0
        %1025 = vmatpush2.bf16.msra.mxu0 0
        %1026 = vmatprep.subr.bf16.mxu0 0
        %1027 = vmatpush2.bf16.msra.mxu0 0
        %1028 = vmatprep.subr.bf16.mxu0 0
        %1029 = vmatpush2.bf16.msra.mxu0 0
        %1030 = vmatprep.subr.bf16.mxu0 0
        %1031 = vmatpush2.bf16.msra.mxu0 0
        %1032 = vmatprep.subr.bf16.mxu0 0
        %1033 = vmatpush2.bf16.msra.mxu0 0
        %1034 = vmatprep.mubr.bf16.mxu0 0
        %1035 = vmatmul.mubr.bf16.gmra.mxu0 %v991
        %v1036 = vpop.f32.mrf.mxu0
        %v1037 = vadd.f32 %v785, %v1036
        %v1038 = vpop.f32.mrf.mxu0
        %v1039 = vadd.f32 %v789, %v1038
        %v1040 = vpop.f32.mrf.mxu0
        %v1041 = vadd.f32 %v785, %v1040
        %v1042 = vpop.f32.mrf.mxu0
        %v1043 = vadd.f32 %v789, %v1042
        %1044 = vmatprep.mubr.bf16.mxu0 0
        %1045 = vmatmul.mubr.bf16.gmra.mxu0 %v994
        %v1046 = vpop.f32.mrf.mxu0
        %v1047 = vadd.f32 %v785, %v1046
        %v1048 = vpop.f32.mrf.mxu0
        %v1049 = vadd.f32 %v789, %v1048
        %v1050 = vpop.f32.mrf.mxu0
        %v1051 = vadd.f32 %v785, %v1050
        %v1052 = vpop.f32.mrf.mxu0
        %v1053 = vadd.f32 %v789, %v1052
        %1054 = vmatprep.mubr.bf16.mxu0 0
        %1055 = vmatmul.mubr.bf16.gmra.mxu0 %v997
        %v1056 = vpop.f32.mrf.mxu0
        %v1057 = vadd.f32 %v785, %v1056
        %v1058 = vpop.f32.mrf.mxu0
        %v1059 = vadd.f32 %v789, %v1058
        %v1060 = vpop.f32.mrf.mxu0
        %v1061 = vadd.f32 %v785, %v1060
        %v1062 = vpop.f32.mrf.mxu0
        %v1063 = vadd.f32 %v789, %v1062
        %1064 = vmatprep.mubr.bf16.mxu0 0
        %1065 = vmatmul.mubr.bf16.gmra.mxu0 %v1000
        %v1066 = vpop.f32.mrf.mxu0
        %v1067 = vadd.f32 %v785, %v1066
        %v1068 = vpop.f32.mrf.mxu0
        %v1069 = vadd.f32 %v789, %v1068
        %v1070 = vpop.f32.mrf.mxu0
        %v1071 = vadd.f32 %v785, %v1070
        %v1072 = vpop.f32.mrf.mxu0
        %v1073 = vadd.f32 %v789, %v1072
        %1074 = vdwg.mxu0
        %v1075 = vmax.f32 %v1037, 0.0
        %v1076 = vmax.f32 %v1039, 0.0
        %v1077 = vmax.f32 %v1041, 0.0
        %v1078 = vmax.f32 %v1043, 0.0
        %v1079 = vmax.f32 %v1047, 0.0
        %v1080 = vmax.f32 %v1049, 0.0
        %v1081 = vmax.f32 %v1051, 0.0
        %v1082 = vmax.f32 %v1053, 0.0
        %v1083 = vmax.f32 %v1057, 0.0
        %v1084 = vmax.f32 %v1059, 0.0
        %v1085 = vmax.f32 %v1061, 0.0
        %v1086 = vmax.f32 %v1063, 0.0
        %v1087 = vmax.f32 %v1067, 0.0
        %v1088 = vmax.f32 %v1069, 0.0
        %v1089 = vmax.f32 %v1071, 0.0
        %v1090 = vmax.f32 %v1073, 0.0
        %v1091 = vpack.c.bf16 %v1077, %v1075
        %v1092 = vpack.c.bf16 %v1078, %v1076
        %v1093 = vpack.c.bf16 %v1081, %v1079
        %v1094 = vpack.c.bf16 %v1082, %v1080
        %v1095 = vpack.c.bf16 %v1085, %v1083
        %v1096 = vpack.c.bf16 %v1086, %v1084
        %v1097 = vpack.c.bf16 %v1089, %v1087
        %v1098 = vpack.c.bf16 %v1090, %v1088
        %v1107 = vunpack.c.l.b16 %v1091
        %v1108 = vunpack.c.l.b16 %v1092
        %v1109 = vunpack.c.h.b16 %v1091
        %v1110 = vunpack.c.h.b16 %v1092
        %v1111 = vunpack.c.l.b16 %v1093
        %v1112 = vunpack.c.l.b16 %v1094
        %v1113 = vunpack.c.h.b16 %v1093
        %v1114 = vunpack.c.h.b16 %v1094
        %v1115 = vunpack.c.l.b16 %v1095
        %v1116 = vunpack.c.l.b16 %v1096
        %v1117 = vunpack.c.h.b16 %v1095
        %v1118 = vunpack.c.h.b16 %v1096
        %v1119 = vunpack.c.l.b16 %v1097
        %v1120 = vunpack.c.l.b16 %v1098
        %v1121 = vunpack.c.h.b16 %v1097
        %v1122 = vunpack.c.h.b16 %v1098
        %p1123 = scmp.gt.s32.totalorder %s32, 0
        %s1124 = scalar_select %p1123, 1.0, 0.0
        %p1126 = scmp.ne.f32.partialorder %s1124, %s1124
        %s1127 = sshrl.u32 %s1124, 16
        %s1128 = sand.u32 %s1127, 1
        %s1129 = sadd.s32 32767, %s1128
        %s1130 = sadd.s32 %s1124, %s1129
        %s1131 = sand.u32 %s1130, 4294901760
        %s1132 = scalar_select %p1126, 2143289344, %s1131
        %s1134 = sshrl.u32 %s1132, 16
        %v1135 = vld [vmem:[%s731] sm:$0xf]
        %v1137 = vsel %vm852, %v1135, 0
        %1139 = vmatprep.subr.bf16.mxu0 0
        %1140 = vmatpush1.bf16.msra.mxu0 0
        %1141 = vmatprep.subr.bf16.mxu0 0
        %1142 = vmatpush1.bf16.msra.mxu0 0
        %1143 = vmatprep.subr.bf16.mxu0 0
        %1144 = vmatpush1.bf16.msra.mxu0 0
        %1145 = vmatprep.subr.bf16.mxu0 0
        %1146 = vmatpush1.bf16.msra.mxu0 0
        %1147 = vmatprep.subr.bf16.mxu0 %v843
        %1148 = vmatpush1.bf16.msra.mxu0 %v842
        %1149 = vmatprep.subr.bf16.mxu0 %v841
        %1150 = vmatpush1.bf16.msra.mxu0 %v840
        %1151 = vmatprep.subr.bf16.mxu0 %v839
        %1152 = vmatpush1.bf16.msra.mxu0 %v838
        %1153 = vmatprep.subr.bf16.mxu0 %v837
        %1154 = vmatpush1.bf16.msra.mxu0 %v836
        %1155 = vmatprep.subr.bf16.mxu0 0
        %1156 = vmatpush2.bf16.msra.mxu0 0
        %1157 = vmatprep.subr.bf16.mxu0 0
        %1158 = vmatpush2.bf16.msra.mxu0 0
        %1159 = vmatprep.subr.bf16.mxu0 0
        %1160 = vmatpush2.bf16.msra.mxu0 0
        %1161 = vmatprep.subr.bf16.mxu0 0
        %1162 = vmatpush2.bf16.msra.mxu0 0
        %1163 = vmatprep.subr.bf16.mxu0 0
        %1164 = vmatpush2.bf16.msra.mxu0 0
        %1165 = vmatprep.subr.bf16.mxu0 0
        %1166 = vmatpush2.bf16.msra.mxu0 0
        %1167 = vmatprep.subr.bf16.mxu0 0
        %1168 = vmatpush2.bf16.msra.mxu0 0
        %1169 = vmatprep.subr.bf16.mxu0 0
        %1170 = vmatpush2.bf16.msra.mxu0 0
        %1171 = vmatprep.mubr.bf16.mxu0 0
        %1172 = vmatmul.mubr.bf16.gmra.mxu0 %v1137
        %v1173 = vpop.f32.mrf.mxu0
        %v1174 = vadd.f32 %v785, %v1173
        %v1175 = vpop.f32.mrf.mxu0
        %v1176 = vadd.f32 %v789, %v1175
        %v1177 = vpop.f32.mrf.mxu0
        %v1178 = vpop.f32.mrf.mxu0
        %1179 = vdwg.mxu0
        %v1180 = vmax.f32 %v1174, 0.0
        %v1181 = vmax.f32 %v1176, 0.0
        %v1182 = vpack.c.bf16 %v1180, %v1180
        %v1183 = vpack.c.bf16 %v1181, %v1181
        %s1184 = sshll.u32 %s1134, 16
        %s1185 = sor.u32 %s1134, %s1184
        %v1186 = vstv %s1185
        %v1188 = vmul.bf16 %v1182, %v1186
        %v1189 = vmul.bf16 %v1183, %v1186
        %v1190 = vld [vmem:[%s747] sm:$0xf]
        %v1192 = vsel %vm852, %v1190, 0
        %1194 = vmatprep.subr.bf16.mxu0 0
        %1195 = vmatpush1.bf16.msra.mxu0 0
        %1196 = vmatprep.subr.bf16.mxu0 0
        %1197 = vmatpush1.bf16.msra.mxu0 0
        %1198 = vmatprep.subr.bf16.mxu0 0
        %1199 = vmatpush1.bf16.msra.mxu0 0
        %1200 = vmatprep.subr.bf16.mxu0 0
        %1201 = vmatpush1.bf16.msra.mxu0 0
        %1202 = vmatprep.subr.bf16.mxu0 %v843
        %1203 = vmatpush1.bf16.msra.mxu0 %v842
        %1204 = vmatprep.subr.bf16.mxu0 %v841
        %1205 = vmatpush1.bf16.msra.mxu0 %v840
        %1206 = vmatprep.subr.bf16.mxu0 %v839
        %1207 = vmatpush1.bf16.msra.mxu0 %v838
        %1208 = vmatprep.subr.bf16.mxu0 %v837
        %1209 = vmatpush1.bf16.msra.mxu0 %v836
        %1210 = vmatprep.subr.bf16.mxu0 0
        %1211 = vmatpush2.bf16.msra.mxu0 0
        %1212 = vmatprep.subr.bf16.mxu0 0
        %1213 = vmatpush2.bf16.msra.mxu0 0
        %1214 = vmatprep.subr.bf16.mxu0 0
        %1215 = vmatpush2.bf16.msra.mxu0 0
        %1216 = vmatprep.subr.bf16.mxu0 0
        %1217 = vmatpush2.bf16.msra.mxu0 0
        %1218 = vmatprep.subr.bf16.mxu0 0
        %1219 = vmatpush2.bf16.msra.mxu0 0
        %1220 = vmatprep.subr.bf16.mxu0 0
        %1221 = vmatpush2.bf16.msra.mxu0 0
        %1222 = vmatprep.subr.bf16.mxu0 0
        %1223 = vmatpush2.bf16.msra.mxu0 0
        %1224 = vmatprep.subr.bf16.mxu0 0
        %1225 = vmatpush2.bf16.msra.mxu0 0
        %1226 = vmatprep.mubr.bf16.mxu0 0
        %1227 = vmatmul.mubr.bf16.gmra.mxu0 %v1192
        %v1228 = vpop.f32.mrf.mxu0
        %v1229 = vadd.f32 %v785, %v1228
        %v1230 = vpop.f32.mrf.mxu0
        %v1231 = vadd.f32 %v789, %v1230
        %v1232 = vpop.f32.mrf.mxu0
        %v1233 = vpop.f32.mrf.mxu0
        %1234 = vdwg.mxu0
        %v1235 = vmax.f32 %v1229, 0.0
        %v1236 = vmax.f32 %v1231, 0.0
        %v1237 = vpack.c.bf16 %v1235, %v1235
        %v1238 = vpack.c.bf16 %v1236, %v1236
        %v1239 = vmul.bf16 %v1237, %v1186
        %v1240 = vmul.bf16 %v1238, %v1186
        %v1241 = vld [vmem:[%s708] sm:$0xf]
        %v1242 = vld [vmem:[%s708 + $0x4] sm:$0xf]
        %v1243 = vld [vmem:[%s708 + $0x8] sm:$0xf]
        %v1244 = vld [vmem:[%s708 + $0xc] sm:$0xf]
        %v1245 = vld [vmem:[%s708 + $0x10] sm:$0xf]
        %v1246 = vld [vmem:[%s708 + $0x14] sm:$0xf]
        %v1247 = vld [vmem:[%s708 + $0x18] sm:$0xf]
        %v1248 = vld [vmem:[%s708 + $0x1c] sm:$0xf]
        %v1257 = vunpack.c.l.b16 %v1241
        %v1258 = vunpack.c.l.b16 %v1242
        %v1259 = vunpack.c.l.b16 %v1243
        %v1260 = vunpack.c.l.b16 %v1244
        %v1261 = vunpack.c.l.b16 %v1245
        %v1262 = vunpack.c.l.b16 %v1246
        %v1263 = vunpack.c.l.b16 %v1247
        %v1264 = vunpack.c.l.b16 %v1248
        %v1265 = vpack.c.b16 %v1258, %v1257
        %v1266 = vpack.c.b16 %v1260, %v1259
        %v1267 = vpack.c.b16 %v1262, %v1261
        %v1268 = vpack.c.b16 %v1264, %v1263
        %v1270 = vsel %vm852, %v1265, 0
        %v1273 = vsel %vm852, %v1266, 0
        %v1276 = vsel %vm852, %v1267, 0
        %v1279 = vsel %vm852, %v1268, 0
        %1281 = vmatprep.subr.bf16.mxu0 0
        %1282 = vmatpush1.bf16.msra.mxu0 0
        %1283 = vmatprep.subr.bf16.mxu0 0
        %1284 = vmatpush1.bf16.msra.mxu0 0
        %1285 = vmatprep.subr.bf16.mxu0 0
        %1286 = vmatpush1.bf16.msra.mxu0 0
        %1287 = vmatprep.subr.bf16.mxu0 0
        %1288 = vmatpush1.bf16.msra.mxu0 0
        %1289 = vmatprep.subr.bf16.mxu0 %v843
        %1290 = vmatpush1.bf16.msra.mxu0 %v842
        %1291 = vmatprep.subr.bf16.mxu0 %v841
        %1292 = vmatpush1.bf16.msra.mxu0 %v840
        %1293 = vmatprep.subr.bf16.mxu0 %v839
        %1294 = vmatpush1.bf16.msra.mxu0 %v838
        %1295 = vmatprep.subr.bf16.mxu0 %v837
        %1296 = vmatpush1.bf16.msra.mxu0 %v836
        %1297 = vmatprep.subr.bf16.mxu0 0
        %1298 = vmatpush2.bf16.msra.mxu0 0
        %1299 = vmatprep.subr.bf16.mxu0 0
        %1300 = vmatpush2.bf16.msra.mxu0 0
        %1301 = vmatprep.subr.bf16.mxu0 0
        %1302 = vmatpush2.bf16.msra.mxu0 0
        %1303 = vmatprep.subr.bf16.mxu0 0
        %1304 = vmatpush2.bf16.msra.mxu0 0
        %1305 = vmatprep.subr.bf16.mxu0 0
        %1306 = vmatpush2.bf16.msra.mxu0 0
        %1307 = vmatprep.subr.bf16.mxu0 0
        %1308 = vmatpush2.bf16.msra.mxu0 0
        %1309 = vmatprep.subr.bf16.mxu0 0
        %1310 = vmatpush2.bf16.msra.mxu0 0
        %1311 = vmatprep.subr.bf16.mxu0 0
        %1312 = vmatpush2.bf16.msra.mxu0 0
        %1313 = vmatprep.mubr.bf16.mxu0 0
        %1314 = vmatmul.mubr.bf16.gmra.mxu0 %v1270
        %v1315 = vpop.f32.mrf.mxu0
        %v1316 = vadd.f32 %v785, %v1315
        %v1317 = vpop.f32.mrf.mxu0
        %v1318 = vadd.f32 %v789, %v1317
        %v1319 = vpop.f32.mrf.mxu0
        %v1320 = vadd.f32 %v785, %v1319
        %v1321 = vpop.f32.mrf.mxu0
        %v1322 = vadd.f32 %v789, %v1321
        %1323 = vmatprep.mubr.bf16.mxu0 0
        %1324 = vmatmul.mubr.bf16.gmra.mxu0 %v1273
        %v1325 = vpop.f32.mrf.mxu0
        %v1326 = vadd.f32 %v785, %v1325
        %v1327 = vpop.f32.mrf.mxu0
        %v1328 = vadd.f32 %v789, %v1327
        %v1329 = vpop.f32.mrf.mxu0
        %v1330 = vadd.f32 %v785, %v1329
        %v1331 = vpop.f32.mrf.mxu0
        %v1332 = vadd.f32 %v789, %v1331
        %1333 = vmatprep.mubr.bf16.mxu0 0
        %1334 = vmatmul.mubr.bf16.gmra.mxu0 %v1276
        %v1335 = vpop.f32.mrf.mxu0
        %v1336 = vadd.f32 %v785, %v1335
        %v1337 = vpop.f32.mrf.mxu0
        %v1338 = vadd.f32 %v789, %v1337
        %v1339 = vpop.f32.mrf.mxu0
        %v1340 = vadd.f32 %v785, %v1339
        %v1341 = vpop.f32.mrf.mxu0
        %v1342 = vadd.f32 %v789, %v1341
        %1343 = vmatprep.mubr.bf16.mxu0 0
        %1344 = vmatmul.mubr.bf16.gmra.mxu0 %v1279
        %v1345 = vpop.f32.mrf.mxu0
        %v1346 = vadd.f32 %v785, %v1345
        %v1347 = vpop.f32.mrf.mxu0
        %v1348 = vadd.f32 %v789, %v1347
        %v1349 = vpop.f32.mrf.mxu0
        %v1350 = vadd.f32 %v785, %v1349
        %v1351 = vpop.f32.mrf.mxu0
        %v1352 = vadd.f32 %v789, %v1351
        %1353 = vdwg.mxu0
        %v1354 = vmax.f32 %v1316, 0.0
        %v1355 = vmax.f32 %v1318, 0.0
        %v1356 = vmax.f32 %v1320, 0.0
        %v1357 = vmax.f32 %v1322, 0.0
        %v1358 = vmax.f32 %v1326, 0.0
        %v1359 = vmax.f32 %v1328, 0.0
        %v1360 = vmax.f32 %v1330, 0.0
        %v1361 = vmax.f32 %v1332, 0.0
        %v1362 = vmax.f32 %v1336, 0.0
        %v1363 = vmax.f32 %v1338, 0.0
        %v1364 = vmax.f32 %v1340, 0.0
        %v1365 = vmax.f32 %v1342, 0.0
        %v1366 = vmax.f32 %v1346, 0.0
        %v1367 = vmax.f32 %v1348, 0.0
        %v1368 = vmax.f32 %v1350, 0.0
        %v1369 = vmax.f32 %v1352, 0.0
        %v1370 = vpack.c.bf16 %v1356, %v1354
        %v1371 = vpack.c.bf16 %v1357, %v1355
        %v1372 = vpack.c.bf16 %v1360, %v1358
        %v1373 = vpack.c.bf16 %v1361, %v1359
        %v1374 = vpack.c.bf16 %v1364, %v1362
        %v1375 = vpack.c.bf16 %v1365, %v1363
        %v1376 = vpack.c.bf16 %v1368, %v1366
        %v1377 = vpack.c.bf16 %v1369, %v1367
        %v1386 = vunpack.c.l.b16 %v1370
        %v1387 = vunpack.c.l.b16 %v1371
        %v1388 = vunpack.c.h.b16 %v1370
        %v1389 = vunpack.c.h.b16 %v1371
        %v1390 = vunpack.c.l.b16 %v1372
        %v1391 = vunpack.c.l.b16 %v1373
        %v1392 = vunpack.c.h.b16 %v1372
        %v1393 = vunpack.c.h.b16 %v1373
        %v1394 = vunpack.c.l.b16 %v1374
        %v1395 = vunpack.c.l.b16 %v1375
        %v1396 = vunpack.c.h.b16 %v1374
        %v1397 = vunpack.c.h.b16 %v1375
        %v1398 = vunpack.c.l.b16 %v1376
        %v1399 = vunpack.c.l.b16 %v1377
        %v1400 = vunpack.c.h.b16 %v1376
        %v1401 = vunpack.c.h.b16 %v1377
        %v1402 = vld [vmem:[%s718] sm:$0xf]
        %v1403 = vld [vmem:[%s718 + $0x4] sm:$0xf]
        %v1404 = vld [vmem:[%s718 + $0x8] sm:$0xf]
        %v1405 = vld [vmem:[%s718 + $0xc] sm:$0xf]
        %v1406 = vld [vmem:[%s718 + $0x10] sm:$0xf]
        %v1407 = vld [vmem:[%s718 + $0x14] sm:$0xf]
        %v1408 = vld [vmem:[%s718 + $0x18] sm:$0xf]
        %v1409 = vld [vmem:[%s718 + $0x1c] sm:$0xf]
        %v1418 = vunpack.c.l.b16 %v1402
        %v1419 = vunpack.c.l.b16 %v1403
        %v1420 = vunpack.c.l.b16 %v1404
        %v1421 = vunpack.c.l.b16 %v1405
        %v1422 = vunpack.c.l.b16 %v1406
        %v1423 = vunpack.c.l.b16 %v1407
        %v1424 = vunpack.c.l.b16 %v1408
        %v1425 = vunpack.c.l.b16 %v1409
        %v1426 = vpack.c.b16 %v1419, %v1418
        %v1427 = vpack.c.b16 %v1421, %v1420
        %v1428 = vpack.c.b16 %v1423, %v1422
        %v1429 = vpack.c.b16 %v1425, %v1424
        %v1431 = vsel %vm852, %v1426, 0
        %v1434 = vsel %vm852, %v1427, 0
        %v1437 = vsel %vm852, %v1428, 0
        %v1440 = vsel %vm852, %v1429, 0
        %1442 = vmatprep.subr.bf16.mxu0 0
        %1443 = vmatpush1.bf16.msra.mxu0 0
        %1444 = vmatprep.subr.bf16.mxu0 0
        %1445 = vmatpush1.bf16.msra.mxu0 0
        %1446 = vmatprep.subr.bf16.mxu0 0
        %1447 = vmatpush1.bf16.msra.mxu0 0
        %1448 = vmatprep.subr.bf16.mxu0 0
        %1449 = vmatpush1.bf16.msra.mxu0 0
        %1450 = vmatprep.subr.bf16.mxu0 %v843
        %1451 = vmatpush1.bf16.msra.mxu0 %v842
        %1452 = vmatprep.subr.bf16.mxu0 %v841
        %1453 = vmatpush1.bf16.msra.mxu0 %v840
        %1454 = vmatprep.subr.bf16.mxu0 %v839
        %1455 = vmatpush1.bf16.msra.mxu0 %v838
        %1456 = vmatprep.subr.bf16.mxu0 %v837
        %1457 = vmatpush1.bf16.msra.mxu0 %v836
        %1458 = vmatprep.subr.bf16.mxu0 0
        %1459 = vmatpush2.bf16.msra.mxu0 0
        %1460 = vmatprep.subr.bf16.mxu0 0
        %1461 = vmatpush2.bf16.msra.mxu0 0
        %1462 = vmatprep.subr.bf16.mxu0 0
        %1463 = vmatpush2.bf16.msra.mxu0 0
        %1464 = vmatprep.subr.bf16.mxu0 0
        %1465 = vmatpush2.bf16.msra.mxu0 0
        %1466 = vmatprep.subr.bf16.mxu0 0
        %1467 = vmatpush2.bf16.msra.mxu0 0
        %1468 = vmatprep.subr.bf16.mxu0 0
        %1469 = vmatpush2.bf16.msra.mxu0 0
        %1470 = vmatprep.subr.bf16.mxu0 0
        %1471 = vmatpush2.bf16.msra.mxu0 0
        %1472 = vmatprep.subr.bf16.mxu0 0
        %1473 = vmatpush2.bf16.msra.mxu0 0
        %1474 = vmatprep.mubr.bf16.mxu0 0
        %1475 = vmatmul.mubr.bf16.gmra.mxu0 %v1431
        %v1476 = vpop.f32.mrf.mxu0
        %v1477 = vadd.f32 %v785, %v1476
        %v1478 = vpop.f32.mrf.mxu0
        %v1479 = vadd.f32 %v789, %v1478
        %v1480 = vpop.f32.mrf.mxu0
        %v1481 = vadd.f32 %v785, %v1480
        %v1482 = vpop.f32.mrf.mxu0
        %v1483 = vadd.f32 %v789, %v1482
        %1484 = vmatprep.mubr.bf16.mxu0 0
        %1485 = vmatmul.mubr.bf16.gmra.mxu0 %v1434
        %v1486 = vpop.f32.mrf.mxu0
        %v1487 = vadd.f32 %v785, %v1486
        %v1488 = vpop.f32.mrf.mxu0
        %v1489 = vadd.f32 %v789, %v1488
        %v1490 = vpop.f32.mrf.mxu0
        %v1491 = vadd.f32 %v785, %v1490
        %v1492 = vpop.f32.mrf.mxu0
        %v1493 = vadd.f32 %v789, %v1492
        %1494 = vmatprep.mubr.bf16.mxu0 0
        %1495 = vmatmul.mubr.bf16.gmra.mxu0 %v1437
        %v1496 = vpop.f32.mrf.mxu0
        %v1497 = vadd.f32 %v785, %v1496
        %v1498 = vpop.f32.mrf.mxu0
        %v1499 = vadd.f32 %v789, %v1498
        %v1500 = vpop.f32.mrf.mxu0
        %v1501 = vadd.f32 %v785, %v1500
        %v1502 = vpop.f32.mrf.mxu0
        %v1503 = vadd.f32 %v789, %v1502
        %1504 = vmatprep.mubr.bf16.mxu0 0
        %1505 = vmatmul.mubr.bf16.gmra.mxu0 %v1440
        %v1506 = vpop.f32.mrf.mxu0
        %v1507 = vadd.f32 %v785, %v1506
        %v1508 = vpop.f32.mrf.mxu0
        %v1509 = vadd.f32 %v789, %v1508
        %v1510 = vpop.f32.mrf.mxu0
        %v1511 = vadd.f32 %v785, %v1510
        %v1512 = vpop.f32.mrf.mxu0
        %v1513 = vadd.f32 %v789, %v1512
        %1514 = vdwg.mxu0
        %v1515 = vmax.f32 %v1477, 0.0
        %v1516 = vmax.f32 %v1479, 0.0
        %v1517 = vmax.f32 %v1481, 0.0
        %v1518 = vmax.f32 %v1483, 0.0
        %v1519 = vmax.f32 %v1487, 0.0
        %v1520 = vmax.f32 %v1489, 0.0
        %v1521 = vmax.f32 %v1491, 0.0
        %v1522 = vmax.f32 %v1493, 0.0
        %v1523 = vmax.f32 %v1497, 0.0
        %v1524 = vmax.f32 %v1499, 0.0
        %v1525 = vmax.f32 %v1501, 0.0
        %v1526 = vmax.f32 %v1503, 0.0
        %v1527 = vmax.f32 %v1507, 0.0
        %v1528 = vmax.f32 %v1509, 0.0
        %v1529 = vmax.f32 %v1511, 0.0
        %v1530 = vmax.f32 %v1513, 0.0
        %v1531 = vpack.c.bf16 %v1517, %v1515
        %v1532 = vpack.c.bf16 %v1518, %v1516
        %v1533 = vpack.c.bf16 %v1521, %v1519
        %v1534 = vpack.c.bf16 %v1522, %v1520
        %v1535 = vpack.c.bf16 %v1525, %v1523
        %v1536 = vpack.c.bf16 %v1526, %v1524
        %v1537 = vpack.c.bf16 %v1529, %v1527
        %v1538 = vpack.c.bf16 %v1530, %v1528
        %v1547 = vunpack.c.l.b16 %v1531
        %v1548 = vunpack.c.l.b16 %v1532
        %v1549 = vunpack.c.h.b16 %v1531
        %v1550 = vunpack.c.h.b16 %v1532
        %v1551 = vunpack.c.l.b16 %v1533
        %v1552 = vunpack.c.l.b16 %v1534
        %v1553 = vunpack.c.h.b16 %v1533
        %v1554 = vunpack.c.h.b16 %v1534
        %v1555 = vunpack.c.l.b16 %v1535
        %v1556 = vunpack.c.l.b16 %v1536
        %v1557 = vunpack.c.h.b16 %v1535
        %v1558 = vunpack.c.h.b16 %v1536
        %v1559 = vunpack.c.l.b16 %v1537
        %v1560 = vunpack.c.l.b16 %v1538
        %v1561 = vunpack.c.h.b16 %v1537
        %v1562 = vunpack.c.h.b16 %v1538
        %v1563 = vpack.c.b16 %v1547, %v1547
        %v1564 = vpack.c.b16 %v1548, %v1548
        %v1565 = vpack.c.b16 %v1549, %v1549
        %v1566 = vpack.c.b16 %v1550, %v1550
        %v1567 = vpack.c.b16 %v1551, %v1551
        %v1568 = vpack.c.b16 %v1552, %v1552
        %v1569 = vpack.c.b16 %v1553, %v1553
        %v1570 = vpack.c.b16 %v1554, %v1554
        %v1571 = vpack.c.b16 %v1555, %v1555
        %v1572 = vpack.c.b16 %v1556, %v1556
        %v1573 = vpack.c.b16 %v1557, %v1557
        %v1574 = vpack.c.b16 %v1558, %v1558
        %v1575 = vpack.c.b16 %v1559, %v1559
        %v1576 = vpack.c.b16 %v1560, %v1560
        %v1577 = vpack.c.b16 %v1561, %v1561
        %v1578 = vpack.c.b16 %v1562, %v1562
        %v1579 = vpack.c.b16 %v1107, %v1107
        %v1580 = vpack.c.b16 %v1108, %v1108
        %v1581 = vpack.c.b16 %v1109, %v1109
        %v1582 = vpack.c.b16 %v1110, %v1110
        %v1583 = vpack.c.b16 %v1111, %v1111
        %v1584 = vpack.c.b16 %v1112, %v1112
        %v1585 = vpack.c.b16 %v1113, %v1113
        %v1586 = vpack.c.b16 %v1114, %v1114
        %v1587 = vpack.c.b16 %v1115, %v1115
        %v1588 = vpack.c.b16 %v1116, %v1116
        %v1589 = vpack.c.b16 %v1117, %v1117
        %v1590 = vpack.c.b16 %v1118, %v1118
        %v1591 = vpack.c.b16 %v1119, %v1119
        %v1592 = vpack.c.b16 %v1120, %v1120
        %v1593 = vpack.c.b16 %v1121, %v1121
        %v1594 = vpack.c.b16 %v1122, %v1122
        %v1596 = vshrl.u32 %v1579, 16
        %v1598 = vrot.slane %v1596, 7
        %v1599 = vshll.u32 %v1579, 16
        %v1601 = vor.u32 %v1598, %v1599
        %v1603 = vshrl.u32 %v1580, 16
        %v1605 = vrot.slane %v1603, 7
        %v1606 = vshll.u32 %v1580, 16
        %v1608 = vor.u32 %v1605, %v1606
        %v1610 = vshrl.u32 %v1581, 16
        %v1612 = vrot.slane %v1610, 7
        %v1613 = vshll.u32 %v1581, 16
        %v1615 = vor.u32 %v1612, %v1613
        %v1617 = vshrl.u32 %v1582, 16
        %v1619 = vrot.slane %v1617, 7
        %v1620 = vshll.u32 %v1582, 16
        %v1622 = vor.u32 %v1619, %v1620
        %v1624 = vshrl.u32 %v1583, 16
        %v1626 = vrot.slane %v1624, 7
        %v1627 = vshll.u32 %v1583, 16
        %v1629 = vor.u32 %v1626, %v1627
        %v1631 = vshrl.u32 %v1584, 16
        %v1633 = vrot.slane %v1631, 7
        %v1634 = vshll.u32 %v1584, 16
        %v1636 = vor.u32 %v1633, %v1634
        %v1638 = vshrl.u32 %v1585, 16
        %v1640 = vrot.slane %v1638, 7
        %v1641 = vshll.u32 %v1585, 16
        %v1643 = vor.u32 %v1640, %v1641
        %v1645 = vshrl.u32 %v1586, 16
        %v1647 = vrot.slane %v1645, 7
        %v1648 = vshll.u32 %v1586, 16
        %v1650 = vor.u32 %v1647, %v1648
        %v1652 = vshrl.u32 %v1587, 16
        %v1654 = vrot.slane %v1652, 7
        %v1655 = vshll.u32 %v1587, 16
        %v1657 = vor.u32 %v1654, %v1655
        %v1659 = vshrl.u32 %v1588, 16
        %v1661 = vrot.slane %v1659, 7
        %v1662 = vshll.u32 %v1588, 16
        %v1664 = vor.u32 %v1661, %v1662
        %v1666 = vshrl.u32 %v1589, 16
        %v1668 = vrot.slane %v1666, 7
        %v1669 = vshll.u32 %v1589, 16
        %v1671 = vor.u32 %v1668, %v1669
        %v1673 = vshrl.u32 %v1590, 16
        %v1675 = vrot.slane %v1673, 7
        %v1676 = vshll.u32 %v1590, 16
        %v1678 = vor.u32 %v1675, %v1676
        %v1680 = vshrl.u32 %v1591, 16
        %v1682 = vrot.slane %v1680, 7
        %v1683 = vshll.u32 %v1591, 16
        %v1685 = vor.u32 %v1682, %v1683
        %v1687 = vshrl.u32 %v1592, 16
        %v1689 = vrot.slane %v1687, 7
        %v1690 = vshll.u32 %v1592, 16
        %v1692 = vor.u32 %v1689, %v1690
        %v1694 = vshrl.u32 %v1593, 16
        %v1696 = vrot.slane %v1694, 7
        %v1697 = vshll.u32 %v1593, 16
        %v1699 = vor.u32 %v1696, %v1697
        %v1701 = vshrl.u32 %v1594, 16
        %v1703 = vrot.slane %v1701, 7
        %v1704 = vshll.u32 %v1594, 16
        %v1706 = vor.u32 %v1703, %v1704
        %vm1723 = vcmask 1040384
        %vm1724 = vsmask.f32 256
        %vm1725 = vmand %vm1723, %vm1724
        %v1726 = vsel %vm1725, 0, %v1601
        %v1727 = vsel %vm1725, 0, %v1608
        %v1728 = vsel %vm1725, 0, %v1615
        %v1729 = vsel %vm1725, 0, %v1622
        %v1730 = vsel %vm1725, 0, %v1629
        %v1731 = vsel %vm1725, 0, %v1636
        %v1732 = vsel %vm1725, 0, %v1643
        %v1733 = vsel %vm1725, 0, %v1650
        %v1734 = vsel %vm1725, 0, %v1657
        %v1735 = vsel %vm1725, 0, %v1664
        %v1736 = vsel %vm1725, 0, %v1671
        %v1737 = vsel %vm1725, 0, %v1678
        %v1738 = vsel %vm1725, 0, %v1685
        %v1739 = vsel %vm1725, 0, %v1692
        %v1740 = vsel %vm1725, 0, %v1699
        %v1741 = vsel %vm1725, 0, %v1706
        %v1743 = vshrl.u32 %v1239, 16
        %v1745 = vrot.slane %v1743, 7
        %v1746 = vshll.u32 %v1239, 16
        %v1748 = vor.u32 %v1745, %v1746
        %v1750 = vshrl.u32 %v1240, 16
        %v1752 = vrot.slane %v1750, 7
        %v1753 = vshll.u32 %v1240, 16
        %v1755 = vor.u32 %v1752, %v1753
        %v1757 = vshrl.u32 %v1563, 16
        %v1759 = vrot.slane %v1757, 7
        %v1760 = vshll.u32 %v1563, 16
        %v1762 = vor.u32 %v1759, %v1760
        %v1764 = vshrl.u32 %v1564, 16
        %v1766 = vrot.slane %v1764, 7
        %v1767 = vshll.u32 %v1564, 16
        %v1769 = vor.u32 %v1766, %v1767
        %v1771 = vshrl.u32 %v1565, 16
        %v1773 = vrot.slane %v1771, 7
        %v1774 = vshll.u32 %v1565, 16
        %v1776 = vor.u32 %v1773, %v1774
        %v1778 = vshrl.u32 %v1566, 16
        %v1780 = vrot.slane %v1778, 7
        %v1781 = vshll.u32 %v1566, 16
        %v1783 = vor.u32 %v1780, %v1781
        %v1785 = vshrl.u32 %v1567, 16
        %v1787 = vrot.slane %v1785, 7
        %v1788 = vshll.u32 %v1567, 16
        %v1790 = vor.u32 %v1787, %v1788
        %v1792 = vshrl.u32 %v1568, 16
        %v1794 = vrot.slane %v1792, 7
        %v1795 = vshll.u32 %v1568, 16
        %v1797 = vor.u32 %v1794, %v1795
        %v1799 = vshrl.u32 %v1569, 16
        %v1801 = vrot.slane %v1799, 7
        %v1802 = vshll.u32 %v1569, 16
        %v1804 = vor.u32 %v1801, %v1802
        %v1806 = vshrl.u32 %v1570, 16
        %v1808 = vrot.slane %v1806, 7
        %v1809 = vshll.u32 %v1570, 16
        %v1811 = vor.u32 %v1808, %v1809
        %v1813 = vshrl.u32 %v1571, 16
        %v1815 = vrot.slane %v1813, 7
        %v1816 = vshll.u32 %v1571, 16
        %v1818 = vor.u32 %v1815, %v1816
        %v1820 = vshrl.u32 %v1572, 16
        %v1822 = vrot.slane %v1820, 7
        %v1823 = vshll.u32 %v1572, 16
        %v1825 = vor.u32 %v1822, %v1823
        %v1827 = vshrl.u32 %v1573, 16
        %v1829 = vrot.slane %v1827, 7
        %v1830 = vshll.u32 %v1573, 16
        %v1832 = vor.u32 %v1829, %v1830
        %v1834 = vshrl.u32 %v1574, 16
        %v1836 = vrot.slane %v1834, 7
        %v1837 = vshll.u32 %v1574, 16
        %v1839 = vor.u32 %v1836, %v1837
        %v1841 = vshrl.u32 %v1575, 16
        %v1843 = vrot.slane %v1841, 7
        %v1844 = vshll.u32 %v1575, 16
        %v1846 = vor.u32 %v1843, %v1844
        %v1848 = vshrl.u32 %v1576, 16
        %v1850 = vrot.slane %v1848, 7
        %v1851 = vshll.u32 %v1576, 16
        %v1853 = vor.u32 %v1850, %v1851
        %v1855 = vshrl.u32 %v1577, 16
        %v1857 = vrot.slane %v1855, 7
        %v1858 = vshll.u32 %v1577, 16
        %v1860 = vor.u32 %v1857, %v1858
        %v1862 = vshrl.u32 %v1578, 16
        %v1864 = vrot.slane %v1862, 7
        %v1865 = vshll.u32 %v1578, 16
        %v1867 = vor.u32 %v1864, %v1865
        %v1886 = vsel %vm1725, 0, %v1748
        %v1887 = vsel %vm1725, 0, %v1755
        %v1888 = vsel %vm1725, 0, %v1762
        %v1889 = vsel %vm1725, 0, %v1769
        %v1890 = vsel %vm1725, 0, %v1776
        %v1891 = vsel %vm1725, 0, %v1783
        %v1892 = vsel %vm1725, 0, %v1790
        %v1893 = vsel %vm1725, 0, %v1797
        %v1894 = vsel %vm1725, 0, %v1804
        %v1895 = vsel %vm1725, 0, %v1811
        %v1896 = vsel %vm1725, 0, %v1818
        %v1897 = vsel %vm1725, 0, %v1825
        %v1898 = vsel %vm1725, 0, %v1832
        %v1899 = vsel %vm1725, 0, %v1839
        %v1900 = vsel %vm1725, 0, %v1846
        %v1901 = vsel %vm1725, 0, %v1853
        %v1902 = vsel %vm1725, 0, %v1860
        %v1903 = vsel %vm1725, 0, %v1867
        %v1920 = vunpack.c.l.b16 %v1886
        %v1921 = vunpack.c.l.b16 %v1887
        %v1922 = vunpack.c.l.b16 %v1888
        %v1923 = vunpack.c.l.b16 %v1889
        %v1924 = vunpack.c.l.b16 %v1890
        %v1925 = vunpack.c.l.b16 %v1891
        %v1926 = vunpack.c.l.b16 %v1892
        %v1927 = vunpack.c.l.b16 %v1893
        %v1928 = vunpack.c.l.b16 %v1894
        %v1929 = vunpack.c.l.b16 %v1895
        %v1930 = vunpack.c.l.b16 %v1896
        %v1931 = vunpack.c.l.b16 %v1897
        %v1932 = vunpack.c.l.b16 %v1898
        %v1933 = vunpack.c.l.b16 %v1899
        %v1934 = vunpack.c.l.b16 %v1900
        %v1935 = vunpack.c.l.b16 %v1901
        %v1936 = vld [vmem:[#allocation6] sm:$0xff]
        %v1937 = vld [vmem:[#allocation6 + $0x8] sm:$0xff]
        %v1938 = vld [vmem:[#allocation6 + $0x10] sm:$0xff]
        %v1939 = vld [vmem:[#allocation6 + $0x18] sm:$0xff]
        %v1940 = vld [vmem:[#allocation6 + $0x20] sm:$0xff]
        %v1941 = vld [vmem:[#allocation6 + $0x28] sm:$0xff]
        %v1942 = vld [vmem:[#allocation6 + $0x30] sm:$0xff]
        %v1943 = vld [vmem:[#allocation6 + $0x38] sm:$0xff]
        %v1944 = vld [vmem:[#allocation6 + $0x40] sm:$0xff]
        %v1945 = vld [vmem:[#allocation6 + $0x48] sm:$0xff]
        %v1946 = vld [vmem:[#allocation6 + $0x50] sm:$0xff]
        %v1947 = vld [vmem:[#allocation6 + $0x58] sm:$0xff]
        %v1948 = vld [vmem:[#allocation6 + $0x60] sm:$0xff]
        %v1949 = vld [vmem:[#allocation6 + $0x68] sm:$0xff]
        %v1950 = vld [vmem:[#allocation6 + $0x70] sm:$0xff]
        %v1951 = vld [vmem:[#allocation6 + $0x78] sm:$0xff]
        %v1952 = vld [vmem:[#allocation6 + $0x80] sm:$0xff]
        %v1953 = vld [vmem:[#allocation6 + $0x88] sm:$0xff]
        %v1954 = vld [vmem:[#allocation6 + $0x90] sm:$0xff]
        %v1955 = vld [vmem:[#allocation6 + $0x98] sm:$0xff]
        %v1956 = vld [vmem:[#allocation6 + $0xa0] sm:$0xff]
        %v1957 = vld [vmem:[#allocation6 + $0xa8] sm:$0xff]
        %v1958 = vld [vmem:[#allocation6 + $0xb0] sm:$0xff]
        %v1959 = vld [vmem:[#allocation6 + $0xb8] sm:$0xff]
        %v1960 = vld [vmem:[#allocation6 + $0xc0] sm:$0xff]
        %v1961 = vld [vmem:[#allocation6 + $0xc8] sm:$0xff]
        %v1962 = vld [vmem:[#allocation6 + $0xd0] sm:$0xff]
        %v1963 = vld [vmem:[#allocation6 + $0xd8] sm:$0xff]
        %v1964 = vld [vmem:[#allocation6 + $0xe0] sm:$0xff]
        %v1965 = vld [vmem:[#allocation6 + $0xe8] sm:$0xff]
        %v1966 = vld [vmem:[#allocation6 + $0xf0] sm:$0xff]
        %v1967 = vld [vmem:[#allocation6 + $0xf8] sm:$0xff]
        %v1970 = vunpack.c.l.b16 %v1188
        %v1971 = vunpack.c.l.b16 %v1189
        %s1972 = scalar_lea.vmem [#allocation6], 256
        %v1973 = vld [vmem:[%s1972] sm:$0xff]
        %v1974 = vld [vmem:[%s1972 + $0x8] sm:$0xff]
        %v1975 = vld [vmem:[%s1972 + $0x10] sm:$0xff]
        %v1976 = vld [vmem:[%s1972 + $0x18] sm:$0xff]
        %v1977 = vld [vmem:[%s1972 + $0x20] sm:$0xff]
        %v1978 = vld [vmem:[%s1972 + $0x28] sm:$0xff]
        %v1979 = vld [vmem:[%s1972 + $0x30] sm:$0xff]
        %v1980 = vld [vmem:[%s1972 + $0x38] sm:$0xff]
        %v1981 = vld [vmem:[%s1972 + $0x40] sm:$0xff]
        %v1982 = vld [vmem:[%s1972 + $0x48] sm:$0xff]
        %v1983 = vld [vmem:[%s1972 + $0x50] sm:$0xff]
        %v1984 = vld [vmem:[%s1972 + $0x58] sm:$0xff]
        %v1985 = vld [vmem:[%s1972 + $0x60] sm:$0xff]
        %v1986 = vld [vmem:[%s1972 + $0x68] sm:$0xff]
        %v1987 = vld [vmem:[%s1972 + $0x70] sm:$0xff]
        %v1988 = vld [vmem:[%s1972 + $0x78] sm:$0xff]
        %v1989 = vld [vmem:[%s1972 + $0x80] sm:$0xff]
        %v1990 = vld [vmem:[%s1972 + $0x88] sm:$0xff]
        %v1991 = vld [vmem:[%s1972 + $0x90] sm:$0xff]
        %v1992 = vld [vmem:[%s1972 + $0x98] sm:$0xff]
        %v1993 = vld [vmem:[%s1972 + $0xa0] sm:$0xff]
        %v1994 = vld [vmem:[%s1972 + $0xa8] sm:$0xff]
        %v1995 = vld [vmem:[%s1972 + $0xb0] sm:$0xff]
        %v1996 = vld [vmem:[%s1972 + $0xb8] sm:$0xff]
        %v1997 = vld [vmem:[%s1972 + $0xc0] sm:$0xff]
        %v1998 = vld [vmem:[%s1972 + $0xc8] sm:$0xff]
        %v1999 = vld [vmem:[%s1972 + $0xd0] sm:$0xff]
        %v2000 = vld [vmem:[%s1972 + $0xd8] sm:$0xff]
        %v2001 = vld [vmem:[%s1972 + $0xe0] sm:$0xff]
        %v2002 = vld [vmem:[%s1972 + $0xe8] sm:$0xff]
        %v2003 = vld [vmem:[%s1972 + $0xf0] sm:$0xff]
        %v2004 = vld [vmem:[%s1972 + $0xf8] sm:$0xff]
        %v2005 = vpack.c.b16 %v1386, %v1970
        %v2006 = vpack.c.b16 %v1387, %v1971
        %v2007 = vpack.c.b16 %v1390, %v1388
        %v2008 = vpack.c.b16 %v1391, %v1389
        %v2009 = vpack.c.b16 %v1394, %v1392
        %v2010 = vpack.c.b16 %v1395, %v1393
        %v2011 = vpack.c.b16 %v1398, %v1396
        %v2012 = vpack.c.b16 %v1399, %v1397
        %v2053 = vunpack.c.l.b16 %v1973
        %v2054 = vunpack.c.h.b16 %v1973
        %v2055 = vunpack.c.l.b16 %v1974
        %v2056 = vunpack.c.h.b16 %v1974
        %v2057 = vunpack.c.l.b16 %v1975
        %v2058 = vunpack.c.h.b16 %v1975
        %v2059 = vunpack.c.l.b16 %v1976
        %v2060 = vunpack.c.h.b16 %v1976
        %v2061 = vunpack.c.l.b16 %v1977
        %v2062 = vunpack.c.h.b16 %v1977
        %v2063 = vunpack.c.l.b16 %v1978
        %v2064 = vunpack.c.h.b16 %v1978
        %v2065 = vunpack.c.l.b16 %v1979
        %v2066 = vunpack.c.h.b16 %v1979
        %v2067 = vunpack.c.l.b16 %v1980
        %v2068 = vunpack.c.h.b16 %v1980
        %v2069 = vunpack.c.l.b16 %v1981
        %v2070 = vunpack.c.h.b16 %v1981
        %v2071 = vunpack.c.l.b16 %v1982
        %v2072 = vunpack.c.h.b16 %v1982
        %v2073 = vunpack.c.l.b16 %v1983
        %v2074 = vunpack.c.h.b16 %v1983
        %v2075 = vunpack.c.l.b16 %v1984
        %v2076 = vunpack.c.h.b16 %v1984
        %v2077 = vunpack.c.l.b16 %v1985
        %v2078 = vunpack.c.h.b16 %v1985
        %v2079 = vunpack.c.l.b16 %v1986
        %v2080 = vunpack.c.h.b16 %v1986
        %v2081 = vunpack.c.l.b16 %v1987
        %v2082 = vunpack.c.h.b16 %v1987
        %v2083 = vunpack.c.l.b16 %v1988
        %v2084 = vunpack.c.h.b16 %v1988
        %v2085 = vunpack.c.l.b16 %v1989
        %v2086 = vunpack.c.h.b16 %v1989
        %v2087 = vunpack.c.l.b16 %v1990
        %v2088 = vunpack.c.h.b16 %v1990
        %v2089 = vunpack.c.l.b16 %v1991
        %v2090 = vunpack.c.h.b16 %v1991
        %v2091 = vunpack.c.l.b16 %v1992
        %v2092 = vunpack.c.h.b16 %v1992
        %v2093 = vunpack.c.l.b16 %v1993
        %v2094 = vunpack.c.h.b16 %v1993
        %v2095 = vunpack.c.l.b16 %v1994
        %v2096 = vunpack.c.h.b16 %v1994
        %v2097 = vunpack.c.l.b16 %v1995
        %v2098 = vunpack.c.h.b16 %v1995
        %v2099 = vunpack.c.l.b16 %v1996
        %v2100 = vunpack.c.h.b16 %v1996
        %v2101 = vunpack.c.l.b16 %v1997
        %v2102 = vunpack.c.h.b16 %v1997
        %v2103 = vunpack.c.l.b16 %v1998
        %v2104 = vunpack.c.h.b16 %v1998
        %v2105 = vunpack.c.l.b16 %v1999
        %v2106 = vunpack.c.h.b16 %v1999
        %v2107 = vunpack.c.l.b16 %v2000
        %v2108 = vunpack.c.h.b16 %v2000
        %v2109 = vunpack.c.l.b16 %v2001
        %v2110 = vunpack.c.h.b16 %v2001
        %v2111 = vunpack.c.l.b16 %v2002
        %v2112 = vunpack.c.h.b16 %v2002
        %v2113 = vunpack.c.l.b16 %v2003
        %v2114 = vunpack.c.h.b16 %v2003
        %v2115 = vunpack.c.l.b16 %v2004
        %v2116 = vunpack.c.h.b16 %v2004
        %v2117 = vpack.c.b16 %v2055, %v2053
        %v2118 = vpack.c.b16 %v2056, %v2054
        %v2119 = vpack.c.b16 %v2059, %v2057
        %v2120 = vpack.c.b16 %v2060, %v2058
        %v2121 = vpack.c.b16 %v2063, %v2061
        %v2122 = vpack.c.b16 %v2064, %v2062
        %v2123 = vpack.c.b16 %v2067, %v2065
        %v2124 = vpack.c.b16 %v2068, %v2066
        %v2125 = vpack.c.b16 %v2071, %v2069
        %v2126 = vpack.c.b16 %v2072, %v2070
        %v2127 = vpack.c.b16 %v2075, %v2073
        %v2128 = vpack.c.b16 %v2076, %v2074
        %v2129 = vpack.c.b16 %v2079, %v2077
        %v2130 = vpack.c.b16 %v2080, %v2078
        %v2131 = vpack.c.b16 %v2083, %v2081
        %v2132 = vpack.c.b16 %v2084, %v2082
        %v2133 = vpack.c.b16 %v2087, %v2085
        %v2134 = vpack.c.b16 %v2088, %v2086
        %v2135 = vpack.c.b16 %v2091, %v2089
        %v2136 = vpack.c.b16 %v2092, %v2090
        %v2137 = vpack.c.b16 %v2095, %v2093
        %v2138 = vpack.c.b16 %v2096, %v2094
        %v2139 = vpack.c.b16 %v2099, %v2097
        %v2140 = vpack.c.b16 %v2100, %v2098
        %v2141 = vpack.c.b16 %v2103, %v2101
        %v2142 = vpack.c.b16 %v2104, %v2102
        %v2143 = vpack.c.b16 %v2107, %v2105
        %v2144 = vpack.c.b16 %v2108, %v2106
        %v2145 = vpack.c.b16 %v2111, %v2109
        %v2146 = vpack.c.b16 %v2112, %v2110
        %v2147 = vpack.c.b16 %v2115, %v2113
        %v2148 = vpack.c.b16 %v2116, %v2114
        %2181 = vmatprep.subr.bf16.mxu0 %v2132
        %2182 = vmatpush1.bf16.msra.mxu0 %v2131
        %2183 = vmatprep.subr.bf16.mxu0 %v2130
        %2184 = vmatpush1.bf16.msra.mxu0 %v2129
        %2185 = vmatprep.subr.bf16.mxu0 %v2128
        %2186 = vmatpush1.bf16.msra.mxu0 %v2127
        %2187 = vmatprep.subr.bf16.mxu0 %v2126
        %2188 = vmatpush1.bf16.msra.mxu0 %v2125
        %2189 = vmatprep.subr.bf16.mxu0 %v2124
        %2190 = vmatpush1.bf16.msra.mxu0 %v2123
        %2191 = vmatprep.subr.bf16.mxu0 %v2122
        %2192 = vmatpush1.bf16.msra.mxu0 %v2121
        %2193 = vmatprep.subr.bf16.mxu0 %v2120
        %2194 = vmatpush1.bf16.msra.mxu0 %v2119
        %2195 = vmatprep.subr.bf16.mxu0 %v2118
        %2196 = vmatpush1.bf16.msra.mxu0 %v2117
        %2197 = vmatprep.subr.bf16.mxu0 %v2148
        %2198 = vmatpush2.bf16.msra.mxu0 %v2147
        %2199 = vmatprep.subr.bf16.mxu0 %v2146
        %2200 = vmatpush2.bf16.msra.mxu0 %v2145
        %2201 = vmatprep.subr.bf16.mxu0 %v2144
        %2202 = vmatpush2.bf16.msra.mxu0 %v2143
        %2203 = vmatprep.subr.bf16.mxu0 %v2142
        %2204 = vmatpush2.bf16.msra.mxu0 %v2141
        %2205 = vmatprep.subr.bf16.mxu0 %v2140
        %2206 = vmatpush2.bf16.msra.mxu0 %v2139
        %2207 = vmatprep.subr.bf16.mxu0 %v2138
        %2208 = vmatpush2.bf16.msra.mxu0 %v2137
        %2209 = vmatprep.subr.bf16.mxu0 %v2136
        %2210 = vmatpush2.bf16.msra.mxu0 %v2135
        %2211 = vmatprep.subr.bf16.mxu0 %v2134
        %2212 = vmatpush2.bf16.msra.mxu0 %v2133
        %2213 = vmatprep.mubr.bf16.mxu0 %v2006
        %2214 = vmatmul.mubr.bf16.gmra.mxu0 %v2005
        %v2215 = vpop.f32.mrf.mxu0
        %v2216 = vadd.f32 0.0, %v2215
        %v2217 = vpop.f32.mrf.mxu0
        %v2218 = vadd.f32 0.0, %v2217
        %v2219 = vpop.f32.mrf.mxu0
        %v2220 = vadd.f32 0.0, %v2219
        %v2221 = vpop.f32.mrf.mxu0
        %v2222 = vadd.f32 0.0, %v2221
        %2223 = vmatprep.mubr.bf16.mxu0 %v2008
        %2224 = vmatmul.mubr.bf16.gmra.mxu0 %v2007
        %v2225 = vpop.f32.mrf.mxu0
        %v2226 = vadd.f32 0.0, %v2225
        %v2227 = vpop.f32.mrf.mxu0
        %v2228 = vadd.f32 0.0, %v2227
        %v2229 = vpop.f32.mrf.mxu0
        %v2230 = vadd.f32 0.0, %v2229
        %v2231 = vpop.f32.mrf.mxu0
        %v2232 = vadd.f32 0.0, %v2231
        %2233 = vmatprep.mubr.bf16.mxu0 %v2010
        %2234 = vmatmul.mubr.bf16.gmra.mxu0 %v2009
        %v2235 = vpop.f32.mrf.mxu0
        %v2236 = vadd.f32 0.0, %v2235
        %v2237 = vpop.f32.mrf.mxu0
        %v2238 = vadd.f32 0.0, %v2237
        %v2239 = vpop.f32.mrf.mxu0
        %v2240 = vadd.f32 0.0, %v2239
        %v2241 = vpop.f32.mrf.mxu0
        %v2242 = vadd.f32 0.0, %v2241
        %2243 = vmatprep.mubr.bf16.mxu0 %v2012
        %2244 = vmatmul.mubr.bf16.gmra.mxu0 %v2011
        %v2245 = vpop.f32.mrf.mxu0
        %v2246 = vadd.f32 0.0, %v2245
        %v2247 = vpop.f32.mrf.mxu0
        %v2248 = vadd.f32 0.0, %v2247
        %v2249 = vpop.f32.mrf.mxu0
        %v2250 = vadd.f32 0.0, %v2249
        %v2251 = vpop.f32.mrf.mxu0
        %v2252 = vadd.f32 0.0, %v2251
        %2253 = vdwg.mxu0
        %v2254 = vpack.c.b16 %v1922, %v1920
        %v2255 = vpack.c.b16 %v1923, %v1921
        %v2256 = vpack.c.b16 %v1926, %v1924
        %v2257 = vpack.c.b16 %v1927, %v1925
        %v2258 = vpack.c.b16 %v1930, %v1928
        %v2259 = vpack.c.b16 %v1931, %v1929
        %v2260 = vpack.c.b16 %v1934, %v1932
        %v2261 = vpack.c.b16 %v1935, %v1933
        %v2302 = vunpack.c.l.b16 %v1936
        %v2303 = vunpack.c.h.b16 %v1936
        %v2304 = vunpack.c.l.b16 %v1937
        %v2305 = vunpack.c.h.b16 %v1937
        %v2306 = vunpack.c.l.b16 %v1938
        %v2307 = vunpack.c.h.b16 %v1938
        %v2308 = vunpack.c.l.b16 %v1939
        %v2309 = vunpack.c.h.b16 %v1939
        %v2310 = vunpack.c.l.b16 %v1940
        %v2311 = vunpack.c.h.b16 %v1940
        %v2312 = vunpack.c.l.b16 %v1941
        %v2313 = vunpack.c.h.b16 %v1941
        %v2314 = vunpack.c.l.b16 %v1942
        %v2315 = vunpack.c.h.b16 %v1942
        %v2316 = vunpack.c.l.b16 %v1943
        %v2317 = vunpack.c.h.b16 %v1943
        %v2318 = vunpack.c.l.b16 %v1944
        %v2319 = vunpack.c.h.b16 %v1944
        %v2320 = vunpack.c.l.b16 %v1945
        %v2321 = vunpack.c.h.b16 %v1945
        %v2322 = vunpack.c.l.b16 %v1946
        %v2323 = vunpack.c.h.b16 %v1946
        %v2324 = vunpack.c.l.b16 %v1947
        %v2325 = vunpack.c.h.b16 %v1947
        %v2326 = vunpack.c.l.b16 %v1948
        %v2327 = vunpack.c.h.b16 %v1948
        %v2328 = vunpack.c.l.b16 %v1949
        %v2329 = vunpack.c.h.b16 %v1949
        %v2330 = vunpack.c.l.b16 %v1950
        %v2331 = vunpack.c.h.b16 %v1950
        %v2332 = vunpack.c.l.b16 %v1951
        %v2333 = vunpack.c.h.b16 %v1951
        %v2334 = vunpack.c.l.b16 %v1952
        %v2335 = vunpack.c.h.b16 %v1952
        %v2336 = vunpack.c.l.b16 %v1953
        %v2337 = vunpack.c.h.b16 %v1953
        %v2338 = vunpack.c.l.b16 %v1954
        %v2339 = vunpack.c.h.b16 %v1954
        %v2340 = vunpack.c.l.b16 %v1955
        %v2341 = vunpack.c.h.b16 %v1955
        %v2342 = vunpack.c.l.b16 %v1956
        %v2343 = vunpack.c.h.b16 %v1956
        %v2344 = vunpack.c.l.b16 %v1957
        %v2345 = vunpack.c.h.b16 %v1957
        %v2346 = vunpack.c.l.b16 %v1958
        %v2347 = vunpack.c.h.b16 %v1958
        %v2348 = vunpack.c.l.b16 %v1959
        %v2349 = vunpack.c.h.b16 %v1959
        %v2350 = vunpack.c.l.b16 %v1960
        %v2351 = vunpack.c.h.b16 %v1960
        %v2352 = vunpack.c.l.b16 %v1961
        %v2353 = vunpack.c.h.b16 %v1961
        %v2354 = vunpack.c.l.b16 %v1962
        %v2355 = vunpack.c.h.b16 %v1962
        %v2356 = vunpack.c.l.b16 %v1963
        %v2357 = vunpack.c.h.b16 %v1963
        %v2358 = vunpack.c.l.b16 %v1964
        %v2359 = vunpack.c.h.b16 %v1964
        %v2360 = vunpack.c.l.b16 %v1965
        %v2361 = vunpack.c.h.b16 %v1965
        %v2362 = vunpack.c.l.b16 %v1966
        %v2363 = vunpack.c.h.b16 %v1966
        %v2364 = vunpack.c.l.b16 %v1967
        %v2365 = vunpack.c.h.b16 %v1967
        %v2366 = vpack.c.b16 %v2304, %v2302
        %v2367 = vpack.c.b16 %v2305, %v2303
        %v2368 = vpack.c.b16 %v2308, %v2306
        %v2369 = vpack.c.b16 %v2309, %v2307
        %v2370 = vpack.c.b16 %v2312, %v2310
        %v2371 = vpack.c.b16 %v2313, %v2311
        %v2372 = vpack.c.b16 %v2316, %v2314
        %v2373 = vpack.c.b16 %v2317, %v2315
        %v2374 = vpack.c.b16 %v2320, %v2318
        %v2375 = vpack.c.b16 %v2321, %v2319
        %v2376 = vpack.c.b16 %v2324, %v2322
        %v2377 = vpack.c.b16 %v2325, %v2323
        %v2378 = vpack.c.b16 %v2328, %v2326
        %v2379 = vpack.c.b16 %v2329, %v2327
        %v2380 = vpack.c.b16 %v2332, %v2330
        %v2381 = vpack.c.b16 %v2333, %v2331
        %v2382 = vpack.c.b16 %v2336, %v2334
        %v2383 = vpack.c.b16 %v2337, %v2335
        %v2384 = vpack.c.b16 %v2340, %v2338
        %v2385 = vpack.c.b16 %v2341, %v2339
        %v2386 = vpack.c.b16 %v2344, %v2342
        %v2387 = vpack.c.b16 %v2345, %v2343
        %v2388 = vpack.c.b16 %v2348, %v2346
        %v2389 = vpack.c.b16 %v2349, %v2347
        %v2390 = vpack.c.b16 %v2352, %v2350
        %v2391 = vpack.c.b16 %v2353, %v2351
        %v2392 = vpack.c.b16 %v2356, %v2354
        %v2393 = vpack.c.b16 %v2357, %v2355
        %v2394 = vpack.c.b16 %v2360, %v2358
        %v2395 = vpack.c.b16 %v2361, %v2359
        %v2396 = vpack.c.b16 %v2364, %v2362
        %v2397 = vpack.c.b16 %v2365, %v2363
        %2430 = vmatprep.subr.bf16.mxu0 %v2381
        %2431 = vmatpush1.bf16.msra.mxu0 %v2380
        %2432 = vmatprep.subr.bf16.mxu0 %v2379
        %2433 = vmatpush1.bf16.msra.mxu0 %v2378
        %2434 = vmatprep.subr.bf16.mxu0 %v2377
        %2435 = vmatpush1.bf16.msra.mxu0 %v2376
        %2436 = vmatprep.subr.bf16.mxu0 %v2375
        %2437 = vmatpush1.bf16.msra.mxu0 %v2374
        %2438 = vmatprep.subr.bf16.mxu0 %v2373
        %2439 = vmatpush1.bf16.msra.mxu0 %v2372
        %2440 = vmatprep.subr.bf16.mxu0 %v2371
        %2441 = vmatpush1.bf16.msra.mxu0 %v2370
        %2442 = vmatprep.subr.bf16.mxu0 %v2369
        %2443 = vmatpush1.bf16.msra.mxu0 %v2368
        %2444 = vmatprep.subr.bf16.mxu0 %v2367
        %2445 = vmatpush1.bf16.msra.mxu0 %v2366
        %2446 = vmatprep.subr.bf16.mxu0 %v2397
        %2447 = vmatpush2.bf16.msra.mxu0 %v2396
        %2448 = vmatprep.subr.bf16.mxu0 %v2395
        %2449 = vmatpush2.bf16.msra.mxu0 %v2394
        %2450 = vmatprep.subr.bf16.mxu0 %v2393
        %2451 = vmatpush2.bf16.msra.mxu0 %v2392
        %2452 = vmatprep.subr.bf16.mxu0 %v2391
        %2453 = vmatpush2.bf16.msra.mxu0 %v2390
        %2454 = vmatprep.subr.bf16.mxu0 %v2389
        %2455 = vmatpush2.bf16.msra.mxu0 %v2388
        %2456 = vmatprep.subr.bf16.mxu0 %v2387
        %2457 = vmatpush2.bf16.msra.mxu0 %v2386
        %2458 = vmatprep.subr.bf16.mxu0 %v2385
        %2459 = vmatpush2.bf16.msra.mxu0 %v2384
        %2460 = vmatprep.subr.bf16.mxu0 %v2383
        %2461 = vmatpush2.bf16.msra.mxu0 %v2382
        %2462 = vmatprep.mubr.bf16.mxu0 %v2255
        %2463 = vmatmul.mubr.bf16.gmra.mxu0 %v2254
        %v2464 = vpop.f32.mrf.mxu0
        %v2465 = vadd.f32 %v2216, %v2464
        %v2466 = vpop.f32.mrf.mxu0
        %v2467 = vadd.f32 %v2218, %v2466
        %v2468 = vpop.f32.mrf.mxu0
        %v2469 = vadd.f32 %v2220, %v2468
        %v2470 = vpop.f32.mrf.mxu0
        %v2471 = vadd.f32 %v2222, %v2470
        %2472 = vmatprep.mubr.bf16.mxu0 %v2257
        %2473 = vmatmul.mubr.bf16.gmra.mxu0 %v2256
        %v2474 = vpop.f32.mrf.mxu0
        %v2475 = vadd.f32 %v2226, %v2474
        %v2476 = vpop.f32.mrf.mxu0
        %v2477 = vadd.f32 %v2228, %v2476
        %v2478 = vpop.f32.mrf.mxu0
        %v2479 = vadd.f32 %v2230, %v2478
        %v2480 = vpop.f32.mrf.mxu0
        %v2481 = vadd.f32 %v2232, %v2480
        %2482 = vmatprep.mubr.bf16.mxu0 %v2259
        %2483 = vmatmul.mubr.bf16.gmra.mxu0 %v2258
        %v2484 = vpop.f32.mrf.mxu0
        %v2485 = vadd.f32 %v2236, %v2484
        %v2486 = vpop.f32.mrf.mxu0
        %v2487 = vadd.f32 %v2238, %v2486
        %v2488 = vpop.f32.mrf.mxu0
        %v2489 = vadd.f32 %v2240, %v2488
        %v2490 = vpop.f32.mrf.mxu0
        %v2491 = vadd.f32 %v2242, %v2490
        %2492 = vmatprep.mubr.bf16.mxu0 %v2261
        %2493 = vmatmul.mubr.bf16.gmra.mxu0 %v2260
        %v2494 = vpop.f32.mrf.mxu0
        %v2495 = vadd.f32 %v2246, %v2494
        %v2496 = vpop.f32.mrf.mxu0
        %v2497 = vadd.f32 %v2248, %v2496
        %v2498 = vpop.f32.mrf.mxu0
        %v2499 = vadd.f32 %v2250, %v2498
        %v2500 = vpop.f32.mrf.mxu0
        %v2501 = vadd.f32 %v2252, %v2500
        %2502 = vdwg.mxu0
        %v2505 = vunpack.c.l.b16 %v1239
        %v2506 = vunpack.c.l.b16 %v1240
        %s2507 = scalar_lea.vmem [#allocation6], 512
        %v2508 = vld [vmem:[%s2507] sm:$0xff]
        %v2509 = vld [vmem:[%s2507 + $0x8] sm:$0xff]
        %v2510 = vld [vmem:[%s2507 + $0x10] sm:$0xff]
        %v2511 = vld [vmem:[%s2507 + $0x18] sm:$0xff]
        %v2512 = vld [vmem:[%s2507 + $0x20] sm:$0xff]
        %v2513 = vld [vmem:[%s2507 + $0x28] sm:$0xff]
        %v2514 = vld [vmem:[%s2507 + $0x30] sm:$0xff]
        %v2515 = vld [vmem:[%s2507 + $0x38] sm:$0xff]
        %v2516 = vld [vmem:[%s2507 + $0x40] sm:$0xff]
        %v2517 = vld [vmem:[%s2507 + $0x48] sm:$0xff]
        %v2518 = vld [vmem:[%s2507 + $0x50] sm:$0xff]
        %v2519 = vld [vmem:[%s2507 + $0x58] sm:$0xff]
        %v2520 = vld [vmem:[%s2507 + $0x60] sm:$0xff]
        %v2521 = vld [vmem:[%s2507 + $0x68] sm:$0xff]
        %v2522 = vld [vmem:[%s2507 + $0x70] sm:$0xff]
        %v2523 = vld [vmem:[%s2507 + $0x78] sm:$0xff]
        %v2524 = vld [vmem:[%s2507 + $0x80] sm:$0xff]
        %v2525 = vld [vmem:[%s2507 + $0x88] sm:$0xff]
        %v2526 = vld [vmem:[%s2507 + $0x90] sm:$0xff]
        %v2527 = vld [vmem:[%s2507 + $0x98] sm:$0xff]
        %v2528 = vld [vmem:[%s2507 + $0xa0] sm:$0xff]
        %v2529 = vld [vmem:[%s2507 + $0xa8] sm:$0xff]
        %v2530 = vld [vmem:[%s2507 + $0xb0] sm:$0xff]
        %v2531 = vld [vmem:[%s2507 + $0xb8] sm:$0xff]
        %v2532 = vld [vmem:[%s2507 + $0xc0] sm:$0xff]
        %v2533 = vld [vmem:[%s2507 + $0xc8] sm:$0xff]
        %v2534 = vld [vmem:[%s2507 + $0xd0] sm:$0xff]
        %v2535 = vld [vmem:[%s2507 + $0xd8] sm:$0xff]
        %v2536 = vld [vmem:[%s2507 + $0xe0] sm:$0xff]
        %v2537 = vld [vmem:[%s2507 + $0xe8] sm:$0xff]
        %v2538 = vld [vmem:[%s2507 + $0xf0] sm:$0xff]
        %v2539 = vld [vmem:[%s2507 + $0xf8] sm:$0xff]
        %v2540 = vpack.c.b16 %v1547, %v2505
        %v2541 = vpack.c.b16 %v1548, %v2506
        %v2542 = vpack.c.b16 %v1551, %v1549
        %v2543 = vpack.c.b16 %v1552, %v1550
        %v2544 = vpack.c.b16 %v1555, %v1553
        %v2545 = vpack.c.b16 %v1556, %v1554
        %v2546 = vpack.c.b16 %v1559, %v1557
        %v2547 = vpack.c.b16 %v1560, %v1558
        %v2588 = vunpack.c.l.b16 %v2508
        %v2589 = vunpack.c.h.b16 %v2508
        %v2590 = vunpack.c.l.b16 %v2509
        %v2591 = vunpack.c.h.b16 %v2509
        %v2592 = vunpack.c.l.b16 %v2510
        %v2593 = vunpack.c.h.b16 %v2510
        %v2594 = vunpack.c.l.b16 %v2511
        %v2595 = vunpack.c.h.b16 %v2511
        %v2596 = vunpack.c.l.b16 %v2512
        %v2597 = vunpack.c.h.b16 %v2512
        %v2598 = vunpack.c.l.b16 %v2513
        %v2599 = vunpack.c.h.b16 %v2513
        %v2600 = vunpack.c.l.b16 %v2514
        %v2601 = vunpack.c.h.b16 %v2514
        %v2602 = vunpack.c.l.b16 %v2515
        %v2603 = vunpack.c.h.b16 %v2515
        %v2604 = vunpack.c.l.b16 %v2516
        %v2605 = vunpack.c.h.b16 %v2516
        %v2606 = vunpack.c.l.b16 %v2517
        %v2607 = vunpack.c.h.b16 %v2517
        %v2608 = vunpack.c.l.b16 %v2518
        %v2609 = vunpack.c.h.b16 %v2518
        %v2610 = vunpack.c.l.b16 %v2519
        %v2611 = vunpack.c.h.b16 %v2519
        %v2612 = vunpack.c.l.b16 %v2520
        %v2613 = vunpack.c.h.b16 %v2520
        %v2614 = vunpack.c.l.b16 %v2521
        %v2615 = vunpack.c.h.b16 %v2521
        %v2616 = vunpack.c.l.b16 %v2522
        %v2617 = vunpack.c.h.b16 %v2522
        %v2618 = vunpack.c.l.b16 %v2523
        %v2619 = vunpack.c.h.b16 %v2523
        %v2620 = vunpack.c.l.b16 %v2524
        %v2621 = vunpack.c.h.b16 %v2524
        %v2622 = vunpack.c.l.b16 %v2525
        %v2623 = vunpack.c.h.b16 %v2525
        %v2624 = vunpack.c.l.b16 %v2526
        %v2625 = vunpack.c.h.b16 %v2526
        %v2626 = vunpack.c.l.b16 %v2527
        %v2627 = vunpack.c.h.b16 %v2527
        %v2628 = vunpack.c.l.b16 %v2528
        %v2629 = vunpack.c.h.b16 %v2528
        %v2630 = vunpack.c.l.b16 %v2529
        %v2631 = vunpack.c.h.b16 %v2529
        %v2632 = vunpack.c.l.b16 %v2530
        %v2633 = vunpack.c.h.b16 %v2530
        %v2634 = vunpack.c.l.b16 %v2531
        %v2635 = vunpack.c.h.b16 %v2531
        %v2636 = vunpack.c.l.b16 %v2532
        %v2637 = vunpack.c.h.b16 %v2532
        %v2638 = vunpack.c.l.b16 %v2533
        %v2639 = vunpack.c.h.b16 %v2533
        %v2640 = vunpack.c.l.b16 %v2534
        %v2641 = vunpack.c.h.b16 %v2534
        %v2642 = vunpack.c.l.b16 %v2535
        %v2643 = vunpack.c.h.b16 %v2535
        %v2644 = vunpack.c.l.b16 %v2536
        %v2645 = vunpack.c.h.b16 %v2536
        %v2646 = vunpack.c.l.b16 %v2537
        %v2647 = vunpack.c.h.b16 %v2537
        %v2648 = vunpack.c.l.b16 %v2538
        %v2649 = vunpack.c.h.b16 %v2538
        %v2650 = vunpack.c.l.b16 %v2539
        %v2651 = vunpack.c.h.b16 %v2539
        %v2652 = vpack.c.b16 %v2590, %v2588
        %v2653 = vpack.c.b16 %v2591, %v2589
        %v2654 = vpack.c.b16 %v2594, %v2592
        %v2655 = vpack.c.b16 %v2595, %v2593
        %v2656 = vpack.c.b16 %v2598, %v2596
        %v2657 = vpack.c.b16 %v2599, %v2597
        %v2658 = vpack.c.b16 %v2602, %v2600
        %v2659 = vpack.c.b16 %v2603, %v2601
        %v2660 = vpack.c.b16 %v2606, %v2604
        %v2661 = vpack.c.b16 %v2607, %v2605
        %v2662 = vpack.c.b16 %v2610, %v2608
        %v2663 = vpack.c.b16 %v2611, %v2609
        %v2664 = vpack.c.b16 %v2614, %v2612
        %v2665 = vpack.c.b16 %v2615, %v2613
        %v2666 = vpack.c.b16 %v2618, %v2616
        %v2667 = vpack.c.b16 %v2619, %v2617
        %v2668 = vpack.c.b16 %v2622, %v2620
        %v2669 = vpack.c.b16 %v2623, %v2621
        %v2670 = vpack.c.b16 %v2626, %v2624
        %v2671 = vpack.c.b16 %v2627, %v2625
        %v2672 = vpack.c.b16 %v2630, %v2628
        %v2673 = vpack.c.b16 %v2631, %v2629
        %v2674 = vpack.c.b16 %v2634, %v2632
        %v2675 = vpack.c.b16 %v2635, %v2633
        %v2676 = vpack.c.b16 %v2638, %v2636
        %v2677 = vpack.c.b16 %v2639, %v2637
        %v2678 = vpack.c.b16 %v2642, %v2640
        %v2679 = vpack.c.b16 %v2643, %v2641
        %v2680 = vpack.c.b16 %v2646, %v2644
        %v2681 = vpack.c.b16 %v2647, %v2645
        %v2682 = vpack.c.b16 %v2650, %v2648
        %v2683 = vpack.c.b16 %v2651, %v2649
        %2716 = vmatprep.subr.bf16.mxu0 %v2667
        %2717 = vmatpush1.bf16.msra.mxu0 %v2666
        %2718 = vmatprep.subr.bf16.mxu0 %v2665
        %2719 = vmatpush1.bf16.msra.mxu0 %v2664
        %2720 = vmatprep.subr.bf16.mxu0 %v2663
        %2721 = vmatpush1.bf16.msra.mxu0 %v2662
        %2722 = vmatprep.subr.bf16.mxu0 %v2661
        %2723 = vmatpush1.bf16.msra.mxu0 %v2660
        %2724 = vmatprep.subr.bf16.mxu0 %v2659
        %2725 = vmatpush1.bf16.msra.mxu0 %v2658
        %2726 = vmatprep.subr.bf16.mxu0 %v2657
        %2727 = vmatpush1.bf16.msra.mxu0 %v2656
        %2728 = vmatprep.subr.bf16.mxu0 %v2655
        %2729 = vmatpush1.bf16.msra.mxu0 %v2654
        %2730 = vmatprep.subr.bf16.mxu0 %v2653
        %2731 = vmatpush1.bf16.msra.mxu0 %v2652
        %2732 = vmatprep.subr.bf16.mxu0 %v2683
        %2733 = vmatpush2.bf16.msra.mxu0 %v2682
        %2734 = vmatprep.subr.bf16.mxu0 %v2681
        %2735 = vmatpush2.bf16.msra.mxu0 %v2680
        %2736 = vmatprep.subr.bf16.mxu0 %v2679
        %2737 = vmatpush2.bf16.msra.mxu0 %v2678
        %2738 = vmatprep.subr.bf16.mxu0 %v2677
        %2739 = vmatpush2.bf16.msra.mxu0 %v2676
        %2740 = vmatprep.subr.bf16.mxu0 %v2675
        %2741 = vmatpush2.bf16.msra.mxu0 %v2674
        %2742 = vmatprep.subr.bf16.mxu0 %v2673
        %2743 = vmatpush2.bf16.msra.mxu0 %v2672
        %2744 = vmatprep.subr.bf16.mxu0 %v2671
        %2745 = vmatpush2.bf16.msra.mxu0 %v2670
        %2746 = vmatprep.subr.bf16.mxu0 %v2669
        %2747 = vmatpush2.bf16.msra.mxu0 %v2668
        %2748 = vmatprep.mubr.bf16.mxu0 %v2541
        %2749 = vmatmul.mubr.bf16.gmra.mxu0 %v2540
        %v2750 = vpop.f32.mrf.mxu0
        %v2751 = vadd.f32 0.0, %v2750
        %v2752 = vpop.f32.mrf.mxu0
        %v2753 = vadd.f32 0.0, %v2752
        %v2754 = vpop.f32.mrf.mxu0
        %v2755 = vadd.f32 0.0, %v2754
        %v2756 = vpop.f32.mrf.mxu0
        %v2757 = vadd.f32 0.0, %v2756
        %2758 = vmatprep.mubr.bf16.mxu0 %v2543
        %2759 = vmatmul.mubr.bf16.gmra.mxu0 %v2542
        %v2760 = vpop.f32.mrf.mxu0
        %v2761 = vadd.f32 0.0, %v2760
        %v2762 = vpop.f32.mrf.mxu0
        %v2763 = vadd.f32 0.0, %v2762
        %v2764 = vpop.f32.mrf.mxu0
        %v2765 = vadd.f32 0.0, %v2764
        %v2766 = vpop.f32.mrf.mxu0
        %v2767 = vadd.f32 0.0, %v2766
        %2768 = vmatprep.mubr.bf16.mxu0 %v2545
        %2769 = vmatmul.mubr.bf16.gmra.mxu0 %v2544
        %v2770 = vpop.f32.mrf.mxu0
        %v2771 = vadd.f32 0.0, %v2770
        %v2772 = vpop.f32.mrf.mxu0
        %v2773 = vadd.f32 0.0, %v2772
        %v2774 = vpop.f32.mrf.mxu0
        %v2775 = vadd.f32 0.0, %v2774
        %v2776 = vpop.f32.mrf.mxu0
        %v2777 = vadd.f32 0.0, %v2776
        %2778 = vmatprep.mubr.bf16.mxu0 %v2547
        %2779 = vmatmul.mubr.bf16.gmra.mxu0 %v2546
        %v2780 = vpop.f32.mrf.mxu0
        %v2781 = vadd.f32 0.0, %v2780
        %v2782 = vpop.f32.mrf.mxu0
        %v2783 = vadd.f32 0.0, %v2782
        %v2784 = vpop.f32.mrf.mxu0
        %v2785 = vadd.f32 0.0, %v2784
        %v2786 = vpop.f32.mrf.mxu0
        %v2787 = vadd.f32 0.0, %v2786
        %2788 = vdwg.mxu0
        %v2789 = vadd.f32 %v2465, %v2751
        %v2790 = vadd.f32 %v2467, %v2753
        %v2791 = vadd.f32 %v2469, %v2755
        %v2792 = vadd.f32 %v2471, %v2757
        %v2793 = vadd.f32 %v2475, %v2761
        %v2794 = vadd.f32 %v2477, %v2763
        %v2795 = vadd.f32 %v2479, %v2765
        %v2796 = vadd.f32 %v2481, %v2767
        %v2797 = vadd.f32 %v2485, %v2771
        %v2798 = vadd.f32 %v2487, %v2773
        %v2799 = vadd.f32 %v2489, %v2775
        %v2800 = vadd.f32 %v2491, %v2777
        %v2801 = vadd.f32 %v2495, %v2781
        %v2802 = vadd.f32 %v2497, %v2783
        %v2803 = vadd.f32 %v2499, %v2785
        %v2804 = vadd.f32 %v2501, %v2787
        %v2821 = vunpack.c.l.b16 %v1726
        %v2822 = vunpack.c.l.b16 %v1727
        %v2823 = vunpack.c.l.b16 %v1728
        %v2824 = vunpack.c.l.b16 %v1729
        %v2825 = vunpack.c.l.b16 %v1730
        %v2826 = vunpack.c.l.b16 %v1731
        %v2827 = vunpack.c.l.b16 %v1732
        %v2828 = vunpack.c.l.b16 %v1733
        %v2829 = vunpack.c.l.b16 %v1734
        %v2830 = vunpack.c.l.b16 %v1735
        %v2831 = vunpack.c.l.b16 %v1736
        %v2832 = vunpack.c.l.b16 %v1737
        %v2833 = vunpack.c.l.b16 %v1738
        %v2834 = vunpack.c.l.b16 %v1739
        %v2835 = vunpack.c.l.b16 %v1740
        %v2836 = vunpack.c.l.b16 %v1741
        %s2837 = scalar_lea.vmem [#allocation6], 768
        %v2838 = vld [vmem:[%s2837] sm:$0xff]
        %v2839 = vld [vmem:[%s2837 + $0x8] sm:$0xff]
        %v2840 = vld [vmem:[%s2837 + $0x10] sm:$0xff]
        %v2841 = vld [vmem:[%s2837 + $0x18] sm:$0xff]
        %v2842 = vld [vmem:[%s2837 + $0x20] sm:$0xff]
        %v2843 = vld [vmem:[%s2837 + $0x28] sm:$0xff]
        %v2844 = vld [vmem:[%s2837 + $0x30] sm:$0xff]
        %v2845 = vld [vmem:[%s2837 + $0x38] sm:$0xff]
        %v2846 = vld [vmem:[%s2837 + $0x40] sm:$0xff]
        %v2847 = vld [vmem:[%s2837 + $0x48] sm:$0xff]
        %v2848 = vld [vmem:[%s2837 + $0x50] sm:$0xff]
        %v2849 = vld [vmem:[%s2837 + $0x58] sm:$0xff]
        %v2850 = vld [vmem:[%s2837 + $0x60] sm:$0xff]
        %v2851 = vld [vmem:[%s2837 + $0x68] sm:$0xff]
        %v2852 = vld [vmem:[%s2837 + $0x70] sm:$0xff]
        %v2853 = vld [vmem:[%s2837 + $0x78] sm:$0xff]
        %v2854 = vld [vmem:[%s2837 + $0x80] sm:$0xff]
        %v2855 = vld [vmem:[%s2837 + $0x88] sm:$0xff]
        %v2856 = vld [vmem:[%s2837 + $0x90] sm:$0xff]
        %v2857 = vld [vmem:[%s2837 + $0x98] sm:$0xff]
        %v2858 = vld [vmem:[%s2837 + $0xa0] sm:$0xff]
        %v2859 = vld [vmem:[%s2837 + $0xa8] sm:$0xff]
        %v2860 = vld [vmem:[%s2837 + $0xb0] sm:$0xff]
        %v2861 = vld [vmem:[%s2837 + $0xb8] sm:$0xff]
        %v2862 = vld [vmem:[%s2837 + $0xc0] sm:$0xff]
        %v2863 = vld [vmem:[%s2837 + $0xc8] sm:$0xff]
        %v2864 = vld [vmem:[%s2837 + $0xd0] sm:$0xff]
        %v2865 = vld [vmem:[%s2837 + $0xd8] sm:$0xff]
        %v2866 = vld [vmem:[%s2837 + $0xe0] sm:$0xff]
        %v2867 = vld [vmem:[%s2837 + $0xe8] sm:$0xff]
        %v2868 = vld [vmem:[%s2837 + $0xf0] sm:$0xff]
        %v2869 = vld [vmem:[%s2837 + $0xf8] sm:$0xff]
        %v2870 = vpack.c.b16 %v2823, %v2821
        %v2871 = vpack.c.b16 %v2824, %v2822
        %v2872 = vpack.c.b16 %v2827, %v2825
        %v2873 = vpack.c.b16 %v2828, %v2826
        %v2874 = vpack.c.b16 %v2831, %v2829
        %v2875 = vpack.c.b16 %v2832, %v2830
        %v2876 = vpack.c.b16 %v2835, %v2833
        %v2877 = vpack.c.b16 %v2836, %v2834
        %v2918 = vunpack.c.l.b16 %v2838
        %v2919 = vunpack.c.h.b16 %v2838
        %v2920 = vunpack.c.l.b16 %v2839
        %v2921 = vunpack.c.h.b16 %v2839
        %v2922 = vunpack.c.l.b16 %v2840
        %v2923 = vunpack.c.h.b16 %v2840
        %v2924 = vunpack.c.l.b16 %v2841
        %v2925 = vunpack.c.h.b16 %v2841
        %v2926 = vunpack.c.l.b16 %v2842
        %v2927 = vunpack.c.h.b16 %v2842
        %v2928 = vunpack.c.l.b16 %v2843
        %v2929 = vunpack.c.h.b16 %v2843
        %v2930 = vunpack.c.l.b16 %v2844
        %v2931 = vunpack.c.h.b16 %v2844
        %v2932 = vunpack.c.l.b16 %v2845
        %v2933 = vunpack.c.h.b16 %v2845
        %v2934 = vunpack.c.l.b16 %v2846
        %v2935 = vunpack.c.h.b16 %v2846
        %v2936 = vunpack.c.l.b16 %v2847
        %v2937 = vunpack.c.h.b16 %v2847
        %v2938 = vunpack.c.l.b16 %v2848
        %v2939 = vunpack.c.h.b16 %v2848
        %v2940 = vunpack.c.l.b16 %v2849
        %v2941 = vunpack.c.h.b16 %v2849
        %v2942 = vunpack.c.l.b16 %v2850
        %v2943 = vunpack.c.h.b16 %v2850
        %v2944 = vunpack.c.l.b16 %v2851
        %v2945 = vunpack.c.h.b16 %v2851
        %v2946 = vunpack.c.l.b16 %v2852
        %v2947 = vunpack.c.h.b16 %v2852
        %v2948 = vunpack.c.l.b16 %v2853
        %v2949 = vunpack.c.h.b16 %v2853
        %v2950 = vunpack.c.l.b16 %v2854
        %v2951 = vunpack.c.h.b16 %v2854
        %v2952 = vunpack.c.l.b16 %v2855
        %v2953 = vunpack.c.h.b16 %v2855
        %v2954 = vunpack.c.l.b16 %v2856
        %v2955 = vunpack.c.h.b16 %v2856
        %v2956 = vunpack.c.l.b16 %v2857
        %v2957 = vunpack.c.h.b16 %v2857
        %v2958 = vunpack.c.l.b16 %v2858
        %v2959 = vunpack.c.h.b16 %v2858
        %v2960 = vunpack.c.l.b16 %v2859
        %v2961 = vunpack.c.h.b16 %v2859
        %v2962 = vunpack.c.l.b16 %v2860
        %v2963 = vunpack.c.h.b16 %v2860
        %v2964 = vunpack.c.l.b16 %v2861
        %v2965 = vunpack.c.h.b16 %v2861
        %v2966 = vunpack.c.l.b16 %v2862
        %v2967 = vunpack.c.h.b16 %v2862
        %v2968 = vunpack.c.l.b16 %v2863
        %v2969 = vunpack.c.h.b16 %v2863
        %v2970 = vunpack.c.l.b16 %v2864
        %v2971 = vunpack.c.h.b16 %v2864
        %v2972 = vunpack.c.l.b16 %v2865
        %v2973 = vunpack.c.h.b16 %v2865
        %v2974 = vunpack.c.l.b16 %v2866
        %v2975 = vunpack.c.h.b16 %v2866
        %v2976 = vunpack.c.l.b16 %v2867
        %v2977 = vunpack.c.h.b16 %v2867
        %v2978 = vunpack.c.l.b16 %v2868
        %v2979 = vunpack.c.h.b16 %v2868
        %v2980 = vunpack.c.l.b16 %v2869
        %v2981 = vunpack.c.h.b16 %v2869
        %v2982 = vpack.c.b16 %v2920, %v2918
        %v2983 = vpack.c.b16 %v2921, %v2919
        %v2984 = vpack.c.b16 %v2924, %v2922
        %v2985 = vpack.c.b16 %v2925, %v2923
        %v2986 = vpack.c.b16 %v2928, %v2926
        %v2987 = vpack.c.b16 %v2929, %v2927
        %v2988 = vpack.c.b16 %v2932, %v2930
        %v2989 = vpack.c.b16 %v2933, %v2931
        %v2990 = vpack.c.b16 %v2936, %v2934
        %v2991 = vpack.c.b16 %v2937, %v2935
        %v2992 = vpack.c.b16 %v2940, %v2938
        %v2993 = vpack.c.b16 %v2941, %v2939
        %v2994 = vpack.c.b16 %v2944, %v2942
        %v2995 = vpack.c.b16 %v2945, %v2943
        %v2996 = vpack.c.b16 %v2948, %v2946
        %v2997 = vpack.c.b16 %v2949, %v2947
        %v2998 = vpack.c.b16 %v2952, %v2950
        %v2999 = vpack.c.b16 %v2953, %v2951
        %v3000 = vpack.c.b16 %v2956, %v2954
        %v3001 = vpack.c.b16 %v2957, %v2955
        %v3002 = vpack.c.b16 %v2960, %v2958
        %v3003 = vpack.c.b16 %v2961, %v2959
        %v3004 = vpack.c.b16 %v2964, %v2962
        %v3005 = vpack.c.b16 %v2965, %v2963
        %v3006 = vpack.c.b16 %v2968, %v2966
        %v3007 = vpack.c.b16 %v2969, %v2967
        %v3008 = vpack.c.b16 %v2972, %v2970
        %v3009 = vpack.c.b16 %v2973, %v2971
        %v3010 = vpack.c.b16 %v2976, %v2974
        %v3011 = vpack.c.b16 %v2977, %v2975
        %v3012 = vpack.c.b16 %v2980, %v2978
        %v3013 = vpack.c.b16 %v2981, %v2979
        %3046 = vmatprep.subr.bf16.mxu0 %v2997
        %3047 = vmatpush1.bf16.msra.mxu0 %v2996
        %3048 = vmatprep.subr.bf16.mxu0 %v2995
        %3049 = vmatpush1.bf16.msra.mxu0 %v2994
        %3050 = vmatprep.subr.bf16.mxu0 %v2993
        %3051 = vmatpush1.bf16.msra.mxu0 %v2992
        %3052 = vmatprep.subr.bf16.mxu0 %v2991
        %3053 = vmatpush1.bf16.msra.mxu0 %v2990
        %3054 = vmatprep.subr.bf16.mxu0 %v2989
        %3055 = vmatpush1.bf16.msra.mxu0 %v2988
        %3056 = vmatprep.subr.bf16.mxu0 %v2987
        %3057 = vmatpush1.bf16.msra.mxu0 %v2986
        %3058 = vmatprep.subr.bf16.mxu0 %v2985
        %3059 = vmatpush1.bf16.msra.mxu0 %v2984
        %3060 = vmatprep.subr.bf16.mxu0 %v2983
        %3061 = vmatpush1.bf16.msra.mxu0 %v2982
        %3062 = vmatprep.subr.bf16.mxu0 %v3013
        %3063 = vmatpush2.bf16.msra.mxu0 %v3012
        %3064 = vmatprep.subr.bf16.mxu0 %v3011
        %3065 = vmatpush2.bf16.msra.mxu0 %v3010
        %3066 = vmatprep.subr.bf16.mxu0 %v3009
        %3067 = vmatpush2.bf16.msra.mxu0 %v3008
        %3068 = vmatprep.subr.bf16.mxu0 %v3007
        %3069 = vmatpush2.bf16.msra.mxu0 %v3006
        %3070 = vmatprep.subr.bf16.mxu0 %v3005
        %3071 = vmatpush2.bf16.msra.mxu0 %v3004
        %3072 = vmatprep.subr.bf16.mxu0 %v3003
        %3073 = vmatpush2.bf16.msra.mxu0 %v3002
        %3074 = vmatprep.subr.bf16.mxu0 %v3001
        %3075 = vmatpush2.bf16.msra.mxu0 %v3000
        %3076 = vmatprep.subr.bf16.mxu0 %v2999
        %3077 = vmatpush2.bf16.msra.mxu0 %v2998
        %3078 = vmatprep.mubr.bf16.mxu0 %v2871
        %3079 = vmatmul.mubr.bf16.gmra.mxu0 %v2870
        %v3080 = vpop.f32.mrf.mxu0
        %v3081 = vadd.f32 0.0, %v3080
        %v3082 = vpop.f32.mrf.mxu0
        %v3083 = vadd.f32 0.0, %v3082
        %v3084 = vpop.f32.mrf.mxu0
        %v3085 = vadd.f32 0.0, %v3084
        %v3086 = vpop.f32.mrf.mxu0
        %v3087 = vadd.f32 0.0, %v3086
        %3088 = vmatprep.mubr.bf16.mxu0 %v2873
        %3089 = vmatmul.mubr.bf16.gmra.mxu0 %v2872
        %v3090 = vpop.f32.mrf.mxu0
        %v3091 = vadd.f32 0.0, %v3090
        %v3092 = vpop.f32.mrf.mxu0
        %v3093 = vadd.f32 0.0, %v3092
        %v3094 = vpop.f32.mrf.mxu0
        %v3095 = vadd.f32 0.0, %v3094
        %v3096 = vpop.f32.mrf.mxu0
        %v3097 = vadd.f32 0.0, %v3096
        %3098 = vmatprep.mubr.bf16.mxu0 %v2875
        %3099 = vmatmul.mubr.bf16.gmra.mxu0 %v2874
        %v3100 = vpop.f32.mrf.mxu0
        %v3101 = vadd.f32 0.0, %v3100
        %v3102 = vpop.f32.mrf.mxu0
        %v3103 = vadd.f32 0.0, %v3102
        %v3104 = vpop.f32.mrf.mxu0
        %v3105 = vadd.f32 0.0, %v3104
        %v3106 = vpop.f32.mrf.mxu0
        %v3107 = vadd.f32 0.0, %v3106
        %3108 = vmatprep.mubr.bf16.mxu0 %v2877
        %3109 = vmatmul.mubr.bf16.gmra.mxu0 %v2876
        %v3110 = vpop.f32.mrf.mxu0
        %v3111 = vadd.f32 0.0, %v3110
        %v3112 = vpop.f32.mrf.mxu0
        %v3113 = vadd.f32 0.0, %v3112
        %v3114 = vpop.f32.mrf.mxu0
        %v3115 = vadd.f32 0.0, %v3114
        %v3116 = vpop.f32.mrf.mxu0
        %v3117 = vadd.f32 0.0, %v3116
        %3118 = vdwg.mxu0
        %v3119 = vadd.f32 %v2789, %v3081
        %v3120 = vadd.f32 %v2790, %v3083
        %v3121 = vadd.f32 %v2791, %v3085
        %v3122 = vadd.f32 %v2792, %v3087
        %v3123 = vadd.f32 %v2793, %v3091
        %v3124 = vadd.f32 %v2794, %v3093
        %v3125 = vadd.f32 %v2795, %v3095
        %v3126 = vadd.f32 %v2796, %v3097
        %v3127 = vadd.f32 %v2797, %v3101
        %v3128 = vadd.f32 %v2798, %v3103
        %v3129 = vadd.f32 %v2799, %v3105
        %v3130 = vadd.f32 %v2800, %v3107
        %v3131 = vadd.f32 %v2801, %v3111
        %v3132 = vadd.f32 %v2802, %v3113
        %v3133 = vadd.f32 %v2803, %v3115
        %v3134 = vadd.f32 %v2804, %v3117
        %s3135 = scalar_lea.vmem [#allocation6], 1024
        %v3136 = vld [vmem:[%s3135] sm:$0xff]
        %v3137 = vld [vmem:[%s3135 + $0x8] sm:$0xff]
        %v3138 = vld [vmem:[%s3135 + $0x10] sm:$0xff]
        %v3139 = vld [vmem:[%s3135 + $0x18] sm:$0xff]
        %v3140 = vld [vmem:[%s3135 + $0x20] sm:$0xff]
        %v3141 = vld [vmem:[%s3135 + $0x28] sm:$0xff]
        %v3142 = vld [vmem:[%s3135 + $0x30] sm:$0xff]
        %v3143 = vld [vmem:[%s3135 + $0x38] sm:$0xff]
        %v3144 = vld [vmem:[%s3135 + $0x40] sm:$0xff]
        %v3145 = vld [vmem:[%s3135 + $0x48] sm:$0xff]
        %v3146 = vld [vmem:[%s3135 + $0x50] sm:$0xff]
        %v3147 = vld [vmem:[%s3135 + $0x58] sm:$0xff]
        %v3148 = vld [vmem:[%s3135 + $0x60] sm:$0xff]
        %v3149 = vld [vmem:[%s3135 + $0x68] sm:$0xff]
        %v3150 = vld [vmem:[%s3135 + $0x70] sm:$0xff]
        %v3151 = vld [vmem:[%s3135 + $0x78] sm:$0xff]
        %v3152 = vld [vmem:[%s3135 + $0x80] sm:$0xff]
        %v3153 = vld [vmem:[%s3135 + $0x88] sm:$0xff]
        %v3154 = vld [vmem:[%s3135 + $0x90] sm:$0xff]
        %v3155 = vld [vmem:[%s3135 + $0x98] sm:$0xff]
        %v3156 = vld [vmem:[%s3135 + $0xa0] sm:$0xff]
        %v3157 = vld [vmem:[%s3135 + $0xa8] sm:$0xff]
        %v3158 = vld [vmem:[%s3135 + $0xb0] sm:$0xff]
        %v3159 = vld [vmem:[%s3135 + $0xb8] sm:$0xff]
        %v3160 = vld [vmem:[%s3135 + $0xc0] sm:$0xff]
        %v3161 = vld [vmem:[%s3135 + $0xc8] sm:$0xff]
        %v3162 = vld [vmem:[%s3135 + $0xd0] sm:$0xff]
        %v3163 = vld [vmem:[%s3135 + $0xd8] sm:$0xff]
        %v3164 = vld [vmem:[%s3135 + $0xe0] sm:$0xff]
        %v3165 = vld [vmem:[%s3135 + $0xe8] sm:$0xff]
        %v3166 = vld [vmem:[%s3135 + $0xf0] sm:$0xff]
        %v3167 = vld [vmem:[%s3135 + $0xf8] sm:$0xff]
        %v3200 = vunpack.c.l.b16 %v3136
        %v3201 = vunpack.c.h.b16 %v3136
        %v3202 = vunpack.c.l.b16 %v3137
        %v3203 = vunpack.c.h.b16 %v3137
        %v3204 = vunpack.c.l.b16 %v3138
        %v3205 = vunpack.c.h.b16 %v3138
        %v3206 = vunpack.c.l.b16 %v3139
        %v3207 = vunpack.c.h.b16 %v3139
        %v3208 = vunpack.c.l.b16 %v3140
        %v3209 = vunpack.c.h.b16 %v3140
        %v3210 = vunpack.c.l.b16 %v3141
        %v3211 = vunpack.c.h.b16 %v3141
        %v3212 = vunpack.c.l.b16 %v3142
        %v3213 = vunpack.c.h.b16 %v3142
        %v3214 = vunpack.c.l.b16 %v3143
        %v3215 = vunpack.c.h.b16 %v3143
        %v3216 = vunpack.c.l.b16 %v3144
        %v3217 = vunpack.c.h.b16 %v3144
        %v3218 = vunpack.c.l.b16 %v3145
        %v3219 = vunpack.c.h.b16 %v3145
        %v3220 = vunpack.c.l.b16 %v3146
        %v3221 = vunpack.c.h.b16 %v3146
        %v3222 = vunpack.c.l.b16 %v3147
        %v3223 = vunpack.c.h.b16 %v3147
        %v3224 = vunpack.c.l.b16 %v3148
        %v3225 = vunpack.c.h.b16 %v3148
        %v3226 = vunpack.c.l.b16 %v3149
        %v3227 = vunpack.c.h.b16 %v3149
        %v3228 = vunpack.c.l.b16 %v3150
        %v3229 = vunpack.c.h.b16 %v3150
        %v3230 = vunpack.c.l.b16 %v3151
        %v3231 = vunpack.c.h.b16 %v3151
        %v3232 = vunpack.c.l.b16 %v3152
        %v3233 = vunpack.c.h.b16 %v3152
        %v3234 = vunpack.c.l.b16 %v3153
        %v3235 = vunpack.c.h.b16 %v3153
        %v3236 = vunpack.c.l.b16 %v3154
        %v3237 = vunpack.c.h.b16 %v3154
        %v3238 = vunpack.c.l.b16 %v3155
        %v3239 = vunpack.c.h.b16 %v3155
        %v3240 = vunpack.c.l.b16 %v3156
        %v3241 = vunpack.c.h.b16 %v3156
        %v3242 = vunpack.c.l.b16 %v3157
        %v3243 = vunpack.c.h.b16 %v3157
        %v3244 = vunpack.c.l.b16 %v3158
        %v3245 = vunpack.c.h.b16 %v3158
        %v3246 = vunpack.c.l.b16 %v3159
        %v3247 = vunpack.c.h.b16 %v3159
        %v3248 = vunpack.c.l.b16 %v3160
        %v3249 = vunpack.c.h.b16 %v3160
        %v3250 = vunpack.c.l.b16 %v3161
        %v3251 = vunpack.c.h.b16 %v3161
        %v3252 = vunpack.c.l.b16 %v3162
        %v3253 = vunpack.c.h.b16 %v3162
        %v3254 = vunpack.c.l.b16 %v3163
        %v3255 = vunpack.c.h.b16 %v3163
        %v3256 = vunpack.c.l.b16 %v3164
        %v3257 = vunpack.c.h.b16 %v3164
        %v3258 = vunpack.c.l.b16 %v3165
        %v3259 = vunpack.c.h.b16 %v3165
        %v3260 = vunpack.c.l.b16 %v3166
        %v3261 = vunpack.c.h.b16 %v3166
        %v3262 = vunpack.c.l.b16 %v3167
        %v3263 = vunpack.c.h.b16 %v3167
        %v3264 = vpack.c.b16 %v3202, %v3200
        %v3265 = vpack.c.b16 %v3203, %v3201
        %v3266 = vpack.c.b16 %v3206, %v3204
        %v3267 = vpack.c.b16 %v3207, %v3205
        %v3268 = vpack.c.b16 %v3210, %v3208
        %v3269 = vpack.c.b16 %v3211, %v3209
        %v3270 = vpack.c.b16 %v3214, %v3212
        %v3271 = vpack.c.b16 %v3215, %v3213
        %v3272 = vpack.c.b16 %v3218, %v3216
        %v3273 = vpack.c.b16 %v3219, %v3217
        %v3274 = vpack.c.b16 %v3222, %v3220
        %v3275 = vpack.c.b16 %v3223, %v3221
        %v3276 = vpack.c.b16 %v3226, %v3224
        %v3277 = vpack.c.b16 %v3227, %v3225
        %v3278 = vpack.c.b16 %v3230, %v3228
        %v3279 = vpack.c.b16 %v3231, %v3229
        %v3280 = vpack.c.b16 %v3234, %v3232
        %v3281 = vpack.c.b16 %v3235, %v3233
        %v3282 = vpack.c.b16 %v3238, %v3236
        %v3283 = vpack.c.b16 %v3239, %v3237
        %v3284 = vpack.c.b16 %v3242, %v3240
        %v3285 = vpack.c.b16 %v3243, %v3241
        %v3286 = vpack.c.b16 %v3246, %v3244
        %v3287 = vpack.c.b16 %v3247, %v3245
        %v3288 = vpack.c.b16 %v3250, %v3248
        %v3289 = vpack.c.b16 %v3251, %v3249
        %v3290 = vpack.c.b16 %v3254, %v3252
        %v3291 = vpack.c.b16 %v3255, %v3253
        %v3292 = vpack.c.b16 %v3258, %v3256
        %v3293 = vpack.c.b16 %v3259, %v3257
        %v3294 = vpack.c.b16 %v3262, %v3260
        %v3295 = vpack.c.b16 %v3263, %v3261
        %3328 = vmatprep.subr.bf16.mxu0 %v3279
        %3329 = vmatpush1.bf16.msra.mxu0 %v3278
        %3330 = vmatprep.subr.bf16.mxu0 %v3277
        %3331 = vmatpush1.bf16.msra.mxu0 %v3276
        %3332 = vmatprep.subr.bf16.mxu0 %v3275
        %3333 = vmatpush1.bf16.msra.mxu0 %v3274
        %3334 = vmatprep.subr.bf16.mxu0 %v3273
        %3335 = vmatpush1.bf16.msra.mxu0 %v3272
        %3336 = vmatprep.subr.bf16.mxu0 %v3271
        %3337 = vmatpush1.bf16.msra.mxu0 %v3270
        %3338 = vmatprep.subr.bf16.mxu0 %v3269
        %3339 = vmatpush1.bf16.msra.mxu0 %v3268
        %3340 = vmatprep.subr.bf16.mxu0 %v3267
        %3341 = vmatpush1.bf16.msra.mxu0 %v3266
        %3342 = vmatprep.subr.bf16.mxu0 %v3265
        %3343 = vmatpush1.bf16.msra.mxu0 %v3264
        %3344 = vmatprep.subr.bf16.mxu0 %v3295
        %3345 = vmatpush2.bf16.msra.mxu0 %v3294
        %3346 = vmatprep.subr.bf16.mxu0 %v3293
        %3347 = vmatpush2.bf16.msra.mxu0 %v3292
        %3348 = vmatprep.subr.bf16.mxu0 %v3291
        %3349 = vmatpush2.bf16.msra.mxu0 %v3290
        %3350 = vmatprep.subr.bf16.mxu0 %v3289
        %3351 = vmatpush2.bf16.msra.mxu0 %v3288
        %3352 = vmatprep.subr.bf16.mxu0 %v3287
        %3353 = vmatpush2.bf16.msra.mxu0 %v3286
        %3354 = vmatprep.subr.bf16.mxu0 %v3285
        %3355 = vmatpush2.bf16.msra.mxu0 %v3284
        %3356 = vmatprep.subr.bf16.mxu0 %v3283
        %3357 = vmatpush2.bf16.msra.mxu0 %v3282
        %3358 = vmatprep.subr.bf16.mxu0 %v3281
        %3359 = vmatpush2.bf16.msra.mxu0 %v3280
        %3360 = vmatprep.mubr.bf16.mxu0 %v955
        %3361 = vmatmul.mubr.bf16.gmra.mxu0 %v954
        %v3362 = vpop.f32.mrf.mxu0
        %v3363 = vadd.f32 0.0, %v3362
        %v3364 = vpop.f32.mrf.mxu0
        %v3365 = vadd.f32 0.0, %v3364
        %v3366 = vpop.f32.mrf.mxu0
        %v3367 = vadd.f32 0.0, %v3366
        %v3368 = vpop.f32.mrf.mxu0
        %v3369 = vadd.f32 0.0, %v3368
        %3370 = vmatprep.mubr.bf16.mxu0 %v957
        %3371 = vmatmul.mubr.bf16.gmra.mxu0 %v956
        %v3372 = vpop.f32.mrf.mxu0
        %v3373 = vadd.f32 0.0, %v3372
        %v3374 = vpop.f32.mrf.mxu0
        %v3375 = vadd.f32 0.0, %v3374
        %v3376 = vpop.f32.mrf.mxu0
        %v3377 = vadd.f32 0.0, %v3376
        %v3378 = vpop.f32.mrf.mxu0
        %v3379 = vadd.f32 0.0, %v3378
        %3380 = vmatprep.mubr.bf16.mxu0 %v959
        %3381 = vmatmul.mubr.bf16.gmra.mxu0 %v958
        %v3382 = vpop.f32.mrf.mxu0
        %v3383 = vadd.f32 0.0, %v3382
        %v3384 = vpop.f32.mrf.mxu0
        %v3385 = vadd.f32 0.0, %v3384
        %v3386 = vpop.f32.mrf.mxu0
        %v3387 = vadd.f32 0.0, %v3386
        %v3388 = vpop.f32.mrf.mxu0
        %v3389 = vadd.f32 0.0, %v3388
        %3390 = vmatprep.mubr.bf16.mxu0 %v961
        %3391 = vmatmul.mubr.bf16.gmra.mxu0 %v960
        %v3392 = vpop.f32.mrf.mxu0
        %v3393 = vadd.f32 0.0, %v3392
        %v3394 = vpop.f32.mrf.mxu0
        %v3395 = vadd.f32 0.0, %v3394
        %v3396 = vpop.f32.mrf.mxu0
        %v3397 = vadd.f32 0.0, %v3396
        %v3398 = vpop.f32.mrf.mxu0
        %v3399 = vadd.f32 0.0, %v3398
        %3400 = vdwg.mxu0
        %v3401 = vadd.f32 %v3119, %v3363
        %v3402 = vadd.f32 %v3120, %v3365
        %v3403 = vadd.f32 %v3121, %v3367
        %v3404 = vadd.f32 %v3122, %v3369
        %v3405 = vadd.f32 %v3123, %v3373
        %v3406 = vadd.f32 %v3124, %v3375
        %v3407 = vadd.f32 %v3125, %v3377
        %v3408 = vadd.f32 %v3126, %v3379
        %v3409 = vadd.f32 %v3127, %v3383
        %v3410 = vadd.f32 %v3128, %v3385
        %v3411 = vadd.f32 %v3129, %v3387
        %v3412 = vadd.f32 %v3130, %v3389
        %v3413 = vadd.f32 %v3131, %v3393
        %v3414 = vadd.f32 %v3132, %v3395
        %v3415 = vadd.f32 %v3133, %v3397
        %v3416 = vadd.f32 %v3134, %v3399
        %s3417 = scalar_lea.vmem [#allocation6], 1280
        %v3418 = vld [vmem:[%s3417] sm:$0xff]
        %v3419 = vld [vmem:[%s3417 + $0x8] sm:$0xff]
        %v3420 = vld [vmem:[%s3417 + $0x10] sm:$0xff]
        %v3421 = vld [vmem:[%s3417 + $0x18] sm:$0xff]
        %v3422 = vld [vmem:[%s3417 + $0x20] sm:$0xff]
        %v3423 = vld [vmem:[%s3417 + $0x28] sm:$0xff]
        %v3424 = vld [vmem:[%s3417 + $0x30] sm:$0xff]
        %v3425 = vld [vmem:[%s3417 + $0x38] sm:$0xff]
        %v3426 = vld [vmem:[%s3417 + $0x40] sm:$0xff]
        %v3427 = vld [vmem:[%s3417 + $0x48] sm:$0xff]
        %v3428 = vld [vmem:[%s3417 + $0x50] sm:$0xff]
        %v3429 = vld [vmem:[%s3417 + $0x58] sm:$0xff]
        %v3430 = vld [vmem:[%s3417 + $0x60] sm:$0xff]
        %v3431 = vld [vmem:[%s3417 + $0x68] sm:$0xff]
        %v3432 = vld [vmem:[%s3417 + $0x70] sm:$0xff]
        %v3433 = vld [vmem:[%s3417 + $0x78] sm:$0xff]
        %v3434 = vld [vmem:[%s3417 + $0x80] sm:$0xff]
        %v3435 = vld [vmem:[%s3417 + $0x88] sm:$0xff]
        %v3436 = vld [vmem:[%s3417 + $0x90] sm:$0xff]
        %v3437 = vld [vmem:[%s3417 + $0x98] sm:$0xff]
        %v3438 = vld [vmem:[%s3417 + $0xa0] sm:$0xff]
        %v3439 = vld [vmem:[%s3417 + $0xa8] sm:$0xff]
        %v3440 = vld [vmem:[%s3417 + $0xb0] sm:$0xff]
        %v3441 = vld [vmem:[%s3417 + $0xb8] sm:$0xff]
        %v3442 = vld [vmem:[%s3417 + $0xc0] sm:$0xff]
        %v3443 = vld [vmem:[%s3417 + $0xc8] sm:$0xff]
        %v3444 = vld [vmem:[%s3417 + $0xd0] sm:$0xff]
        %v3445 = vld [vmem:[%s3417 + $0xd8] sm:$0xff]
        %v3446 = vld [vmem:[%s3417 + $0xe0] sm:$0xff]
        %v3447 = vld [vmem:[%s3417 + $0xe8] sm:$0xff]
        %v3448 = vld [vmem:[%s3417 + $0xf0] sm:$0xff]
        %v3449 = vld [vmem:[%s3417 + $0xf8] sm:$0xff]
        %v3482 = vunpack.c.l.b16 %v3418
        %v3483 = vunpack.c.h.b16 %v3418
        %v3484 = vunpack.c.l.b16 %v3419
        %v3485 = vunpack.c.h.b16 %v3419
        %v3486 = vunpack.c.l.b16 %v3420
        %v3487 = vunpack.c.h.b16 %v3420
        %v3488 = vunpack.c.l.b16 %v3421
        %v3489 = vunpack.c.h.b16 %v3421
        %v3490 = vunpack.c.l.b16 %v3422
        %v3491 = vunpack.c.h.b16 %v3422
        %v3492 = vunpack.c.l.b16 %v3423
        %v3493 = vunpack.c.h.b16 %v3423
        %v3494 = vunpack.c.l.b16 %v3424
        %v3495 = vunpack.c.h.b16 %v3424
        %v3496 = vunpack.c.l.b16 %v3425
        %v3497 = vunpack.c.h.b16 %v3425
        %v3498 = vunpack.c.l.b16 %v3426
        %v3499 = vunpack.c.h.b16 %v3426
        %v3500 = vunpack.c.l.b16 %v3427
        %v3501 = vunpack.c.h.b16 %v3427
        %v3502 = vunpack.c.l.b16 %v3428
        %v3503 = vunpack.c.h.b16 %v3428
        %v3504 = vunpack.c.l.b16 %v3429
        %v3505 = vunpack.c.h.b16 %v3429
        %v3506 = vunpack.c.l.b16 %v3430
        %v3507 = vunpack.c.h.b16 %v3430
        %v3508 = vunpack.c.l.b16 %v3431
        %v3509 = vunpack.c.h.b16 %v3431
        %v3510 = vunpack.c.l.b16 %v3432
        %v3511 = vunpack.c.h.b16 %v3432
        %v3512 = vunpack.c.l.b16 %v3433
        %v3513 = vunpack.c.h.b16 %v3433
        %v3514 = vunpack.c.l.b16 %v3434
        %v3515 = vunpack.c.h.b16 %v3434
        %v3516 = vunpack.c.l.b16 %v3435
        %v3517 = vunpack.c.h.b16 %v3435
        %v3518 = vunpack.c.l.b16 %v3436
        %v3519 = vunpack.c.h.b16 %v3436
        %v3520 = vunpack.c.l.b16 %v3437
        %v3521 = vunpack.c.h.b16 %v3437
        %v3522 = vunpack.c.l.b16 %v3438
        %v3523 = vunpack.c.h.b16 %v3438
        %v3524 = vunpack.c.l.b16 %v3439
        %v3525 = vunpack.c.h.b16 %v3439
        %v3526 = vunpack.c.l.b16 %v3440
        %v3527 = vunpack.c.h.b16 %v3440
        %v3528 = vunpack.c.l.b16 %v3441
        %v3529 = vunpack.c.h.b16 %v3441
        %v3530 = vunpack.c.l.b16 %v3442
        %v3531 = vunpack.c.h.b16 %v3442
        %v3532 = vunpack.c.l.b16 %v3443
        %v3533 = vunpack.c.h.b16 %v3443
        %v3534 = vunpack.c.l.b16 %v3444
        %v3535 = vunpack.c.h.b16 %v3444
        %v3536 = vunpack.c.l.b16 %v3445
        %v3537 = vunpack.c.h.b16 %v3445
        %v3538 = vunpack.c.l.b16 %v3446
        %v3539 = vunpack.c.h.b16 %v3446
        %v3540 = vunpack.c.l.b16 %v3447
        %v3541 = vunpack.c.h.b16 %v3447
        %v3542 = vunpack.c.l.b16 %v3448
        %v3543 = vunpack.c.h.b16 %v3448
        %v3544 = vunpack.c.l.b16 %v3449
        %v3545 = vunpack.c.h.b16 %v3449
        %v3546 = vpack.c.b16 %v3484, %v3482
        %v3547 = vpack.c.b16 %v3485, %v3483
        %v3548 = vpack.c.b16 %v3488, %v3486
        %v3549 = vpack.c.b16 %v3489, %v3487
        %v3550 = vpack.c.b16 %v3492, %v3490
        %v3551 = vpack.c.b16 %v3493, %v3491
        %v3552 = vpack.c.b16 %v3496, %v3494
        %v3553 = vpack.c.b16 %v3497, %v3495
        %v3554 = vpack.c.b16 %v3500, %v3498
        %v3555 = vpack.c.b16 %v3501, %v3499
        %v3556 = vpack.c.b16 %v3504, %v3502
        %v3557 = vpack.c.b16 %v3505, %v3503
        %v3558 = vpack.c.b16 %v3508, %v3506
        %v3559 = vpack.c.b16 %v3509, %v3507
        %v3560 = vpack.c.b16 %v3512, %v3510
        %v3561 = vpack.c.b16 %v3513, %v3511
        %v3562 = vpack.c.b16 %v3516, %v3514
        %v3563 = vpack.c.b16 %v3517, %v3515
        %v3564 = vpack.c.b16 %v3520, %v3518
        %v3565 = vpack.c.b16 %v3521, %v3519
        %v3566 = vpack.c.b16 %v3524, %v3522
        %v3567 = vpack.c.b16 %v3525, %v3523
        %v3568 = vpack.c.b16 %v3528, %v3526
        %v3569 = vpack.c.b16 %v3529, %v3527
        %v3570 = vpack.c.b16 %v3532, %v3530
        %v3571 = vpack.c.b16 %v3533, %v3531
        %v3572 = vpack.c.b16 %v3536, %v3534
        %v3573 = vpack.c.b16 %v3537, %v3535
        %v3574 = vpack.c.b16 %v3540, %v3538
        %v3575 = vpack.c.b16 %v3541, %v3539
        %v3576 = vpack.c.b16 %v3544, %v3542
        %v3577 = vpack.c.b16 %v3545, %v3543
        %3610 = vmatprep.subr.bf16.mxu0 %v3561
        %3611 = vmatpush1.bf16.msra.mxu0 %v3560
        %3612 = vmatprep.subr.bf16.mxu0 %v3559
        %3613 = vmatpush1.bf16.msra.mxu0 %v3558
        %3614 = vmatprep.subr.bf16.mxu0 %v3557
        %3615 = vmatpush1.bf16.msra.mxu0 %v3556
        %3616 = vmatprep.subr.bf16.mxu0 %v3555
        %3617 = vmatpush1.bf16.msra.mxu0 %v3554
        %3618 = vmatprep.subr.bf16.mxu0 %v3553
        %3619 = vmatpush1.bf16.msra.mxu0 %v3552
        %3620 = vmatprep.subr.bf16.mxu0 %v3551
        %3621 = vmatpush1.bf16.msra.mxu0 %v3550
        %3622 = vmatprep.subr.bf16.mxu0 %v3549
        %3623 = vmatpush1.bf16.msra.mxu0 %v3548
        %3624 = vmatprep.subr.bf16.mxu0 %v3547
        %3625 = vmatpush1.bf16.msra.mxu0 %v3546
        %3626 = vmatprep.subr.bf16.mxu0 %v3577
        %3627 = vmatpush2.bf16.msra.mxu0 %v3576
        %3628 = vmatprep.subr.bf16.mxu0 %v3575
        %3629 = vmatpush2.bf16.msra.mxu0 %v3574
        %3630 = vmatprep.subr.bf16.mxu0 %v3573
        %3631 = vmatpush2.bf16.msra.mxu0 %v3572
        %3632 = vmatprep.subr.bf16.mxu0 %v3571
        %3633 = vmatpush2.bf16.msra.mxu0 %v3570
        %3634 = vmatprep.subr.bf16.mxu0 %v3569
        %3635 = vmatpush2.bf16.msra.mxu0 %v3568
        %3636 = vmatprep.subr.bf16.mxu0 %v3567
        %3637 = vmatpush2.bf16.msra.mxu0 %v3566
        %3638 = vmatprep.subr.bf16.mxu0 %v3565
        %3639 = vmatpush2.bf16.msra.mxu0 %v3564
        %3640 = vmatprep.subr.bf16.mxu0 %v3563
        %3641 = vmatpush2.bf16.msra.mxu0 %v3562
        %3642 = vmatprep.mubr.bf16.mxu0 %v1092
        %3643 = vmatmul.mubr.bf16.gmra.mxu0 %v1091
        %v3644 = vpop.f32.mrf.mxu0
        %v3645 = vadd.f32 0.0, %v3644
        %v3646 = vpop.f32.mrf.mxu0
        %v3647 = vadd.f32 0.0, %v3646
        %v3648 = vpop.f32.mrf.mxu0
        %v3649 = vadd.f32 0.0, %v3648
        %v3650 = vpop.f32.mrf.mxu0
        %v3651 = vadd.f32 0.0, %v3650
        %3652 = vmatprep.mubr.bf16.mxu0 %v1094
        %3653 = vmatmul.mubr.bf16.gmra.mxu0 %v1093
        %v3654 = vpop.f32.mrf.mxu0
        %v3655 = vadd.f32 0.0, %v3654
        %v3656 = vpop.f32.mrf.mxu0
        %v3657 = vadd.f32 0.0, %v3656
        %v3658 = vpop.f32.mrf.mxu0
        %v3659 = vadd.f32 0.0, %v3658
        %v3660 = vpop.f32.mrf.mxu0
        %v3661 = vadd.f32 0.0, %v3660
        %3662 = vmatprep.mubr.bf16.mxu0 %v1096
        %3663 = vmatmul.mubr.bf16.gmra.mxu0 %v1095
        %v3664 = vpop.f32.mrf.mxu0
        %v3665 = vadd.f32 0.0, %v3664
        %v3666 = vpop.f32.mrf.mxu0
        %v3667 = vadd.f32 0.0, %v3666
        %v3668 = vpop.f32.mrf.mxu0
        %v3669 = vadd.f32 0.0, %v3668
        %v3670 = vpop.f32.mrf.mxu0
        %v3671 = vadd.f32 0.0, %v3670
        %3672 = vmatprep.mubr.bf16.mxu0 %v1098
        %3673 = vmatmul.mubr.bf16.gmra.mxu0 %v1097
        %v3674 = vpop.f32.mrf.mxu0
        %v3675 = vadd.f32 0.0, %v3674
        %v3676 = vpop.f32.mrf.mxu0
        %v3677 = vadd.f32 0.0, %v3676
        %v3678 = vpop.f32.mrf.mxu0
        %v3679 = vadd.f32 0.0, %v3678
        %v3680 = vpop.f32.mrf.mxu0
        %v3681 = vadd.f32 0.0, %v3680
        %3682 = vdwg.mxu0
        %v3683 = vadd.f32 %v3401, %v3645
        %v3684 = vadd.f32 %v3402, %v3647
        %v3685 = vadd.f32 %v3403, %v3649
        %v3686 = vadd.f32 %v3404, %v3651
        %v3687 = vadd.f32 %v3405, %v3655
        %v3688 = vadd.f32 %v3406, %v3657
        %v3689 = vadd.f32 %v3407, %v3659
        %v3690 = vadd.f32 %v3408, %v3661
        %v3691 = vadd.f32 %v3409, %v3665
        %v3692 = vadd.f32 %v3410, %v3667
        %v3693 = vadd.f32 %v3411, %v3669
        %v3694 = vadd.f32 %v3412, %v3671
        %v3695 = vadd.f32 %v3413, %v3675
        %v3696 = vadd.f32 %v3414, %v3677
        %v3697 = vadd.f32 %v3415, %v3679
        %v3698 = vadd.f32 %v3416, %v3681
        %v3701 = vunpack.c.l.b16 %v1902
        %v3702 = vunpack.c.l.b16 %v1903
        %s3703 = scalar_lea.vmem [#allocation6], 1536
        %v3704 = vld [vmem:[%s3703] sm:$0xff]
        %v3705 = vld [vmem:[%s3703 + $0x8] sm:$0xff]
        %v3706 = vld [vmem:[%s3703 + $0x10] sm:$0xff]
        %v3707 = vld [vmem:[%s3703 + $0x18] sm:$0xff]
        %v3708 = vld [vmem:[%s3703 + $0x20] sm:$0xff]
        %v3709 = vld [vmem:[%s3703 + $0x28] sm:$0xff]
        %v3710 = vld [vmem:[%s3703 + $0x30] sm:$0xff]
        %v3711 = vld [vmem:[%s3703 + $0x38] sm:$0xff]
        %v3712 = vld [vmem:[%s3703 + $0x40] sm:$0xff]
        %v3713 = vld [vmem:[%s3703 + $0x48] sm:$0xff]
        %v3714 = vld [vmem:[%s3703 + $0x50] sm:$0xff]
        %v3715 = vld [vmem:[%s3703 + $0x58] sm:$0xff]
        %v3716 = vld [vmem:[%s3703 + $0x60] sm:$0xff]
        %v3717 = vld [vmem:[%s3703 + $0x68] sm:$0xff]
        %v3718 = vld [vmem:[%s3703 + $0x70] sm:$0xff]
        %v3719 = vld [vmem:[%s3703 + $0x78] sm:$0xff]
        %v3720 = vld [vmem:[%s3703 + $0x80] sm:$0xff]
        %v3721 = vld [vmem:[%s3703 + $0x88] sm:$0xff]
        %v3722 = vld [vmem:[%s3703 + $0x90] sm:$0xff]
        %v3723 = vld [vmem:[%s3703 + $0x98] sm:$0xff]
        %v3724 = vld [vmem:[%s3703 + $0xa0] sm:$0xff]
        %v3725 = vld [vmem:[%s3703 + $0xa8] sm:$0xff]
        %v3726 = vld [vmem:[%s3703 + $0xb0] sm:$0xff]
        %v3727 = vld [vmem:[%s3703 + $0xb8] sm:$0xff]
        %v3728 = vld [vmem:[%s3703 + $0xc0] sm:$0xff]
        %v3729 = vld [vmem:[%s3703 + $0xc8] sm:$0xff]
        %v3730 = vld [vmem:[%s3703 + $0xd0] sm:$0xff]
        %v3731 = vld [vmem:[%s3703 + $0xd8] sm:$0xff]
        %v3732 = vld [vmem:[%s3703 + $0xe0] sm:$0xff]
        %v3733 = vld [vmem:[%s3703 + $0xe8] sm:$0xff]
        %v3734 = vld [vmem:[%s3703 + $0xf0] sm:$0xff]
        %v3735 = vld [vmem:[%s3703 + $0xf8] sm:$0xff]
        %v3736 = vpack.c.b16 %v1924, %v1922
        %v3737 = vpack.c.b16 %v1925, %v1923
        %v3738 = vpack.c.b16 %v1928, %v1926
        %v3739 = vpack.c.b16 %v1929, %v1927
        %v3740 = vpack.c.b16 %v1932, %v1930
        %v3741 = vpack.c.b16 %v1933, %v1931
        %v3742 = vpack.c.b16 %v3701, %v1934
        %v3743 = vpack.c.b16 %v3702, %v1935
        %v3784 = vunpack.c.l.b16 %v3704
        %v3785 = vunpack.c.h.b16 %v3704
        %v3786 = vunpack.c.l.b16 %v3705
        %v3787 = vunpack.c.h.b16 %v3705
        %v3788 = vunpack.c.l.b16 %v3706
        %v3789 = vunpack.c.h.b16 %v3706
        %v3790 = vunpack.c.l.b16 %v3707
        %v3791 = vunpack.c.h.b16 %v3707
        %v3792 = vunpack.c.l.b16 %v3708
        %v3793 = vunpack.c.h.b16 %v3708
        %v3794 = vunpack.c.l.b16 %v3709
        %v3795 = vunpack.c.h.b16 %v3709
        %v3796 = vunpack.c.l.b16 %v3710
        %v3797 = vunpack.c.h.b16 %v3710
        %v3798 = vunpack.c.l.b16 %v3711
        %v3799 = vunpack.c.h.b16 %v3711
        %v3800 = vunpack.c.l.b16 %v3712
        %v3801 = vunpack.c.h.b16 %v3712
        %v3802 = vunpack.c.l.b16 %v3713
        %v3803 = vunpack.c.h.b16 %v3713
        %v3804 = vunpack.c.l.b16 %v3714
        %v3805 = vunpack.c.h.b16 %v3714
        %v3806 = vunpack.c.l.b16 %v3715
        %v3807 = vunpack.c.h.b16 %v3715
        %v3808 = vunpack.c.l.b16 %v3716
        %v3809 = vunpack.c.h.b16 %v3716
        %v3810 = vunpack.c.l.b16 %v3717
        %v3811 = vunpack.c.h.b16 %v3717
        %v3812 = vunpack.c.l.b16 %v3718
        %v3813 = vunpack.c.h.b16 %v3718
        %v3814 = vunpack.c.l.b16 %v3719
        %v3815 = vunpack.c.h.b16 %v3719
        %v3816 = vunpack.c.l.b16 %v3720
        %v3817 = vunpack.c.h.b16 %v3720
        %v3818 = vunpack.c.l.b16 %v3721
        %v3819 = vunpack.c.h.b16 %v3721
        %v3820 = vunpack.c.l.b16 %v3722
        %v3821 = vunpack.c.h.b16 %v3722
        %v3822 = vunpack.c.l.b16 %v3723
        %v3823 = vunpack.c.h.b16 %v3723
        %v3824 = vunpack.c.l.b16 %v3724
        %v3825 = vunpack.c.h.b16 %v3724
        %v3826 = vunpack.c.l.b16 %v3725
        %v3827 = vunpack.c.h.b16 %v3725
        %v3828 = vunpack.c.l.b16 %v3726
        %v3829 = vunpack.c.h.b16 %v3726
        %v3830 = vunpack.c.l.b16 %v3727
        %v3831 = vunpack.c.h.b16 %v3727
        %v3832 = vunpack.c.l.b16 %v3728
        %v3833 = vunpack.c.h.b16 %v3728
        %v3834 = vunpack.c.l.b16 %v3729
        %v3835 = vunpack.c.h.b16 %v3729
        %v3836 = vunpack.c.l.b16 %v3730
        %v3837 = vunpack.c.h.b16 %v3730
        %v3838 = vunpack.c.l.b16 %v3731
        %v3839 = vunpack.c.h.b16 %v3731
        %v3840 = vunpack.c.l.b16 %v3732
        %v3841 = vunpack.c.h.b16 %v3732
        %v3842 = vunpack.c.l.b16 %v3733
        %v3843 = vunpack.c.h.b16 %v3733
        %v3844 = vunpack.c.l.b16 %v3734
        %v3845 = vunpack.c.h.b16 %v3734
        %v3846 = vunpack.c.l.b16 %v3735
        %v3847 = vunpack.c.h.b16 %v3735
        %v3848 = vpack.c.b16 %v3786, %v3784
        %v3849 = vpack.c.b16 %v3787, %v3785
        %v3850 = vpack.c.b16 %v3790, %v3788
        %v3851 = vpack.c.b16 %v3791, %v3789
        %v3852 = vpack.c.b16 %v3794, %v3792
        %v3853 = vpack.c.b16 %v3795, %v3793
        %v3854 = vpack.c.b16 %v3798, %v3796
        %v3855 = vpack.c.b16 %v3799, %v3797
        %v3856 = vpack.c.b16 %v3802, %v3800
        %v3857 = vpack.c.b16 %v3803, %v3801
        %v3858 = vpack.c.b16 %v3806, %v3804
        %v3859 = vpack.c.b16 %v3807, %v3805
        %v3860 = vpack.c.b16 %v3810, %v3808
        %v3861 = vpack.c.b16 %v3811, %v3809
        %v3862 = vpack.c.b16 %v3814, %v3812
        %v3863 = vpack.c.b16 %v3815, %v3813
        %v3864 = vpack.c.b16 %v3818, %v3816
        %v3865 = vpack.c.b16 %v3819, %v3817
        %v3866 = vpack.c.b16 %v3822, %v3820
        %v3867 = vpack.c.b16 %v3823, %v3821
        %v3868 = vpack.c.b16 %v3826, %v3824
        %v3869 = vpack.c.b16 %v3827, %v3825
        %v3870 = vpack.c.b16 %v3830, %v3828
        %v3871 = vpack.c.b16 %v3831, %v3829
        %v3872 = vpack.c.b16 %v3834, %v3832
        %v3873 = vpack.c.b16 %v3835, %v3833
        %v3874 = vpack.c.b16 %v3838, %v3836
        %v3875 = vpack.c.b16 %v3839, %v3837
        %v3876 = vpack.c.b16 %v3842, %v3840
        %v3877 = vpack.c.b16 %v3843, %v3841
        %v3878 = vpack.c.b16 %v3846, %v3844
        %v3879 = vpack.c.b16 %v3847, %v3845
        %3912 = vmatprep.subr.bf16.mxu0 %v3863
        %3913 = vmatpush1.bf16.msra.mxu0 %v3862
        %3914 = vmatprep.subr.bf16.mxu0 %v3861
        %3915 = vmatpush1.bf16.msra.mxu0 %v3860
        %3916 = vmatprep.subr.bf16.mxu0 %v3859
        %3917 = vmatpush1.bf16.msra.mxu0 %v3858
        %3918 = vmatprep.subr.bf16.mxu0 %v3857
        %3919 = vmatpush1.bf16.msra.mxu0 %v3856
        %3920 = vmatprep.subr.bf16.mxu0 %v3855
        %3921 = vmatpush1.bf16.msra.mxu0 %v3854
        %3922 = vmatprep.subr.bf16.mxu0 %v3853
        %3923 = vmatpush1.bf16.msra.mxu0 %v3852
        %3924 = vmatprep.subr.bf16.mxu0 %v3851
        %3925 = vmatpush1.bf16.msra.mxu0 %v3850
        %3926 = vmatprep.subr.bf16.mxu0 %v3849
        %3927 = vmatpush1.bf16.msra.mxu0 %v3848
        %3928 = vmatprep.subr.bf16.mxu0 %v3879
        %3929 = vmatpush2.bf16.msra.mxu0 %v3878
        %3930 = vmatprep.subr.bf16.mxu0 %v3877
        %3931 = vmatpush2.bf16.msra.mxu0 %v3876
        %3932 = vmatprep.subr.bf16.mxu0 %v3875
        %3933 = vmatpush2.bf16.msra.mxu0 %v3874
        %3934 = vmatprep.subr.bf16.mxu0 %v3873
        %3935 = vmatpush2.bf16.msra.mxu0 %v3872
        %3936 = vmatprep.subr.bf16.mxu0 %v3871
        %3937 = vmatpush2.bf16.msra.mxu0 %v3870
        %3938 = vmatprep.subr.bf16.mxu0 %v3869
        %3939 = vmatpush2.bf16.msra.mxu0 %v3868
        %3940 = vmatprep.subr.bf16.mxu0 %v3867
        %3941 = vmatpush2.bf16.msra.mxu0 %v3866
        %3942 = vmatprep.subr.bf16.mxu0 %v3865
        %3943 = vmatpush2.bf16.msra.mxu0 %v3864
        %3944 = vmatprep.mubr.bf16.mxu0 %v3737
        %3945 = vmatmul.mubr.bf16.gmra.mxu0 %v3736
        %v3946 = vpop.f32.mrf.mxu0
        %v3947 = vadd.f32 0.0, %v3946
        %v3948 = vpop.f32.mrf.mxu0
        %v3949 = vadd.f32 0.0, %v3948
        %v3950 = vpop.f32.mrf.mxu0
        %v3951 = vadd.f32 0.0, %v3950
        %v3952 = vpop.f32.mrf.mxu0
        %v3953 = vadd.f32 0.0, %v3952
        %3954 = vmatprep.mubr.bf16.mxu0 %v3739
        %3955 = vmatmul.mubr.bf16.gmra.mxu0 %v3738
        %v3956 = vpop.f32.mrf.mxu0
        %v3957 = vadd.f32 0.0, %v3956
        %v3958 = vpop.f32.mrf.mxu0
        %v3959 = vadd.f32 0.0, %v3958
        %v3960 = vpop.f32.mrf.mxu0
        %v3961 = vadd.f32 0.0, %v3960
        %v3962 = vpop.f32.mrf.mxu0
        %v3963 = vadd.f32 0.0, %v3962
        %3964 = vmatprep.mubr.bf16.mxu0 %v3741
        %3965 = vmatmul.mubr.bf16.gmra.mxu0 %v3740
        %v3966 = vpop.f32.mrf.mxu0
        %v3967 = vadd.f32 0.0, %v3966
        %v3968 = vpop.f32.mrf.mxu0
        %v3969 = vadd.f32 0.0, %v3968
        %v3970 = vpop.f32.mrf.mxu0
        %v3971 = vadd.f32 0.0, %v3970
        %v3972 = vpop.f32.mrf.mxu0
        %v3973 = vadd.f32 0.0, %v3972
        %3974 = vmatprep.mubr.bf16.mxu0 %v3743
        %3975 = vmatmul.mubr.bf16.gmra.mxu0 %v3742
        %v3976 = vpop.f32.mrf.mxu0
        %v3977 = vadd.f32 0.0, %v3976
        %v3978 = vpop.f32.mrf.mxu0
        %v3979 = vadd.f32 0.0, %v3978
        %v3980 = vpop.f32.mrf.mxu0
        %v3981 = vadd.f32 0.0, %v3980
        %v3982 = vpop.f32.mrf.mxu0
        %v3983 = vadd.f32 0.0, %v3982
        %3984 = vdwg.mxu0
        %v3985 = vadd.f32 %v3683, %v3947
        %v3986 = vadd.f32 %v3684, %v3949
        %v3987 = vadd.f32 %v3685, %v3951
        %v3988 = vadd.f32 %v3686, %v3953
        %v3989 = vadd.f32 %v3687, %v3957
        %v3990 = vadd.f32 %v3688, %v3959
        %v3991 = vadd.f32 %v3689, %v3961
        %v3992 = vadd.f32 %v3690, %v3963
        %v3993 = vadd.f32 %v3691, %v3967
        %v3994 = vadd.f32 %v3692, %v3969
        %v3995 = vadd.f32 %v3693, %v3971
        %v3996 = vadd.f32 %v3694, %v3973
        %v3997 = vadd.f32 %v3695, %v3977
        %v3998 = vadd.f32 %v3696, %v3979
        %v3999 = vadd.f32 %v3697, %v3981
        %v4000 = vadd.f32 %v3698, %v3983
        %s4001 = scalar_lea.vmem [#allocation6], 1792
        %v4002 = vld [vmem:[%s4001] sm:$0xff]
        %v4003 = vld [vmem:[%s4001 + $0x8] sm:$0xff]
        %v4004 = vld [vmem:[%s4001 + $0x10] sm:$0xff]
        %v4005 = vld [vmem:[%s4001 + $0x18] sm:$0xff]
        %v4006 = vld [vmem:[%s4001 + $0x20] sm:$0xff]
        %v4007 = vld [vmem:[%s4001 + $0x28] sm:$0xff]
        %v4008 = vld [vmem:[%s4001 + $0x30] sm:$0xff]
        %v4009 = vld [vmem:[%s4001 + $0x38] sm:$0xff]
        %v4010 = vld [vmem:[%s4001 + $0x40] sm:$0xff]
        %v4011 = vld [vmem:[%s4001 + $0x48] sm:$0xff]
        %v4012 = vld [vmem:[%s4001 + $0x50] sm:$0xff]
        %v4013 = vld [vmem:[%s4001 + $0x58] sm:$0xff]
        %v4014 = vld [vmem:[%s4001 + $0x60] sm:$0xff]
        %v4015 = vld [vmem:[%s4001 + $0x68] sm:$0xff]
        %v4016 = vld [vmem:[%s4001 + $0x70] sm:$0xff]
        %v4017 = vld [vmem:[%s4001 + $0x78] sm:$0xff]
        %v4018 = vld [vmem:[%s4001 + $0x80] sm:$0xff]
        %v4019 = vld [vmem:[%s4001 + $0x88] sm:$0xff]
        %v4020 = vld [vmem:[%s4001 + $0x90] sm:$0xff]
        %v4021 = vld [vmem:[%s4001 + $0x98] sm:$0xff]
        %v4022 = vld [vmem:[%s4001 + $0xa0] sm:$0xff]
        %v4023 = vld [vmem:[%s4001 + $0xa8] sm:$0xff]
        %v4024 = vld [vmem:[%s4001 + $0xb0] sm:$0xff]
        %v4025 = vld [vmem:[%s4001 + $0xb8] sm:$0xff]
        %v4026 = vld [vmem:[%s4001 + $0xc0] sm:$0xff]
        %v4027 = vld [vmem:[%s4001 + $0xc8] sm:$0xff]
        %v4028 = vld [vmem:[%s4001 + $0xd0] sm:$0xff]
        %v4029 = vld [vmem:[%s4001 + $0xd8] sm:$0xff]
        %v4030 = vld [vmem:[%s4001 + $0xe0] sm:$0xff]
        %v4031 = vld [vmem:[%s4001 + $0xe8] sm:$0xff]
        %v4032 = vld [vmem:[%s4001 + $0xf0] sm:$0xff]
        %v4033 = vld [vmem:[%s4001 + $0xf8] sm:$0xff]
        %v4034 = vpack.c.b16 %v1388, %v1386
        %v4035 = vpack.c.b16 %v1389, %v1387
        %v4036 = vpack.c.b16 %v1392, %v1390
        %v4037 = vpack.c.b16 %v1393, %v1391
        %v4038 = vpack.c.b16 %v1396, %v1394
        %v4039 = vpack.c.b16 %v1397, %v1395
        %v4040 = vpack.c.b16 %v1400, %v1398
        %v4041 = vpack.c.b16 %v1401, %v1399
        %v4082 = vunpack.c.l.b16 %v4002
        %v4083 = vunpack.c.h.b16 %v4002
        %v4084 = vunpack.c.l.b16 %v4003
        %v4085 = vunpack.c.h.b16 %v4003
        %v4086 = vunpack.c.l.b16 %v4004
        %v4087 = vunpack.c.h.b16 %v4004
        %v4088 = vunpack.c.l.b16 %v4005
        %v4089 = vunpack.c.h.b16 %v4005
        %v4090 = vunpack.c.l.b16 %v4006
        %v4091 = vunpack.c.h.b16 %v4006
        %v4092 = vunpack.c.l.b16 %v4007
        %v4093 = vunpack.c.h.b16 %v4007
        %v4094 = vunpack.c.l.b16 %v4008
        %v4095 = vunpack.c.h.b16 %v4008
        %v4096 = vunpack.c.l.b16 %v4009
        %v4097 = vunpack.c.h.b16 %v4009
        %v4098 = vunpack.c.l.b16 %v4010
        %v4099 = vunpack.c.h.b16 %v4010
        %v4100 = vunpack.c.l.b16 %v4011
        %v4101 = vunpack.c.h.b16 %v4011
        %v4102 = vunpack.c.l.b16 %v4012
        %v4103 = vunpack.c.h.b16 %v4012
        %v4104 = vunpack.c.l.b16 %v4013
        %v4105 = vunpack.c.h.b16 %v4013
        %v4106 = vunpack.c.l.b16 %v4014
        %v4107 = vunpack.c.h.b16 %v4014
        %v4108 = vunpack.c.l.b16 %v4015
        %v4109 = vunpack.c.h.b16 %v4015
        %v4110 = vunpack.c.l.b16 %v4016
        %v4111 = vunpack.c.h.b16 %v4016
        %v4112 = vunpack.c.l.b16 %v4017
        %v4113 = vunpack.c.h.b16 %v4017
        %v4114 = vunpack.c.l.b16 %v4018
        %v4115 = vunpack.c.h.b16 %v4018
        %v4116 = vunpack.c.l.b16 %v4019
        %v4117 = vunpack.c.h.b16 %v4019
        %v4118 = vunpack.c.l.b16 %v4020
        %v4119 = vunpack.c.h.b16 %v4020
        %v4120 = vunpack.c.l.b16 %v4021
        %v4121 = vunpack.c.h.b16 %v4021
        %v4122 = vunpack.c.l.b16 %v4022
        %v4123 = vunpack.c.h.b16 %v4022
        %v4124 = vunpack.c.l.b16 %v4023
        %v4125 = vunpack.c.h.b16 %v4023
        %v4126 = vunpack.c.l.b16 %v4024
        %v4127 = vunpack.c.h.b16 %v4024
        %v4128 = vunpack.c.l.b16 %v4025
        %v4129 = vunpack.c.h.b16 %v4025
        %v4130 = vunpack.c.l.b16 %v4026
        %v4131 = vunpack.c.h.b16 %v4026
        %v4132 = vunpack.c.l.b16 %v4027
        %v4133 = vunpack.c.h.b16 %v4027
        %v4134 = vunpack.c.l.b16 %v4028
        %v4135 = vunpack.c.h.b16 %v4028
        %v4136 = vunpack.c.l.b16 %v4029
        %v4137 = vunpack.c.h.b16 %v4029
        %v4138 = vunpack.c.l.b16 %v4030
        %v4139 = vunpack.c.h.b16 %v4030
        %v4140 = vunpack.c.l.b16 %v4031
        %v4141 = vunpack.c.h.b16 %v4031
        %v4142 = vunpack.c.l.b16 %v4032
        %v4143 = vunpack.c.h.b16 %v4032
        %v4144 = vunpack.c.l.b16 %v4033
        %v4145 = vunpack.c.h.b16 %v4033
        %v4146 = vpack.c.b16 %v4084, %v4082
        %v4147 = vpack.c.b16 %v4085, %v4083
        %v4148 = vpack.c.b16 %v4088, %v4086
        %v4149 = vpack.c.b16 %v4089, %v4087
        %v4150 = vpack.c.b16 %v4092, %v4090
        %v4151 = vpack.c.b16 %v4093, %v4091
        %v4152 = vpack.c.b16 %v4096, %v4094
        %v4153 = vpack.c.b16 %v4097, %v4095
        %v4154 = vpack.c.b16 %v4100, %v4098
        %v4155 = vpack.c.b16 %v4101, %v4099
        %v4156 = vpack.c.b16 %v4104, %v4102
        %v4157 = vpack.c.b16 %v4105, %v4103
        %v4158 = vpack.c.b16 %v4108, %v4106
        %v4159 = vpack.c.b16 %v4109, %v4107
        %v4160 = vpack.c.b16 %v4112, %v4110
        %v4161 = vpack.c.b16 %v4113, %v4111
        %v4162 = vpack.c.b16 %v4116, %v4114
        %v4163 = vpack.c.b16 %v4117, %v4115
        %v4164 = vpack.c.b16 %v4120, %v4118
        %v4165 = vpack.c.b16 %v4121, %v4119
        %v4166 = vpack.c.b16 %v4124, %v4122
        %v4167 = vpack.c.b16 %v4125, %v4123
        %v4168 = vpack.c.b16 %v4128, %v4126
        %v4169 = vpack.c.b16 %v4129, %v4127
        %v4170 = vpack.c.b16 %v4132, %v4130
        %v4171 = vpack.c.b16 %v4133, %v4131
        %v4172 = vpack.c.b16 %v4136, %v4134
        %v4173 = vpack.c.b16 %v4137, %v4135
        %v4174 = vpack.c.b16 %v4140, %v4138
        %v4175 = vpack.c.b16 %v4141, %v4139
        %v4176 = vpack.c.b16 %v4144, %v4142
        %v4177 = vpack.c.b16 %v4145, %v4143
        %4210 = vmatprep.subr.bf16.mxu0 %v4161
        %4211 = vmatpush1.bf16.msra.mxu0 %v4160
        %4212 = vmatprep.subr.bf16.mxu0 %v4159
        %4213 = vmatpush1.bf16.msra.mxu0 %v4158
        %4214 = vmatprep.subr.bf16.mxu0 %v4157
        %4215 = vmatpush1.bf16.msra.mxu0 %v4156
        %4216 = vmatprep.subr.bf16.mxu0 %v4155
        %4217 = vmatpush1.bf16.msra.mxu0 %v4154
        %4218 = vmatprep.subr.bf16.mxu0 %v4153
        %4219 = vmatpush1.bf16.msra.mxu0 %v4152
        %4220 = vmatprep.subr.bf16.mxu0 %v4151
        %4221 = vmatpush1.bf16.msra.mxu0 %v4150
        %4222 = vmatprep.subr.bf16.mxu0 %v4149
        %4223 = vmatpush1.bf16.msra.mxu0 %v4148
        %4224 = vmatprep.subr.bf16.mxu0 %v4147
        %4225 = vmatpush1.bf16.msra.mxu0 %v4146
        %4226 = vmatprep.subr.bf16.mxu0 %v4177
        %4227 = vmatpush2.bf16.msra.mxu0 %v4176
        %4228 = vmatprep.subr.bf16.mxu0 %v4175
        %4229 = vmatpush2.bf16.msra.mxu0 %v4174
        %4230 = vmatprep.subr.bf16.mxu0 %v4173
        %4231 = vmatpush2.bf16.msra.mxu0 %v4172
        %4232 = vmatprep.subr.bf16.mxu0 %v4171
        %4233 = vmatpush2.bf16.msra.mxu0 %v4170
        %4234 = vmatprep.subr.bf16.mxu0 %v4169
        %4235 = vmatpush2.bf16.msra.mxu0 %v4168
        %4236 = vmatprep.subr.bf16.mxu0 %v4167
        %4237 = vmatpush2.bf16.msra.mxu0 %v4166
        %4238 = vmatprep.subr.bf16.mxu0 %v4165
        %4239 = vmatpush2.bf16.msra.mxu0 %v4164
        %4240 = vmatprep.subr.bf16.mxu0 %v4163
        %4241 = vmatpush2.bf16.msra.mxu0 %v4162
        %4242 = vmatprep.mubr.bf16.mxu0 %v4035
        %4243 = vmatmul.mubr.bf16.gmra.mxu0 %v4034
        %v4244 = vpop.f32.mrf.mxu0
        %v4245 = vadd.f32 0.0, %v4244
        %v4246 = vpop.f32.mrf.mxu0
        %v4247 = vadd.f32 0.0, %v4246
        %v4248 = vpop.f32.mrf.mxu0
        %v4249 = vadd.f32 0.0, %v4248
        %v4250 = vpop.f32.mrf.mxu0
        %v4251 = vadd.f32 0.0, %v4250
        %4252 = vmatprep.mubr.bf16.mxu0 %v4037
        %4253 = vmatmul.mubr.bf16.gmra.mxu0 %v4036
        %v4254 = vpop.f32.mrf.mxu0
        %v4255 = vadd.f32 0.0, %v4254
        %v4256 = vpop.f32.mrf.mxu0
        %v4257 = vadd.f32 0.0, %v4256
        %v4258 = vpop.f32.mrf.mxu0
        %v4259 = vadd.f32 0.0, %v4258
        %v4260 = vpop.f32.mrf.mxu0
        %v4261 = vadd.f32 0.0, %v4260
        %4262 = vmatprep.mubr.bf16.mxu0 %v4039
        %4263 = vmatmul.mubr.bf16.gmra.mxu0 %v4038
        %v4264 = vpop.f32.mrf.mxu0
        %v4265 = vadd.f32 0.0, %v4264
        %v4266 = vpop.f32.mrf.mxu0
        %v4267 = vadd.f32 0.0, %v4266
        %v4268 = vpop.f32.mrf.mxu0
        %v4269 = vadd.f32 0.0, %v4268
        %v4270 = vpop.f32.mrf.mxu0
        %v4271 = vadd.f32 0.0, %v4270
        %4272 = vmatprep.mubr.bf16.mxu0 %v4041
        %4273 = vmatmul.mubr.bf16.gmra.mxu0 %v4040
        %v4274 = vpop.f32.mrf.mxu0
        %v4275 = vadd.f32 0.0, %v4274
        %v4276 = vpop.f32.mrf.mxu0
        %v4277 = vadd.f32 0.0, %v4276
        %v4278 = vpop.f32.mrf.mxu0
        %v4279 = vadd.f32 0.0, %v4278
        %v4280 = vpop.f32.mrf.mxu0
        %v4281 = vadd.f32 0.0, %v4280
        %4282 = vdwg.mxu0
        %v4283 = vadd.f32 %v3985, %v4245
        %v4284 = vadd.f32 %v3986, %v4247
        %v4285 = vadd.f32 %v3987, %v4249
        %v4286 = vadd.f32 %v3988, %v4251
        %v4287 = vadd.f32 %v3989, %v4255
        %v4288 = vadd.f32 %v3990, %v4257
        %v4289 = vadd.f32 %v3991, %v4259
        %v4290 = vadd.f32 %v3992, %v4261
        %v4291 = vadd.f32 %v3993, %v4265
        %v4292 = vadd.f32 %v3994, %v4267
        %v4293 = vadd.f32 %v3995, %v4269
        %v4294 = vadd.f32 %v3996, %v4271
        %v4295 = vadd.f32 %v3997, %v4275
        %v4296 = vadd.f32 %v3998, %v4277
        %v4297 = vadd.f32 %v3999, %v4279
        %v4298 = vadd.f32 %v4000, %v4281
        %s4299 = scalar_lea.vmem [#allocation6], 2048
        %v4300 = vld [vmem:[%s4299] sm:$0xff]
        %v4301 = vld [vmem:[%s4299 + $0x8] sm:$0xff]
        %v4302 = vld [vmem:[%s4299 + $0x10] sm:$0xff]
        %v4303 = vld [vmem:[%s4299 + $0x18] sm:$0xff]
        %v4304 = vld [vmem:[%s4299 + $0x20] sm:$0xff]
        %v4305 = vld [vmem:[%s4299 + $0x28] sm:$0xff]
        %v4306 = vld [vmem:[%s4299 + $0x30] sm:$0xff]
        %v4307 = vld [vmem:[%s4299 + $0x38] sm:$0xff]
        %v4308 = vld [vmem:[%s4299 + $0x40] sm:$0xff]
        %v4309 = vld [vmem:[%s4299 + $0x48] sm:$0xff]
        %v4310 = vld [vmem:[%s4299 + $0x50] sm:$0xff]
        %v4311 = vld [vmem:[%s4299 + $0x58] sm:$0xff]
        %v4312 = vld [vmem:[%s4299 + $0x60] sm:$0xff]
        %v4313 = vld [vmem:[%s4299 + $0x68] sm:$0xff]
        %v4314 = vld [vmem:[%s4299 + $0x70] sm:$0xff]
        %v4315 = vld [vmem:[%s4299 + $0x78] sm:$0xff]
        %v4316 = vld [vmem:[%s4299 + $0x80] sm:$0xff]
        %v4317 = vld [vmem:[%s4299 + $0x88] sm:$0xff]
        %v4318 = vld [vmem:[%s4299 + $0x90] sm:$0xff]
        %v4319 = vld [vmem:[%s4299 + $0x98] sm:$0xff]
        %v4320 = vld [vmem:[%s4299 + $0xa0] sm:$0xff]
        %v4321 = vld [vmem:[%s4299 + $0xa8] sm:$0xff]
        %v4322 = vld [vmem:[%s4299 + $0xb0] sm:$0xff]
        %v4323 = vld [vmem:[%s4299 + $0xb8] sm:$0xff]
        %v4324 = vld [vmem:[%s4299 + $0xc0] sm:$0xff]
        %v4325 = vld [vmem:[%s4299 + $0xc8] sm:$0xff]
        %v4326 = vld [vmem:[%s4299 + $0xd0] sm:$0xff]
        %v4327 = vld [vmem:[%s4299 + $0xd8] sm:$0xff]
        %v4328 = vld [vmem:[%s4299 + $0xe0] sm:$0xff]
        %v4329 = vld [vmem:[%s4299 + $0xe8] sm:$0xff]
        %v4330 = vld [vmem:[%s4299 + $0xf0] sm:$0xff]
        %v4331 = vld [vmem:[%s4299 + $0xf8] sm:$0xff]
        %v4332 = vpack.c.b16 %v1549, %v1547
        %v4333 = vpack.c.b16 %v1550, %v1548
        %v4334 = vpack.c.b16 %v1553, %v1551
        %v4335 = vpack.c.b16 %v1554, %v1552
        %v4336 = vpack.c.b16 %v1557, %v1555
        %v4337 = vpack.c.b16 %v1558, %v1556
        %v4338 = vpack.c.b16 %v1561, %v1559
        %v4339 = vpack.c.b16 %v1562, %v1560
        %v4380 = vunpack.c.l.b16 %v4300
        %v4381 = vunpack.c.h.b16 %v4300
        %v4382 = vunpack.c.l.b16 %v4301
        %v4383 = vunpack.c.h.b16 %v4301
        %v4384 = vunpack.c.l.b16 %v4302
        %v4385 = vunpack.c.h.b16 %v4302
        %v4386 = vunpack.c.l.b16 %v4303
        %v4387 = vunpack.c.h.b16 %v4303
        %v4388 = vunpack.c.l.b16 %v4304
        %v4389 = vunpack.c.h.b16 %v4304
        %v4390 = vunpack.c.l.b16 %v4305
        %v4391 = vunpack.c.h.b16 %v4305
        %v4392 = vunpack.c.l.b16 %v4306
        %v4393 = vunpack.c.h.b16 %v4306
        %v4394 = vunpack.c.l.b16 %v4307
        %v4395 = vunpack.c.h.b16 %v4307
        %v4396 = vunpack.c.l.b16 %v4308
        %v4397 = vunpack.c.h.b16 %v4308
        %v4398 = vunpack.c.l.b16 %v4309
        %v4399 = vunpack.c.h.b16 %v4309
        %v4400 = vunpack.c.l.b16 %v4310
        %v4401 = vunpack.c.h.b16 %v4310
        %v4402 = vunpack.c.l.b16 %v4311
        %v4403 = vunpack.c.h.b16 %v4311
        %v4404 = vunpack.c.l.b16 %v4312
        %v4405 = vunpack.c.h.b16 %v4312
        %v4406 = vunpack.c.l.b16 %v4313
        %v4407 = vunpack.c.h.b16 %v4313
        %v4408 = vunpack.c.l.b16 %v4314
        %v4409 = vunpack.c.h.b16 %v4314
        %v4410 = vunpack.c.l.b16 %v4315
        %v4411 = vunpack.c.h.b16 %v4315
        %v4412 = vunpack.c.l.b16 %v4316
        %v4413 = vunpack.c.h.b16 %v4316
        %v4414 = vunpack.c.l.b16 %v4317
        %v4415 = vunpack.c.h.b16 %v4317
        %v4416 = vunpack.c.l.b16 %v4318
        %v4417 = vunpack.c.h.b16 %v4318
        %v4418 = vunpack.c.l.b16 %v4319
        %v4419 = vunpack.c.h.b16 %v4319
        %v4420 = vunpack.c.l.b16 %v4320
        %v4421 = vunpack.c.h.b16 %v4320
        %v4422 = vunpack.c.l.b16 %v4321
        %v4423 = vunpack.c.h.b16 %v4321
        %v4424 = vunpack.c.l.b16 %v4322
        %v4425 = vunpack.c.h.b16 %v4322
        %v4426 = vunpack.c.l.b16 %v4323
        %v4427 = vunpack.c.h.b16 %v4323
        %v4428 = vunpack.c.l.b16 %v4324
        %v4429 = vunpack.c.h.b16 %v4324
        %v4430 = vunpack.c.l.b16 %v4325
        %v4431 = vunpack.c.h.b16 %v4325
        %v4432 = vunpack.c.l.b16 %v4326
        %v4433 = vunpack.c.h.b16 %v4326
        %v4434 = vunpack.c.l.b16 %v4327
        %v4435 = vunpack.c.h.b16 %v4327
        %v4436 = vunpack.c.l.b16 %v4328
        %v4437 = vunpack.c.h.b16 %v4328
        %v4438 = vunpack.c.l.b16 %v4329
        %v4439 = vunpack.c.h.b16 %v4329
        %v4440 = vunpack.c.l.b16 %v4330
        %v4441 = vunpack.c.h.b16 %v4330
        %v4442 = vunpack.c.l.b16 %v4331
        %v4443 = vunpack.c.h.b16 %v4331
        %v4444 = vpack.c.b16 %v4382, %v4380
        %v4445 = vpack.c.b16 %v4383, %v4381
        %v4446 = vpack.c.b16 %v4386, %v4384
        %v4447 = vpack.c.b16 %v4387, %v4385
        %v4448 = vpack.c.b16 %v4390, %v4388
        %v4449 = vpack.c.b16 %v4391, %v4389
        %v4450 = vpack.c.b16 %v4394, %v4392
        %v4451 = vpack.c.b16 %v4395, %v4393
        %v4452 = vpack.c.b16 %v4398, %v4396
        %v4453 = vpack.c.b16 %v4399, %v4397
        %v4454 = vpack.c.b16 %v4402, %v4400
        %v4455 = vpack.c.b16 %v4403, %v4401
        %v4456 = vpack.c.b16 %v4406, %v4404
        %v4457 = vpack.c.b16 %v4407, %v4405
        %v4458 = vpack.c.b16 %v4410, %v4408
        %v4459 = vpack.c.b16 %v4411, %v4409
        %v4460 = vpack.c.b16 %v4414, %v4412
        %v4461 = vpack.c.b16 %v4415, %v4413
        %v4462 = vpack.c.b16 %v4418, %v4416
        %v4463 = vpack.c.b16 %v4419, %v4417
        %v4464 = vpack.c.b16 %v4422, %v4420
        %v4465 = vpack.c.b16 %v4423, %v4421
        %v4466 = vpack.c.b16 %v4426, %v4424
        %v4467 = vpack.c.b16 %v4427, %v4425
        %v4468 = vpack.c.b16 %v4430, %v4428
        %v4469 = vpack.c.b16 %v4431, %v4429
        %v4470 = vpack.c.b16 %v4434, %v4432
        %v4471 = vpack.c.b16 %v4435, %v4433
        %v4472 = vpack.c.b16 %v4438, %v4436
        %v4473 = vpack.c.b16 %v4439, %v4437
        %v4474 = vpack.c.b16 %v4442, %v4440
        %v4475 = vpack.c.b16 %v4443, %v4441
        %4508 = vmatprep.subr.bf16.mxu0 %v4459
        %4509 = vmatpush1.bf16.msra.mxu0 %v4458
        %4510 = vmatprep.subr.bf16.mxu0 %v4457
        %4511 = vmatpush1.bf16.msra.mxu0 %v4456
        %4512 = vmatprep.subr.bf16.mxu0 %v4455
        %4513 = vmatpush1.bf16.msra.mxu0 %v4454
        %4514 = vmatprep.subr.bf16.mxu0 %v4453
        %4515 = vmatpush1.bf16.msra.mxu0 %v4452
        %4516 = vmatprep.subr.bf16.mxu0 %v4451
        %4517 = vmatpush1.bf16.msra.mxu0 %v4450
        %4518 = vmatprep.subr.bf16.mxu0 %v4449
        %4519 = vmatpush1.bf16.msra.mxu0 %v4448
        %4520 = vmatprep.subr.bf16.mxu0 %v4447
        %4521 = vmatpush1.bf16.msra.mxu0 %v4446
        %4522 = vmatprep.subr.bf16.mxu0 %v4445
        %4523 = vmatpush1.bf16.msra.mxu0 %v4444
        %4524 = vmatprep.subr.bf16.mxu0 %v4475
        %4525 = vmatpush2.bf16.msra.mxu0 %v4474
        %4526 = vmatprep.subr.bf16.mxu0 %v4473
        %4527 = vmatpush2.bf16.msra.mxu0 %v4472
        %4528 = vmatprep.subr.bf16.mxu0 %v4471
        %4529 = vmatpush2.bf16.msra.mxu0 %v4470
        %4530 = vmatprep.subr.bf16.mxu0 %v4469
        %4531 = vmatpush2.bf16.msra.mxu0 %v4468
        %4532 = vmatprep.subr.bf16.mxu0 %v4467
        %4533 = vmatpush2.bf16.msra.mxu0 %v4466
        %4534 = vmatprep.subr.bf16.mxu0 %v4465
        %4535 = vmatpush2.bf16.msra.mxu0 %v4464
        %4536 = vmatprep.subr.bf16.mxu0 %v4463
        %4537 = vmatpush2.bf16.msra.mxu0 %v4462
        %4538 = vmatprep.subr.bf16.mxu0 %v4461
        %4539 = vmatpush2.bf16.msra.mxu0 %v4460
        %4540 = vmatprep.mubr.bf16.mxu0 %v4333
        %4541 = vmatmul.mubr.bf16.gmra.mxu0 %v4332
        %v4542 = vpop.f32.mrf.mxu0
        %v4543 = vadd.f32 0.0, %v4542
        %v4544 = vpop.f32.mrf.mxu0
        %v4545 = vadd.f32 0.0, %v4544
        %v4546 = vpop.f32.mrf.mxu0
        %v4547 = vadd.f32 0.0, %v4546
        %v4548 = vpop.f32.mrf.mxu0
        %v4549 = vadd.f32 0.0, %v4548
        %4550 = vmatprep.mubr.bf16.mxu0 %v4335
        %4551 = vmatmul.mubr.bf16.gmra.mxu0 %v4334
        %v4552 = vpop.f32.mrf.mxu0
        %v4553 = vadd.f32 0.0, %v4552
        %v4554 = vpop.f32.mrf.mxu0
        %v4555 = vadd.f32 0.0, %v4554
        %v4556 = vpop.f32.mrf.mxu0
        %v4557 = vadd.f32 0.0, %v4556
        %v4558 = vpop.f32.mrf.mxu0
        %v4559 = vadd.f32 0.0, %v4558
        %4560 = vmatprep.mubr.bf16.mxu0 %v4337
        %4561 = vmatmul.mubr.bf16.gmra.mxu0 %v4336
        %v4562 = vpop.f32.mrf.mxu0
        %v4563 = vadd.f32 0.0, %v4562
        %v4564 = vpop.f32.mrf.mxu0
        %v4565 = vadd.f32 0.0, %v4564
        %v4566 = vpop.f32.mrf.mxu0
        %v4567 = vadd.f32 0.0, %v4566
        %v4568 = vpop.f32.mrf.mxu0
        %v4569 = vadd.f32 0.0, %v4568
        %4570 = vmatprep.mubr.bf16.mxu0 %v4339
        %4571 = vmatmul.mubr.bf16.gmra.mxu0 %v4338
        %v4572 = vpop.f32.mrf.mxu0
        %v4573 = vadd.f32 0.0, %v4572
        %v4574 = vpop.f32.mrf.mxu0
        %v4575 = vadd.f32 0.0, %v4574
        %v4576 = vpop.f32.mrf.mxu0
        %v4577 = vadd.f32 0.0, %v4576
        %v4578 = vpop.f32.mrf.mxu0
        %v4579 = vadd.f32 0.0, %v4578
        %4580 = vdwg.mxu0
        %v4581 = vadd.f32 %v4283, %v4543
        %v4582 = vadd.f32 %v4284, %v4545
        %v4583 = vadd.f32 %v4285, %v4547
        %v4584 = vadd.f32 %v4286, %v4549
        %v4585 = vadd.f32 %v4287, %v4553
        %v4586 = vadd.f32 %v4288, %v4555
        %v4587 = vadd.f32 %v4289, %v4557
        %v4588 = vadd.f32 %v4290, %v4559
        %v4589 = vadd.f32 %v4291, %v4563
        %v4590 = vadd.f32 %v4292, %v4565
        %v4591 = vadd.f32 %v4293, %v4567
        %v4592 = vadd.f32 %v4294, %v4569
        %v4593 = vadd.f32 %v4295, %v4573
        %v4594 = vadd.f32 %v4296, %v4575
        %v4595 = vadd.f32 %v4297, %v4577
        %v4596 = vadd.f32 %v4298, %v4579
        %v4597 = vld [vmem:[#allocation7] sm:$0x3]
        %v4599 = vlaneseq
        %v4600 = vshrl.u32 %v4599, 7
        %v4601 = vsub.s32 0, %v4600
        %v4602 = vrot.slane %v4597, %v4601
        %v4603 = vlaneseq
        %v4604 = vshrl.u32 %v4603, 7
        %v4605 = vsub.s32 1, %v4604
        %v4606 = vrot.slane %v4597, %v4605
        %v4609 = vadd.f32 %v4581, %v4602
        %v4610 = vadd.f32 %v4582, %v4606
        %v4611 = vadd.f32 %v4583, %v4602
        %v4612 = vadd.f32 %v4584, %v4606
        %v4613 = vadd.f32 %v4585, %v4602
        %v4614 = vadd.f32 %v4586, %v4606
        %v4615 = vadd.f32 %v4587, %v4602
        %v4616 = vadd.f32 %v4588, %v4606
        %v4617 = vadd.f32 %v4589, %v4602
        %v4618 = vadd.f32 %v4590, %v4606
        %v4619 = vadd.f32 %v4591, %v4602
        %v4620 = vadd.f32 %v4592, %v4606
        %v4621 = vadd.f32 %v4593, %v4602
        %v4622 = vadd.f32 %v4594, %v4606
        %v4623 = vadd.f32 %v4595, %v4602
        %v4624 = vadd.f32 %v4596, %v4606
        %v4625 = vmax.f32 %v4609, 0.0
        %v4626 = vmax.f32 %v4610, 0.0
        %v4627 = vmax.f32 %v4611, 0.0
        %v4628 = vmax.f32 %v4612, 0.0
        %v4629 = vmax.f32 %v4613, 0.0
        %v4630 = vmax.f32 %v4614, 0.0
        %v4631 = vmax.f32 %v4615, 0.0
        %v4632 = vmax.f32 %v4616, 0.0
        %v4633 = vmax.f32 %v4617, 0.0
        %v4634 = vmax.f32 %v4618, 0.0
        %v4635 = vmax.f32 %v4619, 0.0
        %v4636 = vmax.f32 %v4620, 0.0
        %v4637 = vmax.f32 %v4621, 0.0
        %v4638 = vmax.f32 %v4622, 0.0
        %v4639 = vmax.f32 %v4623, 0.0
        %v4640 = vmax.f32 %v4624, 0.0
        %v4641 = vpack.c.bf16 %v4627, %v4625
        %v4642 = vpack.c.bf16 %v4628, %v4626
        %v4643 = vpack.c.bf16 %v4631, %v4629
        %v4644 = vpack.c.bf16 %v4632, %v4630
        %v4645 = vpack.c.bf16 %v4635, %v4633
        %v4646 = vpack.c.bf16 %v4636, %v4634
        %v4647 = vpack.c.bf16 %v4639, %v4637
        %v4648 = vpack.c.bf16 %v4640, %v4638
        %v4649 = vld [vmem:[#allocation9] sm:$0xff]
        %v4650 = vld [vmem:[#allocation9 + $0x8] sm:$0xff]
        %v4651 = vld [vmem:[#allocation9 + $0x10] sm:$0xff]
        %v4652 = vld [vmem:[#allocation9 + $0x18] sm:$0xff]
        %v4653 = vld [vmem:[#allocation9 + $0x20] sm:$0xff]
        %v4654 = vld [vmem:[#allocation9 + $0x28] sm:$0xff]
        %v4655 = vld [vmem:[#allocation9 + $0x30] sm:$0xff]
        %v4656 = vld [vmem:[#allocation9 + $0x38] sm:$0xff]
        %v4657 = vld [vmem:[#allocation9 + $0x40] sm:$0xff]
        %v4658 = vld [vmem:[#allocation9 + $0x48] sm:$0xff]
        %v4659 = vld [vmem:[#allocation9 + $0x50] sm:$0xff]
        %v4660 = vld [vmem:[#allocation9 + $0x58] sm:$0xff]
        %v4661 = vld [vmem:[#allocation9 + $0x60] sm:$0xff]
        %v4662 = vld [vmem:[#allocation9 + $0x68] sm:$0xff]
        %v4663 = vld [vmem:[#allocation9 + $0x70] sm:$0xff]
        %v4664 = vld [vmem:[#allocation9 + $0x78] sm:$0xff]
        %v4665 = vld [vmem:[#allocation9 + $0x80] sm:$0xff]
        %v4666 = vld [vmem:[#allocation9 + $0x88] sm:$0xff]
        %v4667 = vld [vmem:[#allocation9 + $0x90] sm:$0xff]
        %v4668 = vld [vmem:[#allocation9 + $0x98] sm:$0xff]
        %v4669 = vld [vmem:[#allocation9 + $0xa0] sm:$0xff]
        %v4670 = vld [vmem:[#allocation9 + $0xa8] sm:$0xff]
        %v4671 = vld [vmem:[#allocation9 + $0xb0] sm:$0xff]
        %v4672 = vld [vmem:[#allocation9 + $0xb8] sm:$0xff]
        %v4673 = vld [vmem:[#allocation9 + $0xc0] sm:$0xff]
        %v4674 = vld [vmem:[#allocation9 + $0xc8] sm:$0xff]
        %v4675 = vld [vmem:[#allocation9 + $0xd0] sm:$0xff]
        %v4676 = vld [vmem:[#allocation9 + $0xd8] sm:$0xff]
        %v4677 = vld [vmem:[#allocation9 + $0xe0] sm:$0xff]
        %v4678 = vld [vmem:[#allocation9 + $0xe8] sm:$0xff]
        %v4679 = vld [vmem:[#allocation9 + $0xf0] sm:$0xff]
        %v4680 = vld [vmem:[#allocation9 + $0xf8] sm:$0xff]
        %v4681 = vld [vmem:[#allocation9 + $0x100] sm:$0xff]
        %v4682 = vld [vmem:[#allocation9 + $0x108] sm:$0xff]
        %v4683 = vld [vmem:[#allocation9 + $0x110] sm:$0xff]
        %v4684 = vld [vmem:[#allocation9 + $0x118] sm:$0xff]
        %v4685 = vld [vmem:[#allocation9 + $0x120] sm:$0xff]
        %v4686 = vld [vmem:[#allocation9 + $0x128] sm:$0xff]
        %v4687 = vld [vmem:[#allocation9 + $0x130] sm:$0xff]
        %v4688 = vld [vmem:[#allocation9 + $0x138] sm:$0xff]
        %v4689 = vld [vmem:[#allocation10] sm:$0x3]
        %v4691 = vlaneseq
        %v4692 = vshrl.u32 %v4691, 7
        %v4693 = vsub.s32 0, %v4692
        %v4694 = vrot.slane %v4689, %v4693
        %v4695 = vlaneseq
        %v4696 = vshrl.u32 %v4695, 7
        %v4697 = vsub.s32 1, %v4696
        %v4698 = vrot.slane %v4689, %v4697
        %v4741 = vunpack.c.l.b16 %v4649
        %v4742 = vunpack.c.h.b16 %v4649
        %v4743 = vunpack.c.l.b16 %v4650
        %v4744 = vunpack.c.h.b16 %v4650
        %v4745 = vunpack.c.l.b16 %v4651
        %v4746 = vunpack.c.h.b16 %v4651
        %v4747 = vunpack.c.l.b16 %v4652
        %v4748 = vunpack.c.h.b16 %v4652
        %v4749 = vunpack.c.l.b16 %v4653
        %v4750 = vunpack.c.h.b16 %v4653
        %v4751 = vunpack.c.l.b16 %v4654
        %v4752 = vunpack.c.h.b16 %v4654
        %v4753 = vunpack.c.l.b16 %v4655
        %v4754 = vunpack.c.h.b16 %v4655
        %v4755 = vunpack.c.l.b16 %v4656
        %v4756 = vunpack.c.h.b16 %v4656
        %v4757 = vunpack.c.l.b16 %v4657
        %v4758 = vunpack.c.h.b16 %v4657
        %v4759 = vunpack.c.l.b16 %v4658
        %v4760 = vunpack.c.h.b16 %v4658
        %v4761 = vunpack.c.l.b16 %v4659
        %v4762 = vunpack.c.h.b16 %v4659
        %v4763 = vunpack.c.l.b16 %v4660
        %v4764 = vunpack.c.h.b16 %v4660
        %v4765 = vunpack.c.l.b16 %v4661
        %v4766 = vunpack.c.h.b16 %v4661
        %v4767 = vunpack.c.l.b16 %v4662
        %v4768 = vunpack.c.h.b16 %v4662
        %v4769 = vunpack.c.l.b16 %v4663
        %v4770 = vunpack.c.h.b16 %v4663
        %v4771 = vunpack.c.l.b16 %v4664
        %v4772 = vunpack.c.h.b16 %v4664
        %v4773 = vunpack.c.l.b16 %v4665
        %v4774 = vunpack.c.h.b16 %v4665
        %v4775 = vunpack.c.l.b16 %v4666
        %v4776 = vunpack.c.h.b16 %v4666
        %v4777 = vunpack.c.l.b16 %v4667
        %v4778 = vunpack.c.h.b16 %v4667
        %v4779 = vunpack.c.l.b16 %v4668
        %v4780 = vunpack.c.h.b16 %v4668
        %v4781 = vunpack.c.l.b16 %v4669
        %v4782 = vunpack.c.h.b16 %v4669
        %v4783 = vunpack.c.l.b16 %v4670
        %v4784 = vunpack.c.h.b16 %v4670
        %v4785 = vunpack.c.l.b16 %v4671
        %v4786 = vunpack.c.h.b16 %v4671
        %v4787 = vunpack.c.l.b16 %v4672
        %v4788 = vunpack.c.h.b16 %v4672
        %v4789 = vunpack.c.l.b16 %v4673
        %v4790 = vunpack.c.h.b16 %v4673
        %v4791 = vunpack.c.l.b16 %v4674
        %v4792 = vunpack.c.h.b16 %v4674
        %v4793 = vunpack.c.l.b16 %v4675
        %v4794 = vunpack.c.h.b16 %v4675
        %v4795 = vunpack.c.l.b16 %v4676
        %v4796 = vunpack.c.h.b16 %v4676
        %v4797 = vunpack.c.l.b16 %v4677
        %v4798 = vunpack.c.h.b16 %v4677
        %v4799 = vunpack.c.l.b16 %v4678
        %v4800 = vunpack.c.h.b16 %v4678
        %v4801 = vunpack.c.l.b16 %v4679
        %v4802 = vunpack.c.h.b16 %v4679
        %v4803 = vunpack.c.l.b16 %v4680
        %v4804 = vunpack.c.h.b16 %v4680
        %v4805 = vunpack.c.l.b16 %v4681
        %v4806 = vunpack.c.h.b16 %v4681
        %v4807 = vunpack.c.l.b16 %v4682
        %v4808 = vunpack.c.h.b16 %v4682
        %v4809 = vunpack.c.l.b16 %v4683
        %v4810 = vunpack.c.h.b16 %v4683
        %v4811 = vunpack.c.l.b16 %v4684
        %v4812 = vunpack.c.h.b16 %v4684
        %v4813 = vunpack.c.l.b16 %v4685
        %v4814 = vunpack.c.h.b16 %v4685
        %v4815 = vunpack.c.l.b16 %v4686
        %v4816 = vunpack.c.h.b16 %v4686
        %v4817 = vunpack.c.l.b16 %v4687
        %v4818 = vunpack.c.h.b16 %v4687
        %v4819 = vunpack.c.l.b16 %v4688
        %v4820 = vunpack.c.h.b16 %v4688
        %v4821 = vpack.c.b16 %v4743, %v4741
        %v4822 = vpack.c.b16 %v4744, %v4742
        %v4823 = vpack.c.b16 %v4747, %v4745
        %v4824 = vpack.c.b16 %v4748, %v4746
        %v4825 = vpack.c.b16 %v4751, %v4749
        %v4826 = vpack.c.b16 %v4752, %v4750
        %v4827 = vpack.c.b16 %v4755, %v4753
        %v4828 = vpack.c.b16 %v4756, %v4754
        %v4829 = vpack.c.b16 %v4759, %v4757
        %v4830 = vpack.c.b16 %v4760, %v4758
        %v4831 = vpack.c.b16 %v4763, %v4761
        %v4832 = vpack.c.b16 %v4764, %v4762
        %v4833 = vpack.c.b16 %v4767, %v4765
        %v4834 = vpack.c.b16 %v4768, %v4766
        %v4835 = vpack.c.b16 %v4771, %v4769
        %v4836 = vpack.c.b16 %v4772, %v4770
        %v4837 = vpack.c.b16 %v4775, %v4773
        %v4838 = vpack.c.b16 %v4776, %v4774
        %v4839 = vpack.c.b16 %v4779, %v4777
        %v4840 = vpack.c.b16 %v4780, %v4778
        %v4841 = vpack.c.b16 %v4783, %v4781
        %v4842 = vpack.c.b16 %v4784, %v4782
        %v4843 = vpack.c.b16 %v4787, %v4785
        %v4844 = vpack.c.b16 %v4788, %v4786
        %v4845 = vpack.c.b16 %v4791, %v4789
        %v4846 = vpack.c.b16 %v4792, %v4790
        %v4847 = vpack.c.b16 %v4795, %v4793
        %v4848 = vpack.c.b16 %v4796, %v4794
        %v4849 = vpack.c.b16 %v4799, %v4797
        %v4850 = vpack.c.b16 %v4800, %v4798
        %v4851 = vpack.c.b16 %v4803, %v4801
        %v4852 = vpack.c.b16 %v4804, %v4802
        %v4853 = vpack.c.b16 %v4807, %v4805
        %v4854 = vpack.c.b16 %v4808, %v4806
        %v4855 = vpack.c.b16 %v4811, %v4809
        %v4856 = vpack.c.b16 %v4812, %v4810
        %v4857 = vpack.c.b16 %v4815, %v4813
        %v4858 = vpack.c.b16 %v4816, %v4814
        %v4859 = vpack.c.b16 %v4819, %v4817
        %v4860 = vpack.c.b16 %v4820, %v4818
        %4901 = vmatprep.subr.bf16.mxu0 %v4836
        %4902 = vmatpush1.bf16.msra.mxu0 %v4835
        %4903 = vmatprep.subr.bf16.mxu0 %v4834
        %4904 = vmatpush1.bf16.msra.mxu0 %v4833
        %4905 = vmatprep.subr.bf16.mxu0 %v4832
        %4906 = vmatpush1.bf16.msra.mxu0 %v4831
        %4907 = vmatprep.subr.bf16.mxu0 %v4830
        %4908 = vmatpush1.bf16.msra.mxu0 %v4829
        %4909 = vmatprep.subr.bf16.mxu0 %v4828
        %4910 = vmatpush1.bf16.msra.mxu0 %v4827
        %4911 = vmatprep.subr.bf16.mxu0 %v4826
        %4912 = vmatpush1.bf16.msra.mxu0 %v4825
        %4913 = vmatprep.subr.bf16.mxu0 %v4824
        %4914 = vmatpush1.bf16.msra.mxu0 %v4823
        %4915 = vmatprep.subr.bf16.mxu0 %v4822
        %4916 = vmatpush1.bf16.msra.mxu0 %v4821
        %4917 = vmatprep.subr.bf16.mxu0 %v4852
        %4918 = vmatpush2.bf16.msra.mxu0 %v4851
        %4919 = vmatprep.subr.bf16.mxu0 %v4850
        %4920 = vmatpush2.bf16.msra.mxu0 %v4849
        %4921 = vmatprep.subr.bf16.mxu0 %v4848
        %4922 = vmatpush2.bf16.msra.mxu0 %v4847
        %4923 = vmatprep.subr.bf16.mxu0 %v4846
        %4924 = vmatpush2.bf16.msra.mxu0 %v4845
        %4925 = vmatprep.subr.bf16.mxu0 %v4844
        %4926 = vmatpush2.bf16.msra.mxu0 %v4843
        %4927 = vmatprep.subr.bf16.mxu0 %v4842
        %4928 = vmatpush2.bf16.msra.mxu0 %v4841
        %4929 = vmatprep.subr.bf16.mxu0 %v4840
        %4930 = vmatpush2.bf16.msra.mxu0 %v4839
        %4931 = vmatprep.subr.bf16.mxu0 %v4838
        %4932 = vmatpush2.bf16.msra.mxu0 %v4837
        %4933 = vmatprep.mubr.bf16.mxu0 %v4642
        %4934 = vmatmul.mubr.bf16.gmra.mxu0 %v4641
        %v4935 = vpop.f32.mrf.mxu0
        %v4936 = vadd.f32 %v4694, %v4935
        %v4937 = vpop.f32.mrf.mxu0
        %v4938 = vadd.f32 %v4698, %v4937
        %v4939 = vpop.f32.mrf.mxu0
        %v4940 = vadd.f32 %v4694, %v4939
        %v4941 = vpop.f32.mrf.mxu0
        %v4942 = vadd.f32 %v4698, %v4941
        %4943 = vmatprep.mubr.bf16.mxu0 %v4644
        %4944 = vmatmul.mubr.bf16.gmra.mxu0 %v4643
        %v4945 = vpop.f32.mrf.mxu0
        %v4946 = vadd.f32 %v4694, %v4945
        %v4947 = vpop.f32.mrf.mxu0
        %v4948 = vadd.f32 %v4698, %v4947
        %v4949 = vpop.f32.mrf.mxu0
        %v4950 = vadd.f32 %v4694, %v4949
        %v4951 = vpop.f32.mrf.mxu0
        %v4952 = vadd.f32 %v4698, %v4951
        %4953 = vmatprep.mubr.bf16.mxu0 %v4646
        %4954 = vmatmul.mubr.bf16.gmra.mxu0 %v4645
        %v4955 = vpop.f32.mrf.mxu0
        %v4956 = vadd.f32 %v4694, %v4955
        %v4957 = vpop.f32.mrf.mxu0
        %v4958 = vadd.f32 %v4698, %v4957
        %v4959 = vpop.f32.mrf.mxu0
        %v4960 = vadd.f32 %v4694, %v4959
        %v4961 = vpop.f32.mrf.mxu0
        %v4962 = vadd.f32 %v4698, %v4961
        %4963 = vmatprep.mubr.bf16.mxu0 %v4648
        %4964 = vmatmul.mubr.bf16.gmra.mxu0 %v4647
        %v4965 = vpop.f32.mrf.mxu0
        %v4966 = vadd.f32 %v4694, %v4965
        %v4967 = vpop.f32.mrf.mxu0
        %v4968 = vadd.f32 %v4698, %v4967
        %v4969 = vpop.f32.mrf.mxu0
        %v4970 = vadd.f32 %v4694, %v4969
        %v4971 = vpop.f32.mrf.mxu0
        %v4972 = vadd.f32 %v4698, %v4971
        %4973 = vdwg.mxu0
        %4974 = vmatprep.subr.bf16.mxu0 0
        %4975 = vmatpush1.bf16.msra.mxu0 0
        %4976 = vmatprep.subr.bf16.mxu0 0
        %4977 = vmatpush1.bf16.msra.mxu0 0
        %4978 = vmatprep.subr.bf16.mxu0 0
        %4979 = vmatpush1.bf16.msra.mxu0 0
        %4980 = vmatprep.subr.bf16.mxu0 0
        %4981 = vmatpush1.bf16.msra.mxu0 0
        %4982 = vmatprep.subr.bf16.mxu0 %v4860
        %4983 = vmatpush1.bf16.msra.mxu0 %v4859
        %4984 = vmatprep.subr.bf16.mxu0 %v4858
        %4985 = vmatpush1.bf16.msra.mxu0 %v4857
        %4986 = vmatprep.subr.bf16.mxu0 %v4856
        %4987 = vmatpush1.bf16.msra.mxu0 %v4855
        %4988 = vmatprep.subr.bf16.mxu0 %v4854
        %4989 = vmatpush1.bf16.msra.mxu0 %v4853
        %4990 = vmatprep.subr.bf16.mxu0 0
        %4991 = vmatpush2.bf16.msra.mxu0 0
        %4992 = vmatprep.subr.bf16.mxu0 0
        %4993 = vmatpush2.bf16.msra.mxu0 0
        %4994 = vmatprep.subr.bf16.mxu0 0
        %4995 = vmatpush2.bf16.msra.mxu0 0
        %4996 = vmatprep.subr.bf16.mxu0 0
        %4997 = vmatpush2.bf16.msra.mxu0 0
        %4998 = vmatprep.subr.bf16.mxu0 0
        %4999 = vmatpush2.bf16.msra.mxu0 0
        %5000 = vmatprep.subr.bf16.mxu0 0
        %5001 = vmatpush2.bf16.msra.mxu0 0
        %5002 = vmatprep.subr.bf16.mxu0 0
        %5003 = vmatpush2.bf16.msra.mxu0 0
        %5004 = vmatprep.subr.bf16.mxu0 0
        %5005 = vmatpush2.bf16.msra.mxu0 0
        %5006 = vmatprep.mubr.bf16.mxu0 0
        %5007 = vmatmul.mubr.bf16.gmra.mxu0 %v854
        %v5008 = vpop.f32.mrf.mxu0
        %v5009 = vadd.f32 %v4936, %v5008
        %v5010 = vpop.f32.mrf.mxu0
        %v5011 = vadd.f32 %v4938, %v5010
        %v5012 = vpop.f32.mrf.mxu0
        %v5013 = vadd.f32 %v4940, %v5012
        %v5014 = vpop.f32.mrf.mxu0
        %v5015 = vadd.f32 %v4942, %v5014
        %5016 = vmatprep.mubr.bf16.mxu0 0
        %5017 = vmatmul.mubr.bf16.gmra.mxu0 %v857
        %v5018 = vpop.f32.mrf.mxu0
        %v5019 = vadd.f32 %v4946, %v5018
        %v5020 = vpop.f32.mrf.mxu0
        %v5021 = vadd.f32 %v4948, %v5020
        %v5022 = vpop.f32.mrf.mxu0
        %v5023 = vadd.f32 %v4950, %v5022
        %v5024 = vpop.f32.mrf.mxu0
        %v5025 = vadd.f32 %v4952, %v5024
        %5026 = vmatprep.mubr.bf16.mxu0 0
        %5027 = vmatmul.mubr.bf16.gmra.mxu0 %v860
        %v5028 = vpop.f32.mrf.mxu0
        %v5029 = vadd.f32 %v4956, %v5028
        %v5030 = vpop.f32.mrf.mxu0
        %v5031 = vadd.f32 %v4958, %v5030
        %v5032 = vpop.f32.mrf.mxu0
        %v5033 = vadd.f32 %v4960, %v5032
        %v5034 = vpop.f32.mrf.mxu0
        %v5035 = vadd.f32 %v4962, %v5034
        %5036 = vmatprep.mubr.bf16.mxu0 0
        %5037 = vmatmul.mubr.bf16.gmra.mxu0 %v863
        %v5038 = vpop.f32.mrf.mxu0
        %v5039 = vadd.f32 %v4966, %v5038
        %v5040 = vpop.f32.mrf.mxu0
        %v5041 = vadd.f32 %v4968, %v5040
        %v5042 = vpop.f32.mrf.mxu0
        %v5043 = vadd.f32 %v4970, %v5042
        %v5044 = vpop.f32.mrf.mxu0
        %v5045 = vadd.f32 %v4972, %v5044
        %5046 = vdwg.mxu0
        %v5047 = vmax.f32 %v5009, 0.0
        %v5048 = vmax.f32 %v5011, 0.0
        %v5049 = vmax.f32 %v5013, 0.0
        %v5050 = vmax.f32 %v5015, 0.0
        %v5051 = vmax.f32 %v5019, 0.0
        %v5052 = vmax.f32 %v5021, 0.0
        %v5053 = vmax.f32 %v5023, 0.0
        %v5054 = vmax.f32 %v5025, 0.0
        %v5055 = vmax.f32 %v5029, 0.0
        %v5056 = vmax.f32 %v5031, 0.0
        %v5057 = vmax.f32 %v5033, 0.0
        %v5058 = vmax.f32 %v5035, 0.0
        %v5059 = vmax.f32 %v5039, 0.0
        %v5060 = vmax.f32 %v5041, 0.0
        %v5061 = vmax.f32 %v5043, 0.0
        %v5062 = vmax.f32 %v5045, 0.0
        %v5063 = vpack.c.bf16 %v5047, %v5047
        %v5064 = vpack.c.bf16 %v5048, %v5048
        %v5065 = vpack.c.bf16 %v5049, %v5049
        %v5066 = vpack.c.bf16 %v5050, %v5050
        %v5067 = vpack.c.bf16 %v5051, %v5051
        %v5068 = vpack.c.bf16 %v5052, %v5052
        %v5069 = vpack.c.bf16 %v5053, %v5053
        %v5070 = vpack.c.bf16 %v5054, %v5054
        %v5071 = vpack.c.bf16 %v5055, %v5055
        %v5072 = vpack.c.bf16 %v5056, %v5056
        %v5073 = vpack.c.bf16 %v5057, %v5057
        %v5074 = vpack.c.bf16 %v5058, %v5058
        %v5075 = vpack.c.bf16 %v5059, %v5059
        %v5076 = vpack.c.bf16 %v5060, %v5060
        %v5077 = vpack.c.bf16 %v5061, %v5061
        %v5078 = vpack.c.bf16 %v5062, %v5062
        %v5095 = vunpack.c.l.b16 %v5063
        %v5096 = vunpack.c.l.b16 %v5064
        %v5097 = vunpack.c.l.b16 %v5065
        %v5098 = vunpack.c.l.b16 %v5066
        %v5099 = vunpack.c.l.b16 %v5067
        %v5100 = vunpack.c.l.b16 %v5068
        %v5101 = vunpack.c.l.b16 %v5069
        %v5102 = vunpack.c.l.b16 %v5070
        %v5103 = vunpack.c.l.b16 %v5071
        %v5104 = vunpack.c.l.b16 %v5072
        %v5105 = vunpack.c.l.b16 %v5073
        %v5106 = vunpack.c.l.b16 %v5074
        %v5107 = vunpack.c.l.b16 %v5075
        %v5108 = vunpack.c.l.b16 %v5076
        %v5109 = vunpack.c.l.b16 %v5077
        %v5110 = vunpack.c.l.b16 %v5078
        %v5111 = vpack.c.b16 %v5096, %v5095
        %v5112 = vpack.c.b16 %v5098, %v5097
        %v5113 = vpack.c.b16 %v5100, %v5099
        %v5114 = vpack.c.b16 %v5102, %v5101
        %v5115 = vpack.c.b16 %v5104, %v5103
        %v5116 = vpack.c.b16 %v5106, %v5105
        %v5117 = vpack.c.b16 %v5108, %v5107
        %v5118 = vpack.c.b16 %v5110, %v5109
        %5127 = vst [vmem:[%s761] sm:$0xff] %v5111
        %5128 = vst [vmem:[%s761 + $0x8] sm:$0xff] %v5112
        %5129 = vst [vmem:[%s761 + $0x10] sm:$0xff] %v5113
        %5130 = vst [vmem:[%s761 + $0x18] sm:$0xff] %v5114
        %5131 = vst [vmem:[%s761 + $0x20] sm:$0xff] %v5115
        %5132 = vst [vmem:[%s761 + $0x28] sm:$0xff] %v5116
        %5133 = vst [vmem:[%s761 + $0x30] sm:$0xff] %v5117
        %5134 = vst [vmem:[%s761 + $0x38] sm:$0xff] %v5118
        %s5135 = smul.u32 8, %s32
        %p5136 = scmp.lt.s32.totalorder %s31, 1
        %s5137 = scalar_select %p5136, %s31, 1
        %p5138 = scmp.lt.s32.totalorder %s5135, 7
        %s5139 = scalar_select %p5138, %s5135, 7
        %s5140 = smul.addr %s5139, 2
        %s5141 = smul.addr %s5137, 16
        %s5142 = sadd.s32 %s5140, %s5141
        %s5143 = smul.addr %s5142, 4
        %s5144 = scalar_lea.vmem %s12, %s5143
        // Predicated region
        $region93: #{encoder_bottleneck_nchw.1} parent=67 // pred_check
          %p5145 = pneg %p369
        $region94: #{encoder_bottleneck_nchw.1} parent=67 // pred_check_branch
          %5147 = sbr.rel (%p5145) target = $region96
        $region95: #{encoder_bottleneck_nchw.1} parent=67 // pred_region
          %s5148 = smul.u32 8, %s32
        $region96: #{encoder_bottleneck_nchw.1} parent=67 // pred_fallthru
          _
      $region68: #{encoder_bottleneck_nchw.1} parent=5 // pred_fallthru
        _
      %p5149 = scmp.le.s32.totalorder 2, %s22
      // Predicated region
      $region97: #{encoder_bottleneck_nchw.1} parent=5 // pred_check
        %p5150 = pneg %p5149
      $region98: #{encoder_bottleneck_nchw.1} parent=5 // pred_check_branch
        %5152 = sbr.rel (%p5150) target = $region100
      $region99: #{encoder_bottleneck_nchw.1} parent=5 // pred_region
        %s5153 = ssub.s32 %s22, 2
        // Predicated region
        $region101: #{encoder_bottleneck_nchw.1} parent=99 // pred_check
          %p5154 = pneg %p375
        $region102: #{encoder_bottleneck_nchw.1} parent=99 // pred_check_branch
          %5156 = sbr.rel (%p5154) target = $region104
        $region103: #{encoder_bottleneck_nchw.1} parent=99 // pred_region
          %s5157 = smul.u32 8, %s34
          %p5158 = scmp.lt.s32.totalorder %s33, 1
          %s5159 = scalar_select %p5158, %s33, 1
          %p5160 = scmp.lt.s32.totalorder %s5157, 7
          %s5161 = scalar_select %p5160, %s5157, 7
          %s5162 = smul.addr %s5161, 2
          %s5163 = smul.addr %s5159, 16
          %s5164 = sadd.s32 %s5162, %s5163
          %s5165 = smul.addr %s5164, 4
          %s5166 = scalar_lea.vmem %s12, %s5165
        $region104: #{encoder_bottleneck_nchw.1} parent=99 // pred_fallthru
          _
      $region100: #{encoder_bottleneck_nchw.1} parent=5 // pred_fallthru
        _
    $region6: #{encoder_bottleneck_nchw.1} parent=1 // loop_footer
      %s26 = sadd.s32 1, %s22
    $region7: #{encoder_bottleneck_nchw.1} parent=1 // loop_footer_branch
      %21 = sbr.rel target = $region3
    $region8: #{encoder_bottleneck_nchw.1} parent=1 // loop_exit
      _
    %5167 = vsyncpa [#allocation3], 1
    %s5168 = scalar_lea.sflag [#allocation3], 1
    %5169 = vsyncpa %s5168, 1
    %5170 = vsyncpa [#allocation5], 1
    %5171 = vsyncpa [#allocation8], 1
    %5172 = vsyncpa [#allocation11], 1

</llo_original>
